<compile_context>
chip_gen: v7x
topology: tpu7x:2x2x1
jax: 0.10.0
libtpu: 0.0.40
codegen_flags: <defaults>
</compile_context>

<pallas_src>
import functools
import math

import jax
import jax.numpy as jnp
from jax.experimental import pallas as pl
from jax.experimental.pallas import tpu as pltpu


# ----------------------------------------------------------------------------
# In-kernel math helpers
# ----------------------------------------------------------------------------
_SQRT_2_OVER_PI = math.sqrt(2.0 / math.pi)


def _gelu_tanh(x):
    # tanh-based GELU: the transcendental goes to the EUP, co-issuing with
    # MXU/VPU work instead of saturating the VALU slots.
    inner = _SQRT_2_OVER_PI * (x + 0.044715 * (x * x * x))
    return 0.5 * x * (1.0 + jnp.tanh(inner))


def _layer_norm(x, g, b, eps):
    mu = jnp.mean(x, axis=-1, keepdims=True)
    var = jnp.mean(jnp.square(x - mu), axis=-1, keepdims=True)
    return (x - mu) * jax.lax.rsqrt(var + eps) * g + b


# ----------------------------------------------------------------------------
# Pallas kernel: one full ViT encoder layer for one batch element
# ----------------------------------------------------------------------------
def vit_layer_kernel(x_ref, mask_ref,
                     ln1_g_ref, ln1_b_ref,
                     wq_ref, bq_ref, wk_ref, bk_ref, wv_ref, bv_ref,
                     wo_ref, bo_ref,
                     ln2_g_ref, ln2_b_ref,
                     w1_ref, b1_ref, w2_ref, b2_ref,
                     out_ref,
                     q_sc, k_sc, v_sc,
                     *, num_heads, eps):
    x = x_ref[0].astype(jnp.float32)              # (S, H) f32
    S, H = x.shape
    hd = H // num_heads
    scale = 1.0 / math.sqrt(hd)

    mask_b = mask_ref[0].astype(jnp.float32)[None]   # (1, 1, S) additive

    # ---- attention block (pre-LN) ----
    h = _layer_norm(x, ln1_g_ref[...], ln1_b_ref[...], eps)
    h_bf = h.astype(jnp.bfloat16)

    # Per-head projections: weights are packed head-major (heads, H, hd), so
    # indexing is on the leading axis only (no lane slicing, no relayouts).
    for i in range(num_heads):
        q_i = jnp.dot(h_bf, wq_ref[i],
                      preferred_element_type=jnp.float32) + bq_ref[i]
        k_i = jnp.dot(h_bf, wk_ref[i],
                      preferred_element_type=jnp.float32) + bk_ref[i]
        v_i = jnp.dot(h_bf, wv_ref[i],
                      preferred_element_type=jnp.float32) + bv_ref[i]
        q_sc[i] = (q_i * scale).astype(jnp.bfloat16)   # fold 1/sqrt(hd) into q
        k_sc[i] = k_i.astype(jnp.bfloat16)
        v_sc[i] = v_i.astype(jnp.bfloat16)

    q3 = q_sc[...]                                 # (heads, S, hd) bf16
    k3 = k_sc[...]
    v3 = v_sc[...]

    # Batched over heads: scores, masked softmax, context.
    s = jnp.einsum('hqd,hkd->hqk', q3, k3,
                   preferred_element_type=jnp.float32)      # (heads, S, S) f32
    s = s + mask_b                                          # mask added once
    s = s - jnp.max(s, axis=-1, keepdims=True)
    p = jnp.exp(s)
    denom = jnp.sum(p, axis=-1, keepdims=True)
    p = p * pl.reciprocal(denom, approx=True)               # EUP, not f32 div
    # attention-prob dropout: identity (eval mode)
    ctx = jnp.einsum('hqk,hkd->hqd', p.astype(jnp.bfloat16), v3,
                     preferred_element_type=jnp.float32)    # (heads, S, hd)

    # Output projection: accumulate per head (no lane concatenate).
    attn = jnp.zeros((S, H), jnp.float32)
    for i in range(num_heads):
        attn = attn + jnp.dot(ctx[i].astype(jnp.bfloat16), wo_ref[i],
                              preferred_element_type=jnp.float32)
    attn = attn + bo_ref[...]
    x = x + attn                                   # residual (hidden dropout = identity)

    # ---- MLP block (pre-LN) ----
    h2 = _layer_norm(x, ln2_g_ref[...], ln2_b_ref[...], eps)
    inter = _gelu_tanh(
        jnp.dot(h2.astype(jnp.bfloat16), w1_ref[...],
                preferred_element_type=jnp.float32) + b1_ref[...])
    mlp = jnp.dot(inter.astype(jnp.bfloat16), w2_ref[...],
                  preferred_element_type=jnp.float32) + b2_ref[...]
    out_ref[0] = (x + mlp).astype(out_ref.dtype)


def vit_layer(x, mask, p, *, num_heads, eps):
    """x: (B,S,H) f32, mask: (B,1,S) additive f32. Returns (B,S,H) f32."""
    B, S, H = x.shape
    hd = H // num_heads
    weights = [p['ln1_g'], p['ln1_b'],
               p['wq'], p['bq'], p['wk'], p['bk'], p['wv'], p['bv'],
               p['wo'], p['bo'],
               p['ln2_g'], p['ln2_b'],
               p['w1'], p['b1'], p['w2'], p['b2']]

    def full_spec(a):
        nd = a.ndim
        return pl.BlockSpec(a.shape, lambda b, _nd=nd: (0,) * _nd)

    in_specs = ([pl.BlockSpec((1, S, H), lambda b: (b, 0, 0)),
                 pl.BlockSpec((1, 1, S), lambda b: (b, 0, 0))]
                + [full_spec(w) for w in weights])

    return pl.pallas_call(
        functools.partial(vit_layer_kernel, num_heads=num_heads, eps=eps),
        out_shape=jax.ShapeDtypeStruct((B, S, H), x.dtype),
        grid=(B,),
        in_specs=in_specs,
        out_specs=pl.BlockSpec((1, S, H), lambda b: (b, 0, 0)),
        scratch_shapes=[pltpu.VMEM((num_heads, S, hd), jnp.bfloat16)] * 3,
        compiler_params=pltpu.CompilerParams(
            dimension_semantics=("parallel",)),
    )(x, mask, *weights)


# ----------------------------------------------------------------------------
# Pallas kernel: fused side-branch map  out = prev + gelu(x @ W + b)
# (B*S folded into the sublane axis for a lane-dense 2-D layout)
# ----------------------------------------------------------------------------
def side_map_kernel(prev_ref, x_ref, w_ref, b_ref, out_ref):
    x_bf = x_ref[...].astype(jnp.bfloat16)
    y = jnp.dot(x_bf, w_ref[...],
                preferred_element_type=jnp.float32) + b_ref[...]
    out_ref[...] = (prev_ref[...].astype(jnp.float32)
                    + _gelu_tanh(y)).astype(out_ref.dtype)


def side_map_accum(prev, x, w, b):
    """prev + gelu(x @ w + b) fused in one kernel. prev: (B,S,O), x: (B,S,H)."""
    B, S, H = x.shape
    O = w.shape[1]
    x2 = x.reshape(B * S, H)
    prev2 = prev.reshape(B * S, O)
    out = pl.pallas_call(
        side_map_kernel,
        out_shape=jax.ShapeDtypeStruct((B * S, O), prev.dtype),
        grid=(1,),
        in_specs=[pl.BlockSpec((B * S, O), lambda i: (0, 0)),
                  pl.BlockSpec((B * S, H), lambda i: (0, 0)),
                  pl.BlockSpec(w.shape, lambda i: (0, 0)),
                  pl.BlockSpec(b.shape, lambda i: (0, 0))],
        out_specs=pl.BlockSpec((B * S, O), lambda i: (0, 0)),
    )(prev2, x2, w, b)
    return out.reshape(B, S, O)


# ----------------------------------------------------------------------------
# Parameter init (deterministic).  Matmul weights are stored bf16 and packed
# in kernel layout:
#   wq/wk/wv: (heads, H, hd)   bq/bk/bv: (heads, 1, hd)
#   wo:       (heads, hd, H)
#   w1: (H, I)   w2: (I, H)
# LN params and biases stay f32 (elementwise math stays f32 in-kernel).
# ----------------------------------------------------------------------------
def init_vit_layer_params(key, hidden, inter, num_heads):
    hd = hidden // num_heads
    ks = jax.random.split(key, 6)
    w = lambda k, shp: 0.02 * jax.random.normal(k, shp, jnp.float32)

    def head_major(m):          # (in, out) -> (heads, in, hd)
        return jnp.transpose(m.reshape(hidden, num_heads, hd), (1, 0, 2))

    wq, wk, wv, wo = (w(ks[i], (hidden, hidden)) for i in range(4))
    w1 = w(ks[4], (hidden, inter))
    w2 = w(ks[5], (inter, hidden))
    head_bias = jnp.zeros((num_heads, 1, hd), jnp.float32)

    return dict(
        ln1_g=jnp.ones((1, hidden), jnp.float32),
        ln1_b=jnp.zeros((1, hidden), jnp.float32),
        wq=head_major(wq).astype(jnp.bfloat16), bq=head_bias,
        wk=head_major(wk).astype(jnp.bfloat16), bk=head_bias,
        wv=head_major(wv).astype(jnp.bfloat16), bv=head_bias,
        wo=wo.reshape(num_heads, hd, hidden).astype(jnp.bfloat16),
        bo=jnp.zeros((1, hidden), jnp.float32),
        ln2_g=jnp.ones((1, hidden), jnp.float32),
        ln2_b=jnp.zeros((1, hidden), jnp.float32),
        w1=w1.astype(jnp.bfloat16), b1=jnp.zeros((1, inter), jnp.float32),
        w2=w2.astype(jnp.bfloat16), b2=jnp.zeros((1, hidden), jnp.float32),
    )


def init_encoder_params(key, cfg):
    heads = cfg['num_attention_heads']
    params = {'layers': [], 's_attn_maps': {}, 's_attn_layers': {}}
    kl, km, ks = jax.random.split(key, 3)
    for i_ly in range(cfg['num_hidden_layers']):
        params['layers'].append(init_vit_layer_params(
            jax.random.fold_in(kl, i_ly), cfg['hidden_size'],
            cfg['intermediate_size'], heads))
    for i_b in range(cfg['num_side_branches']):
        for i_ly in range(cfg['num_hidden_layers']):
            kk = jax.random.fold_in(jax.random.fold_in(km, i_b), i_ly)
            params['s_attn_maps'][(i_b, i_ly)] = dict(
                w=(0.02 * jax.random.normal(
                    kk, (cfg['hidden_size'], cfg['s_attn_hidden_size']),
                    jnp.float32)).astype(jnp.bfloat16),
                b=jnp.zeros((1, cfg['s_attn_hidden_size']), jnp.float32))
            kk2 = jax.random.fold_in(jax.random.fold_in(ks, i_b), i_ly)
            params['s_attn_layers'][(i_b, i_ly)] = init_vit_layer_params(
                kk2, cfg['s_attn_hidden_size'],
                cfg['s_attn_intermediate_size'], heads)
    return params


# ----------------------------------------------------------------------------
# LttViTMultiEncoder.forward
# ----------------------------------------------------------------------------
def ltt_vit_multi_encoder_forward(hidden_states, attention_mask,
                                  side_layer_branches, params, cfg,
                                  freeze_layer=None):
    num_layers = cfg['num_hidden_layers']
    num_branches = cfg['num_side_branches']
    heads = cfg['num_attention_heads']
    eps = cfg['layer_norm_eps']
    if freeze_layer is None:
        freeze_layer = num_layers                 # default: self._ltt_freeze_layer

    B, S, _ = hidden_states.shape
    s_hidden = cfg['s_attn_hidden_size']
    # 0.0 initial side state == zeros tensor after the first (broadcasting) add
    side_states = [jnp.zeros((B, S, s_hidden), hidden_states.dtype)
                   if i_b in side_layer_branches else None
                   for i_b in range(num_branches)]

    for i_ly in range(num_layers):
        hidden_states = vit_layer(hidden_states, attention_mask,
                                  params['layers'][i_ly],
                                  num_heads=heads, eps=eps)
        for i_b in range(num_branches):
            if i_ly >= freeze_layer:
                continue
            if i_b not in side_layer_branches:
                continue
            m = params['s_attn_maps'][(i_b, i_ly)]
            side_states[i_b] = side_map_accum(side_states[i_b], hidden_states,
                                              m['w'], m['b'])
            side_states[i_b] = vit_layer(side_states[i_b], attention_mask,
                                         params['s_attn_layers'][(i_b, i_ly)],
                                         num_heads=heads, eps=eps)

    side_states = [s for s in side_states if s is not None]
    return hidden_states, side_states


# ----------------------------------------------------------------------------
if __name__ == "__main__":
    cfg = dict(
        attention_probs_dropout_prob=0.0,   # eval mode -> identity
        hidden_dropout_prob=0.0,            # eval mode -> identity
        hidden_size=32,
        intermediate_size=64,
        layer_norm_eps=1e-12,
        num_hidden_layers=2,
        num_attention_heads=4,
        num_side_branches=2,
        s_attn_hidden_size=16,
        s_attn_intermediate_size=32,
    )
    B, S = 2, 8
    side_layer_branches = [0, 1]

    key = jax.random.PRNGKey(0)
    k_x, k_p = jax.random.split(key)
    hidden_states = jax.random.normal(k_x, (B, S, cfg['hidden_size']), jnp.float32)
    attention_mask = jnp.zeros((B, 1, S), jnp.float32)   # additive mask, all-attend

    params = init_encoder_params(k_p, cfg)

    out, side_states = ltt_vit_multi_encoder_forward(
        hidden_states, attention_mask, side_layer_branches, params, cfg)

    jax.block_until_ready(out)
    for s in side_states:
        jax.block_until_ready(s)

    assert out.shape == (B, S, cfg['hidden_size'])
    assert len(side_states) == len(side_layer_branches)
    for s in side_states:
        assert s.shape == (B, S, cfg['s_attn_hidden_size'])
    assert bool(jnp.all(jnp.isfinite(out)))

    print("KERNEL_OK")
</pallas_src>

<mosaic_0001>
module attributes {stable_mosaic.version = 11 : i64} {
  func.func @vit_layer_kernel(%arg0: i32, %arg1: memref<1x8x32xf32, #tpu.memory_space<vmem>>, %arg2: memref<1x1x8xf32, #tpu.memory_space<vmem>>, %arg3: memref<1x32xf32, #tpu.memory_space<vmem>>, %arg4: memref<1x32xf32, #tpu.memory_space<vmem>>, %arg5: memref<4x32x8xbf16, #tpu.memory_space<vmem>>, %arg6: memref<4x1x8xf32, #tpu.memory_space<vmem>>, %arg7: memref<4x32x8xbf16, #tpu.memory_space<vmem>>, %arg8: memref<4x1x8xf32, #tpu.memory_space<vmem>>, %arg9: memref<4x32x8xbf16, #tpu.memory_space<vmem>>, %arg10: memref<4x1x8xf32, #tpu.memory_space<vmem>>, %arg11: memref<4x8x32xbf16, #tpu.memory_space<vmem>>, %arg12: memref<1x32xf32, #tpu.memory_space<vmem>>, %arg13: memref<1x32xf32, #tpu.memory_space<vmem>>, %arg14: memref<1x32xf32, #tpu.memory_space<vmem>>, %arg15: memref<32x64xbf16, #tpu.memory_space<vmem>>, %arg16: memref<1x64xf32, #tpu.memory_space<vmem>>, %arg17: memref<64x32xbf16, #tpu.memory_space<vmem>>, %arg18: memref<1x32xf32, #tpu.memory_space<vmem>>, %arg19: memref<1x8x32xf32, #tpu.memory_space<vmem>>, %arg20: memref<4x8x8xbf16, #tpu.memory_space<vmem>>, %arg21: memref<4x8x8xbf16, #tpu.memory_space<vmem>>, %arg22: memref<4x8x8xbf16, #tpu.memory_space<vmem>>) attributes {dimension_semantics = [#tpu.dimension_semantics<parallel>], iteration_bounds = array<i64: 2>, scalar_prefetch = 0 : i64, scratch_operands = 3 : i64, tpu.core_type = #tpu.core_type<tc>, window_params = [{transform_indices = @transform_0, window_bounds = array<i64: 1, 8, 32>}, {transform_indices = @transform_1, window_bounds = array<i64: 1, 1, 8>}, {pipeline_mode = #tpu.pipeline_mode<synchronous>, transform_indices = @transform_2, window_bounds = array<i64: 1, 32>}, {pipeline_mode = #tpu.pipeline_mode<synchronous>, transform_indices = @transform_3, window_bounds = array<i64: 1, 32>}, {pipeline_mode = #tpu.pipeline_mode<synchronous>, transform_indices = @transform_4, window_bounds = array<i64: 4, 32, 8>}, {pipeline_mode = #tpu.pipeline_mode<synchronous>, transform_indices = @transform_5, window_bounds = array<i64: 4, 1, 8>}, {pipeline_mode = #tpu.pipeline_mode<synchronous>, transform_indices = @transform_6, window_bounds = array<i64: 4, 32, 8>}, {pipeline_mode = #tpu.pipeline_mode<synchronous>, transform_indices = @transform_7, window_bounds = array<i64: 4, 1, 8>}, {pipeline_mode = #tpu.pipeline_mode<synchronous>, transform_indices = @transform_8, window_bounds = array<i64: 4, 32, 8>}, {pipeline_mode = #tpu.pipeline_mode<synchronous>, transform_indices = @transform_9, window_bounds = array<i64: 4, 1, 8>}, {pipeline_mode = #tpu.pipeline_mode<synchronous>, transform_indices = @transform_10, window_bounds = array<i64: 4, 8, 32>}, {pipeline_mode = #tpu.pipeline_mode<synchronous>, transform_indices = @transform_11, window_bounds = array<i64: 1, 32>}, {pipeline_mode = #tpu.pipeline_mode<synchronous>, transform_indices = @transform_12, window_bounds = array<i64: 1, 32>}, {pipeline_mode = #tpu.pipeline_mode<synchronous>, transform_indices = @transform_13, window_bounds = array<i64: 1, 32>}, {pipeline_mode = #tpu.pipeline_mode<synchronous>, transform_indices = @transform_14, window_bounds = array<i64: 32, 64>}, {pipeline_mode = #tpu.pipeline_mode<synchronous>, transform_indices = @transform_15, window_bounds = array<i64: 1, 64>}, {pipeline_mode = #tpu.pipeline_mode<synchronous>, transform_indices = @transform_16, window_bounds = array<i64: 64, 32>}, {pipeline_mode = #tpu.pipeline_mode<synchronous>, transform_indices = @transform_17, window_bounds = array<i64: 1, 32>}, {transform_indices = @transform_18, window_bounds = array<i64: 1, 8, 32>}]} {
    %c0 = arith.constant 0 : index
    %c0_0 = arith.constant 0 : index
    %c0_1 = arith.constant 0 : index
    %0 = vector.load %arg1[%c0, %c0_0, %c0_1] : memref<1x8x32xf32, #tpu.memory_space<vmem>>, vector<1x8x32xf32>
    %1 = vector.shape_cast %0 : vector<1x8x32xf32> to vector<8x32xf32>
    %c0_2 = arith.constant 0 : index
    %c0_3 = arith.constant 0 : index
    %c0_4 = arith.constant 0 : index
    %2 = vector.load %arg2[%c0_2, %c0_3, %c0_4] : memref<1x1x8xf32, #tpu.memory_space<vmem>>, vector<1x1x8xf32>
    %3 = vector.shape_cast %2 : vector<1x1x8xf32> to vector<1x8xf32>
    %4 = vector.shape_cast %3 : vector<1x8xf32> to vector<1x1x8xf32>
    %c0_5 = arith.constant 0 : index
    %c0_6 = arith.constant 0 : index
    %5 = vector.load %arg3[%c0_5, %c0_6] : memref<1x32xf32, #tpu.memory_space<vmem>>, vector<1x32xf32>
    %c0_7 = arith.constant 0 : index
    %c0_8 = arith.constant 0 : index
    %6 = vector.load %arg4[%c0_7, %c0_8] : memref<1x32xf32, #tpu.memory_space<vmem>>, vector<1x32xf32>
    %cst = arith.constant dense<0.000000e+00> : vector<8xf32>
    %7 = vector.multi_reduction <add>, %1, %cst [1] : vector<8x32xf32> to vector<8xf32>
    %8 = vector.shape_cast %7 : vector<8xf32> to vector<8x1xf32>
    %cst_9 = arith.constant 3.200000e+01 : f32
    %9 = vector.broadcast %cst_9 : f32 to vector<8x1xf32>
    %10 = arith.divf %8, %9 : vector<8x1xf32>
    %11 = vector.broadcast %10 : vector<8x1xf32> to vector<8x32xf32>
    %12 = arith.subf %1, %11 : vector<8x32xf32>
    %13 = arith.mulf %12, %12 : vector<8x32xf32>
    %cst_10 = arith.constant dense<0.000000e+00> : vector<8xf32>
    %14 = vector.multi_reduction <add>, %13, %cst_10 [1] : vector<8x32xf32> to vector<8xf32>
    %15 = vector.shape_cast %14 : vector<8xf32> to vector<8x1xf32>
    %cst_11 = arith.constant 3.200000e+01 : f32
    %16 = vector.broadcast %cst_11 : f32 to vector<8x1xf32>
    %17 = arith.divf %15, %16 : vector<8x1xf32>
    %18 = vector.broadcast %10 : vector<8x1xf32> to vector<8x32xf32>
    %19 = arith.subf %1, %18 : vector<8x32xf32>
    %cst_12 = arith.constant 9.99999996E-13 : f32
    %20 = vector.broadcast %cst_12 : f32 to vector<8x1xf32>
    %21 = arith.addf %17, %20 : vector<8x1xf32>
    %22 = math.rsqrt %21 : vector<8x1xf32>
    %23 = vector.broadcast %22 : vector<8x1xf32> to vector<8x32xf32>
    %24 = arith.mulf %19, %23 : vector<8x32xf32>
    %25 = vector.broadcast %5 : vector<1x32xf32> to vector<8x32xf32>
    %26 = arith.mulf %24, %25 : vector<8x32xf32>
    %27 = vector.broadcast %6 : vector<1x32xf32> to vector<8x32xf32>
    %28 = arith.addf %26, %27 : vector<8x32xf32>
    %29 = arith.truncf %28 : vector<8x32xf32> to vector<8x32xbf16>
    %c0_13 = arith.constant 0 : index
    %c0_14 = arith.constant 0 : index
    %c0_15 = arith.constant 0 : index
    %30 = vector.load %arg5[%c0_13, %c0_14, %c0_15] : memref<4x32x8xbf16, #tpu.memory_space<vmem>>, vector<1x32x8xbf16>
    %31 = vector.shape_cast %30 : vector<1x32x8xbf16> to vector<32x8xbf16>
    %cst_16 = arith.constant dense<0.000000e+00> : vector<8x8xf32>
    %32 = tpu.matmul %29, %31, %cst_16 {dimension_numbers = #tpu.dot_dimension_numbers<[1], [0], [0], [1], [0, 0, 1, 1], [], []>} : vector<8x32xbf16>, vector<32x8xbf16>, vector<8x8xf32> -> vector<8x8xf32>
    %c0_17 = arith.constant 0 : index
    %c0_18 = arith.constant 0 : index
    %c0_19 = arith.constant 0 : index
    %33 = vector.load %arg6[%c0_17, %c0_18, %c0_19] : memref<4x1x8xf32, #tpu.memory_space<vmem>>, vector<1x1x8xf32>
    %34 = vector.shape_cast %33 : vector<1x1x8xf32> to vector<1x8xf32>
    %35 = vector.broadcast %34 : vector<1x8xf32> to vector<8x8xf32>
    %36 = arith.addf %32, %35 : vector<8x8xf32>
    %c0_20 = arith.constant 0 : index
    %c0_21 = arith.constant 0 : index
    %c0_22 = arith.constant 0 : index
    %37 = vector.load %arg7[%c0_20, %c0_21, %c0_22] : memref<4x32x8xbf16, #tpu.memory_space<vmem>>, vector<1x32x8xbf16>
    %38 = vector.shape_cast %37 : vector<1x32x8xbf16> to vector<32x8xbf16>
    %cst_23 = arith.constant dense<0.000000e+00> : vector<8x8xf32>
    %39 = tpu.matmul %29, %38, %cst_23 {dimension_numbers = #tpu.dot_dimension_numbers<[1], [0], [0], [1], [0, 0, 1, 1], [], []>} : vector<8x32xbf16>, vector<32x8xbf16>, vector<8x8xf32> -> vector<8x8xf32>
    %c0_24 = arith.constant 0 : index
    %c0_25 = arith.constant 0 : index
    %c0_26 = arith.constant 0 : index
    %40 = vector.load %arg8[%c0_24, %c0_25, %c0_26] : memref<4x1x8xf32, #tpu.memory_space<vmem>>, vector<1x1x8xf32>
    %41 = vector.shape_cast %40 : vector<1x1x8xf32> to vector<1x8xf32>
    %42 = vector.broadcast %41 : vector<1x8xf32> to vector<8x8xf32>
    %43 = arith.addf %39, %42 : vector<8x8xf32>
    %c0_27 = arith.constant 0 : index
    %c0_28 = arith.constant 0 : index
    %c0_29 = arith.constant 0 : index
    %44 = vector.load %arg9[%c0_27, %c0_28, %c0_29] : memref<4x32x8xbf16, #tpu.memory_space<vmem>>, vector<1x32x8xbf16>
    %45 = vector.shape_cast %44 : vector<1x32x8xbf16> to vector<32x8xbf16>
    %cst_30 = arith.constant dense<0.000000e+00> : vector<8x8xf32>
    %46 = tpu.matmul %29, %45, %cst_30 {dimension_numbers = #tpu.dot_dimension_numbers<[1], [0], [0], [1], [0, 0, 1, 1], [], []>} : vector<8x32xbf16>, vector<32x8xbf16>, vector<8x8xf32> -> vector<8x8xf32>
    %c0_31 = arith.constant 0 : index
    %c0_32 = arith.constant 0 : index
    %c0_33 = arith.constant 0 : index
    %47 = vector.load %arg10[%c0_31, %c0_32, %c0_33] : memref<4x1x8xf32, #tpu.memory_space<vmem>>, vector<1x1x8xf32>
    %48 = vector.shape_cast %47 : vector<1x1x8xf32> to vector<1x8xf32>
    %49 = vector.broadcast %48 : vector<1x8xf32> to vector<8x8xf32>
    %50 = arith.addf %46, %49 : vector<8x8xf32>
    %cst_34 = arith.constant 0.353553385 : f32
    %51 = vector.broadcast %cst_34 : f32 to vector<8x8xf32>
    %52 = arith.mulf %36, %51 : vector<8x8xf32>
    %53 = arith.truncf %52 : vector<8x8xf32> to vector<8x8xbf16>
    %c0_35 = arith.constant 0 : index
    %c0_36 = arith.constant 0 : index
    %c0_37 = arith.constant 0 : index
    %54 = vector.load %arg20[%c0_35, %c0_36, %c0_37] : memref<4x8x8xbf16, #tpu.memory_space<vmem>>, vector<1x8x8xbf16>
    %55 = vector.shape_cast %54 : vector<1x8x8xbf16> to vector<8x8xbf16>
    %56 = vector.shape_cast %53 : vector<8x8xbf16> to vector<1x8x8xbf16>
    tpu.vector_store %arg20[%c0_35, %c0_36, %c0_37], %56 {strides = array<i32>} : memref<4x8x8xbf16, #tpu.memory_space<vmem>>, vector<1x8x8xbf16>,
    %57 = arith.truncf %43 : vector<8x8xf32> to vector<8x8xbf16>
    %c0_38 = arith.constant 0 : index
    %c0_39 = arith.constant 0 : index
    %c0_40 = arith.constant 0 : index
    %58 = vector.load %arg21[%c0_38, %c0_39, %c0_40] : memref<4x8x8xbf16, #tpu.memory_space<vmem>>, vector<1x8x8xbf16>
    %59 = vector.shape_cast %58 : vector<1x8x8xbf16> to vector<8x8xbf16>
    %60 = vector.shape_cast %57 : vector<8x8xbf16> to vector<1x8x8xbf16>
    tpu.vector_store %arg21[%c0_38, %c0_39, %c0_40], %60 {strides = array<i32>} : memref<4x8x8xbf16, #tpu.memory_space<vmem>>, vector<1x8x8xbf16>,
    %61 = arith.truncf %50 : vector<8x8xf32> to vector<8x8xbf16>
    %c0_41 = arith.constant 0 : index
    %c0_42 = arith.constant 0 : index
    %c0_43 = arith.constant 0 : index
    %62 = vector.load %arg22[%c0_41, %c0_42, %c0_43] : memref<4x8x8xbf16, #tpu.memory_space<vmem>>, vector<1x8x8xbf16>
    %63 = vector.shape_cast %62 : vector<1x8x8xbf16> to vector<8x8xbf16>
    %64 = vector.shape_cast %61 : vector<8x8xbf16> to vector<1x8x8xbf16>
    tpu.vector_store %arg22[%c0_41, %c0_42, %c0_43], %64 {strides = array<i32>} : memref<4x8x8xbf16, #tpu.memory_space<vmem>>, vector<1x8x8xbf16>,
    %c1 = arith.constant 1 : index
    %c0_44 = arith.constant 0 : index
    %c0_45 = arith.constant 0 : index
    %65 = vector.load %arg5[%c1, %c0_44, %c0_45] : memref<4x32x8xbf16, #tpu.memory_space<vmem>>, vector<1x32x8xbf16>
    %66 = vector.shape_cast %65 : vector<1x32x8xbf16> to vector<32x8xbf16>
    %cst_46 = arith.constant dense<0.000000e+00> : vector<8x8xf32>
    %67 = tpu.matmul %29, %66, %cst_46 {dimension_numbers = #tpu.dot_dimension_numbers<[1], [0], [0], [1], [0, 0, 1, 1], [], []>} : vector<8x32xbf16>, vector<32x8xbf16>, vector<8x8xf32> -> vector<8x8xf32>
    %c1_47 = arith.constant 1 : index
    %c0_48 = arith.constant 0 : index
    %c0_49 = arith.constant 0 : index
    %68 = vector.load %arg6[%c1_47, %c0_48, %c0_49] : memref<4x1x8xf32, #tpu.memory_space<vmem>>, vector<1x1x8xf32>
    %69 = vector.shape_cast %68 : vector<1x1x8xf32> to vector<1x8xf32>
    %70 = vector.broadcast %69 : vector<1x8xf32> to vector<8x8xf32>
    %71 = arith.addf %67, %70 : vector<8x8xf32>
    %c1_50 = arith.constant 1 : index
    %c0_51 = arith.constant 0 : index
    %c0_52 = arith.constant 0 : index
    %72 = vector.load %arg7[%c1_50, %c0_51, %c0_52] : memref<4x32x8xbf16, #tpu.memory_space<vmem>>, vector<1x32x8xbf16>
    %73 = vector.shape_cast %72 : vector<1x32x8xbf16> to vector<32x8xbf16>
    %cst_53 = arith.constant dense<0.000000e+00> : vector<8x8xf32>
    %74 = tpu.matmul %29, %73, %cst_53 {dimension_numbers = #tpu.dot_dimension_numbers<[1], [0], [0], [1], [0, 0, 1, 1], [], []>} : vector<8x32xbf16>, vector<32x8xbf16>, vector<8x8xf32> -> vector<8x8xf32>
    %c1_54 = arith.constant 1 : index
    %c0_55 = arith.constant 0 : index
    %c0_56 = arith.constant 0 : index
    %75 = vector.load %arg8[%c1_54, %c0_55, %c0_56] : memref<4x1x8xf32, #tpu.memory_space<vmem>>, vector<1x1x8xf32>
    %76 = vector.shape_cast %75 : vector<1x1x8xf32> to vector<1x8xf32>
    %77 = vector.broadcast %76 : vector<1x8xf32> to vector<8x8xf32>
    %78 = arith.addf %74, %77 : vector<8x8xf32>
    %c1_57 = arith.constant 1 : index
    %c0_58 = arith.constant 0 : index
    %c0_59 = arith.constant 0 : index
    %79 = vector.load %arg9[%c1_57, %c0_58, %c0_59] : memref<4x32x8xbf16, #tpu.memory_space<vmem>>, vector<1x32x8xbf16>
    %80 = vector.shape_cast %79 : vector<1x32x8xbf16> to vector<32x8xbf16>
    %cst_60 = arith.constant dense<0.000000e+00> : vector<8x8xf32>
    %81 = tpu.matmul %29, %80, %cst_60 {dimension_numbers = #tpu.dot_dimension_numbers<[1], [0], [0], [1], [0, 0, 1, 1], [], []>} : vector<8x32xbf16>, vector<32x8xbf16>, vector<8x8xf32> -> vector<8x8xf32>
    %c1_61 = arith.constant 1 : index
    %c0_62 = arith.constant 0 : index
    %c0_63 = arith.constant 0 : index
    %82 = vector.load %arg10[%c1_61, %c0_62, %c0_63] : memref<4x1x8xf32, #tpu.memory_space<vmem>>, vector<1x1x8xf32>
    %83 = vector.shape_cast %82 : vector<1x1x8xf32> to vector<1x8xf32>
    %84 = vector.broadcast %83 : vector<1x8xf32> to vector<8x8xf32>
    %85 = arith.addf %81, %84 : vector<8x8xf32>
    %cst_64 = arith.constant 0.353553385 : f32
    %86 = vector.broadcast %cst_64 : f32 to vector<8x8xf32>
    %87 = arith.mulf %71, %86 : vector<8x8xf32>
    %88 = arith.truncf %87 : vector<8x8xf32> to vector<8x8xbf16>
    %c1_65 = arith.constant 1 : index
    %c0_66 = arith.constant 0 : index
    %c0_67 = arith.constant 0 : index
    %89 = vector.load %arg20[%c1_65, %c0_66, %c0_67] : memref<4x8x8xbf16, #tpu.memory_space<vmem>>, vector<1x8x8xbf16>
    %90 = vector.shape_cast %89 : vector<1x8x8xbf16> to vector<8x8xbf16>
    %91 = vector.shape_cast %88 : vector<8x8xbf16> to vector<1x8x8xbf16>
    tpu.vector_store %arg20[%c1_65, %c0_66, %c0_67], %91 {strides = array<i32>} : memref<4x8x8xbf16, #tpu.memory_space<vmem>>, vector<1x8x8xbf16>,
    %92 = arith.truncf %78 : vector<8x8xf32> to vector<8x8xbf16>
    %c1_68 = arith.constant 1 : index
    %c0_69 = arith.constant 0 : index
    %c0_70 = arith.constant 0 : index
    %93 = vector.load %arg21[%c1_68, %c0_69, %c0_70] : memref<4x8x8xbf16, #tpu.memory_space<vmem>>, vector<1x8x8xbf16>
    %94 = vector.shape_cast %93 : vector<1x8x8xbf16> to vector<8x8xbf16>
    %95 = vector.shape_cast %92 : vector<8x8xbf16> to vector<1x8x8xbf16>
    tpu.vector_store %arg21[%c1_68, %c0_69, %c0_70], %95 {strides = array<i32>} : memref<4x8x8xbf16, #tpu.memory_space<vmem>>, vector<1x8x8xbf16>,
    %96 = arith.truncf %85 : vector<8x8xf32> to vector<8x8xbf16>
    %c1_71 = arith.constant 1 : index
    %c0_72 = arith.constant 0 : index
    %c0_73 = arith.constant 0 : index
    %97 = vector.load %arg22[%c1_71, %c0_72, %c0_73] : memref<4x8x8xbf16, #tpu.memory_space<vmem>>, vector<1x8x8xbf16>
    %98 = vector.shape_cast %97 : vector<1x8x8xbf16> to vector<8x8xbf16>
    %99 = vector.shape_cast %96 : vector<8x8xbf16> to vector<1x8x8xbf16>
    tpu.vector_store %arg22[%c1_71, %c0_72, %c0_73], %99 {strides = array<i32>} : memref<4x8x8xbf16, #tpu.memory_space<vmem>>, vector<1x8x8xbf16>,
    %c2 = arith.constant 2 : index
    %c0_74 = arith.constant 0 : index
    %c0_75 = arith.constant 0 : index
    %100 = vector.load %arg5[%c2, %c0_74, %c0_75] : memref<4x32x8xbf16, #tpu.memory_space<vmem>>, vector<1x32x8xbf16>
    %101 = vector.shape_cast %100 : vector<1x32x8xbf16> to vector<32x8xbf16>
    %cst_76 = arith.constant dense<0.000000e+00> : vector<8x8xf32>
    %102 = tpu.matmul %29, %101, %cst_76 {dimension_numbers = #tpu.dot_dimension_numbers<[1], [0], [0], [1], [0, 0, 1, 1], [], []>} : vector<8x32xbf16>, vector<32x8xbf16>, vector<8x8xf32> -> vector<8x8xf32>
    %c2_77 = arith.constant 2 : index
    %c0_78 = arith.constant 0 : index
    %c0_79 = arith.constant 0 : index
    %103 = vector.load %arg6[%c2_77, %c0_78, %c0_79] : memref<4x1x8xf32, #tpu.memory_space<vmem>>, vector<1x1x8xf32>
    %104 = vector.shape_cast %103 : vector<1x1x8xf32> to vector<1x8xf32>
    %105 = vector.broadcast %104 : vector<1x8xf32> to vector<8x8xf32>
    %106 = arith.addf %102, %105 : vector<8x8xf32>
    %c2_80 = arith.constant 2 : index
    %c0_81 = arith.constant 0 : index
    %c0_82 = arith.constant 0 : index
    %107 = vector.load %arg7[%c2_80, %c0_81, %c0_82] : memref<4x32x8xbf16, #tpu.memory_space<vmem>>, vector<1x32x8xbf16>
    %108 = vector.shape_cast %107 : vector<1x32x8xbf16> to vector<32x8xbf16>
    %cst_83 = arith.constant dense<0.000000e+00> : vector<8x8xf32>
    %109 = tpu.matmul %29, %108, %cst_83 {dimension_numbers = #tpu.dot_dimension_numbers<[1], [0], [0], [1], [0, 0, 1, 1], [], []>} : vector<8x32xbf16>, vector<32x8xbf16>, vector<8x8xf32> -> vector<8x8xf32>
    %c2_84 = arith.constant 2 : index
    %c0_85 = arith.constant 0 : index
    %c0_86 = arith.constant 0 : index
    %110 = vector.load %arg8[%c2_84, %c0_85, %c0_86] : memref<4x1x8xf32, #tpu.memory_space<vmem>>, vector<1x1x8xf32>
    %111 = vector.shape_cast %110 : vector<1x1x8xf32> to vector<1x8xf32>
    %112 = vector.broadcast %111 : vector<1x8xf32> to vector<8x8xf32>
    %113 = arith.addf %109, %112 : vector<8x8xf32>
    %c2_87 = arith.constant 2 : index
    %c0_88 = arith.constant 0 : index
    %c0_89 = arith.constant 0 : index
    %114 = vector.load %arg9[%c2_87, %c0_88, %c0_89] : memref<4x32x8xbf16, #tpu.memory_space<vmem>>, vector<1x32x8xbf16>
    %115 = vector.shape_cast %114 : vector<1x32x8xbf16> to vector<32x8xbf16>
    %cst_90 = arith.constant dense<0.000000e+00> : vector<8x8xf32>
    %116 = tpu.matmul %29, %115, %cst_90 {dimension_numbers = #tpu.dot_dimension_numbers<[1], [0], [0], [1], [0, 0, 1, 1], [], []>} : vector<8x32xbf16>, vector<32x8xbf16>, vector<8x8xf32> -> vector<8x8xf32>
    %c2_91 = arith.constant 2 : index
    %c0_92 = arith.constant 0 : index
    %c0_93 = arith.constant 0 : index
    %117 = vector.load %arg10[%c2_91, %c0_92, %c0_93] : memref<4x1x8xf32, #tpu.memory_space<vmem>>, vector<1x1x8xf32>
    %118 = vector.shape_cast %117 : vector<1x1x8xf32> to vector<1x8xf32>
    %119 = vector.broadcast %118 : vector<1x8xf32> to vector<8x8xf32>
    %120 = arith.addf %116, %119 : vector<8x8xf32>
    %cst_94 = arith.constant 0.353553385 : f32
    %121 = vector.broadcast %cst_94 : f32 to vector<8x8xf32>
    %122 = arith.mulf %106, %121 : vector<8x8xf32>
    %123 = arith.truncf %122 : vector<8x8xf32> to vector<8x8xbf16>
    %c2_95 = arith.constant 2 : index
    %c0_96 = arith.constant 0 : index
    %c0_97 = arith.constant 0 : index
    %124 = vector.load %arg20[%c2_95, %c0_96, %c0_97] : memref<4x8x8xbf16, #tpu.memory_space<vmem>>, vector<1x8x8xbf16>
    %125 = vector.shape_cast %124 : vector<1x8x8xbf16> to vector<8x8xbf16>
    %126 = vector.shape_cast %123 : vector<8x8xbf16> to vector<1x8x8xbf16>
    tpu.vector_store %arg20[%c2_95, %c0_96, %c0_97], %126 {strides = array<i32>} : memref<4x8x8xbf16, #tpu.memory_space<vmem>>, vector<1x8x8xbf16>,
    %127 = arith.truncf %113 : vector<8x8xf32> to vector<8x8xbf16>
    %c2_98 = arith.constant 2 : index
    %c0_99 = arith.constant 0 : index
    %c0_100 = arith.constant 0 : index
    %128 = vector.load %arg21[%c2_98, %c0_99, %c0_100] : memref<4x8x8xbf16, #tpu.memory_space<vmem>>, vector<1x8x8xbf16>
    %129 = vector.shape_cast %128 : vector<1x8x8xbf16> to vector<8x8xbf16>
    %130 = vector.shape_cast %127 : vector<8x8xbf16> to vector<1x8x8xbf16>
    tpu.vector_store %arg21[%c2_98, %c0_99, %c0_100], %130 {strides = array<i32>} : memref<4x8x8xbf16, #tpu.memory_space<vmem>>, vector<1x8x8xbf16>,
    %131 = arith.truncf %120 : vector<8x8xf32> to vector<8x8xbf16>
    %c2_101 = arith.constant 2 : index
    %c0_102 = arith.constant 0 : index
    %c0_103 = arith.constant 0 : index
    %132 = vector.load %arg22[%c2_101, %c0_102, %c0_103] : memref<4x8x8xbf16, #tpu.memory_space<vmem>>, vector<1x8x8xbf16>
    %133 = vector.shape_cast %132 : vector<1x8x8xbf16> to vector<8x8xbf16>
    %134 = vector.shape_cast %131 : vector<8x8xbf16> to vector<1x8x8xbf16>
    tpu.vector_store %arg22[%c2_101, %c0_102, %c0_103], %134 {strides = array<i32>} : memref<4x8x8xbf16, #tpu.memory_space<vmem>>, vector<1x8x8xbf16>,
    %c3 = arith.constant 3 : index
    %c0_104 = arith.constant 0 : index
    %c0_105 = arith.constant 0 : index
    %135 = vector.load %arg5[%c3, %c0_104, %c0_105] : memref<4x32x8xbf16, #tpu.memory_space<vmem>>, vector<1x32x8xbf16>
    %136 = vector.shape_cast %135 : vector<1x32x8xbf16> to vector<32x8xbf16>
    %cst_106 = arith.constant dense<0.000000e+00> : vector<8x8xf32>
    %137 = tpu.matmul %29, %136, %cst_106 {dimension_numbers = #tpu.dot_dimension_numbers<[1], [0], [0], [1], [0, 0, 1, 1], [], []>} : vector<8x32xbf16>, vector<32x8xbf16>, vector<8x8xf32> -> vector<8x8xf32>
    %c3_107 = arith.constant 3 : index
    %c0_108 = arith.constant 0 : index
    %c0_109 = arith.constant 0 : index
    %138 = vector.load %arg6[%c3_107, %c0_108, %c0_109] : memref<4x1x8xf32, #tpu.memory_space<vmem>>, vector<1x1x8xf32>
    %139 = vector.shape_cast %138 : vector<1x1x8xf32> to vector<1x8xf32>
    %140 = vector.broadcast %139 : vector<1x8xf32> to vector<8x8xf32>
    %141 = arith.addf %137, %140 : vector<8x8xf32>
    %c3_110 = arith.constant 3 : index
    %c0_111 = arith.constant 0 : index
    %c0_112 = arith.constant 0 : index
    %142 = vector.load %arg7[%c3_110, %c0_111, %c0_112] : memref<4x32x8xbf16, #tpu.memory_space<vmem>>, vector<1x32x8xbf16>
    %143 = vector.shape_cast %142 : vector<1x32x8xbf16> to vector<32x8xbf16>
    %cst_113 = arith.constant dense<0.000000e+00> : vector<8x8xf32>
    %144 = tpu.matmul %29, %143, %cst_113 {dimension_numbers = #tpu.dot_dimension_numbers<[1], [0], [0], [1], [0, 0, 1, 1], [], []>} : vector<8x32xbf16>, vector<32x8xbf16>, vector<8x8xf32> -> vector<8x8xf32>
    %c3_114 = arith.constant 3 : index
    %c0_115 = arith.constant 0 : index
    %c0_116 = arith.constant 0 : index
    %145 = vector.load %arg8[%c3_114, %c0_115, %c0_116] : memref<4x1x8xf32, #tpu.memory_space<vmem>>, vector<1x1x8xf32>
    %146 = vector.shape_cast %145 : vector<1x1x8xf32> to vector<1x8xf32>
    %147 = vector.broadcast %146 : vector<1x8xf32> to vector<8x8xf32>
    %148 = arith.addf %144, %147 : vector<8x8xf32>
    %c3_117 = arith.constant 3 : index
    %c0_118 = arith.constant 0 : index
    %c0_119 = arith.constant 0 : index
    %149 = vector.load %arg9[%c3_117, %c0_118, %c0_119] : memref<4x32x8xbf16, #tpu.memory_space<vmem>>, vector<1x32x8xbf16>
    %150 = vector.shape_cast %149 : vector<1x32x8xbf16> to vector<32x8xbf16>
    %cst_120 = arith.constant dense<0.000000e+00> : vector<8x8xf32>
    %151 = tpu.matmul %29, %150, %cst_120 {dimension_numbers = #tpu.dot_dimension_numbers<[1], [0], [0], [1], [0, 0, 1, 1], [], []>} : vector<8x32xbf16>, vector<32x8xbf16>, vector<8x8xf32> -> vector<8x8xf32>
    %c3_121 = arith.constant 3 : index
    %c0_122 = arith.constant 0 : index
    %c0_123 = arith.constant 0 : index
    %152 = vector.load %arg10[%c3_121, %c0_122, %c0_123] : memref<4x1x8xf32, #tpu.memory_space<vmem>>, vector<1x1x8xf32>
    %153 = vector.shape_cast %152 : vector<1x1x8xf32> to vector<1x8xf32>
    %154 = vector.broadcast %153 : vector<1x8xf32> to vector<8x8xf32>
    %155 = arith.addf %151, %154 : vector<8x8xf32>
    %cst_124 = arith.constant 0.353553385 : f32
    %156 = vector.broadcast %cst_124 : f32 to vector<8x8xf32>
    %157 = arith.mulf %141, %156 : vector<8x8xf32>
    %158 = arith.truncf %157 : vector<8x8xf32> to vector<8x8xbf16>
    %c3_125 = arith.constant 3 : index
    %c0_126 = arith.constant 0 : index
    %c0_127 = arith.constant 0 : index
    %159 = vector.load %arg20[%c3_125, %c0_126, %c0_127] : memref<4x8x8xbf16, #tpu.memory_space<vmem>>, vector<1x8x8xbf16>
    %160 = vector.shape_cast %159 : vector<1x8x8xbf16> to vector<8x8xbf16>
    %161 = vector.shape_cast %158 : vector<8x8xbf16> to vector<1x8x8xbf16>
    tpu.vector_store %arg20[%c3_125, %c0_126, %c0_127], %161 {strides = array<i32>} : memref<4x8x8xbf16, #tpu.memory_space<vmem>>, vector<1x8x8xbf16>,
    %162 = arith.truncf %148 : vector<8x8xf32> to vector<8x8xbf16>
    %c3_128 = arith.constant 3 : index
    %c0_129 = arith.constant 0 : index
    %c0_130 = arith.constant 0 : index
    %163 = vector.load %arg21[%c3_128, %c0_129, %c0_130] : memref<4x8x8xbf16, #tpu.memory_space<vmem>>, vector<1x8x8xbf16>
    %164 = vector.shape_cast %163 : vector<1x8x8xbf16> to vector<8x8xbf16>
    %165 = vector.shape_cast %162 : vector<8x8xbf16> to vector<1x8x8xbf16>
    tpu.vector_store %arg21[%c3_128, %c0_129, %c0_130], %165 {strides = array<i32>} : memref<4x8x8xbf16, #tpu.memory_space<vmem>>, vector<1x8x8xbf16>,
    %166 = arith.truncf %155 : vector<8x8xf32> to vector<8x8xbf16>
    %c3_131 = arith.constant 3 : index
    %c0_132 = arith.constant 0 : index
    %c0_133 = arith.constant 0 : index
    %167 = vector.load %arg22[%c3_131, %c0_132, %c0_133] : memref<4x8x8xbf16, #tpu.memory_space<vmem>>, vector<1x8x8xbf16>
    %168 = vector.shape_cast %167 : vector<1x8x8xbf16> to vector<8x8xbf16>
    %169 = vector.shape_cast %166 : vector<8x8xbf16> to vector<1x8x8xbf16>
    tpu.vector_store %arg22[%c3_131, %c0_132, %c0_133], %169 {strides = array<i32>} : memref<4x8x8xbf16, #tpu.memory_space<vmem>>, vector<1x8x8xbf16>,
    %c0_134 = arith.constant 0 : index
    %c0_135 = arith.constant 0 : index
    %c0_136 = arith.constant 0 : index
    %170 = vector.load %arg20[%c0_134, %c0_135, %c0_136] : memref<4x8x8xbf16, #tpu.memory_space<vmem>>, vector<4x8x8xbf16>
    %c0_137 = arith.constant 0 : index
    %c0_138 = arith.constant 0 : index
    %c0_139 = arith.constant 0 : index
    %171 = vector.load %arg21[%c0_137, %c0_138, %c0_139] : memref<4x8x8xbf16, #tpu.memory_space<vmem>>, vector<4x8x8xbf16>
    %c0_140 = arith.constant 0 : index
    %c0_141 = arith.constant 0 : index
    %c0_142 = arith.constant 0 : index
    %172 = vector.load %arg22[%c0_140, %c0_141, %c0_142] : memref<4x8x8xbf16, #tpu.memory_space<vmem>>, vector<4x8x8xbf16>
    "tpu.trace_start"() <{level = 10 : i32, message = "hqd,hkd->hqk"}> : () -> ()
    %cst_143 = arith.constant dense<0.000000e+00> : vector<4x8x8xf32>
    %173 = tpu.matmul %170, %171, %cst_143 {dimension_numbers = #tpu.dot_dimension_numbers<[2], [2], [1], [1], [0, 0, 0, 1, 1, 1], [0], [0]>} : vector<4x8x8xbf16>, vector<4x8x8xbf16>, vector<4x8x8xf32> -> vector<4x8x8xf32>
    "tpu.trace_stop"() : () -> ()
    %174 = vector.broadcast %4 : vector<1x1x8xf32> to vector<4x8x8xf32>
    %175 = arith.addf %173, %174 : vector<4x8x8xf32>
    %cst_144 = arith.constant dense<0xFF800000> : vector<4x8xf32>
    %176 = vector.multi_reduction <maximumf>, %175, %cst_144 [2] : vector<4x8x8xf32> to vector<4x8xf32>
    %177 = vector.shape_cast %176 : vector<4x8xf32> to vector<4x8x1xf32>
    %178 = vector.broadcast %177 : vector<4x8x1xf32> to vector<4x8x8xf32>
    %179 = arith.subf %175, %178 : vector<4x8x8xf32>
    %180 = math.exp %179 : vector<4x8x8xf32>
    %cst_145 = arith.constant dense<0.000000e+00> : vector<4x8xf32>
    %181 = vector.multi_reduction <add>, %180, %cst_145 [2] : vector<4x8x8xf32> to vector<4x8xf32>
    %182 = vector.shape_cast %181 : vector<4x8xf32> to vector<4x8x1xf32>
    %183 = tpu.reciprocal %182 {approx = true} : vector<4x8x1xf32> -> vector<4x8x1xf32>
    %184 = vector.broadcast %183 : vector<4x8x1xf32> to vector<4x8x8xf32>
    %185 = arith.mulf %180, %184 : vector<4x8x8xf32>
    %186 = arith.truncf %185 : vector<4x8x8xf32> to vector<4x8x8xbf16>
    "tpu.trace_start"() <{level = 10 : i32, message = "hqk,hkd->hqd"}> : () -> ()
    %cst_146 = arith.constant dense<0.000000e+00> : vector<4x8x8xf32>
    %187 = tpu.matmul %186, %172, %cst_146 {dimension_numbers = #tpu.dot_dimension_numbers<[2], [1], [1], [2], [0, 0, 0, 1, 1, 2], [0], [0]>} : vector<4x8x8xbf16>, vector<4x8x8xbf16>, vector<4x8x8xf32> -> vector<4x8x8xf32>
    %cst_147 = arith.constant 0.000000e+00 : f32
    "tpu.trace_stop"() : () -> ()
    %188 = vector.broadcast %cst_147 : f32 to vector<8x32xf32>
    %189 = vector.extract_strided_slice %187 {offsets = [0, 0, 0], sizes = [1, 8, 8], strides = [1, 1, 1]} : vector<4x8x8xf32> to vector<1x8x8xf32>
    %190 = vector.shape_cast %189 : vector<1x8x8xf32> to vector<8x8xf32>
    %191 = arith.truncf %190 : vector<8x8xf32> to vector<8x8xbf16>
    %c0_148 = arith.constant 0 : index
    %c0_149 = arith.constant 0 : index
    %c0_150 = arith.constant 0 : index
    %192 = vector.load %arg11[%c0_148, %c0_149, %c0_150] : memref<4x8x32xbf16, #tpu.memory_space<vmem>>, vector<1x8x32xbf16>
    %193 = vector.shape_cast %192 : vector<1x8x32xbf16> to vector<8x32xbf16>
    %cst_151 = arith.constant dense<0.000000e+00> : vector<8x32xf32>
    %194 = tpu.matmul %191, %193, %cst_151 {dimension_numbers = #tpu.dot_dimension_numbers<[1], [0], [0], [1], [0, 0, 1, 1], [], []>} : vector<8x8xbf16>, vector<8x32xbf16>, vector<8x32xf32> -> vector<8x32xf32>
    %195 = arith.addf %188, %194 : vector<8x32xf32>
    %196 = vector.extract_strided_slice %187 {offsets = [1, 0, 0], sizes = [1, 8, 8], strides = [1, 1, 1]} : vector<4x8x8xf32> to vector<1x8x8xf32>
    %197 = vector.shape_cast %196 : vector<1x8x8xf32> to vector<8x8xf32>
    %198 = arith.truncf %197 : vector<8x8xf32> to vector<8x8xbf16>
    %c1_152 = arith.constant 1 : index
    %c0_153 = arith.constant 0 : index
    %c0_154 = arith.constant 0 : index
    %199 = vector.load %arg11[%c1_152, %c0_153, %c0_154] : memref<4x8x32xbf16, #tpu.memory_space<vmem>>, vector<1x8x32xbf16>
    %200 = vector.shape_cast %199 : vector<1x8x32xbf16> to vector<8x32xbf16>
    %cst_155 = arith.constant dense<0.000000e+00> : vector<8x32xf32>
    %201 = tpu.matmul %198, %200, %cst_155 {dimension_numbers = #tpu.dot_dimension_numbers<[1], [0], [0], [1], [0, 0, 1, 1], [], []>} : vector<8x8xbf16>, vector<8x32xbf16>, vector<8x32xf32> -> vector<8x32xf32>
    %202 = arith.addf %195, %201 : vector<8x32xf32>
    %203 = vector.extract_strided_slice %187 {offsets = [2, 0, 0], sizes = [1, 8, 8], strides = [1, 1, 1]} : vector<4x8x8xf32> to vector<1x8x8xf32>
    %204 = vector.shape_cast %203 : vector<1x8x8xf32> to vector<8x8xf32>
    %205 = arith.truncf %204 : vector<8x8xf32> to vector<8x8xbf16>
    %c2_156 = arith.constant 2 : index
    %c0_157 = arith.constant 0 : index
    %c0_158 = arith.constant 0 : index
    %206 = vector.load %arg11[%c2_156, %c0_157, %c0_158] : memref<4x8x32xbf16, #tpu.memory_space<vmem>>, vector<1x8x32xbf16>
    %207 = vector.shape_cast %206 : vector<1x8x32xbf16> to vector<8x32xbf16>
    %cst_159 = arith.constant dense<0.000000e+00> : vector<8x32xf32>
    %208 = tpu.matmul %205, %207, %cst_159 {dimension_numbers = #tpu.dot_dimension_numbers<[1], [0], [0], [1], [0, 0, 1, 1], [], []>} : vector<8x8xbf16>, vector<8x32xbf16>, vector<8x32xf32> -> vector<8x32xf32>
    %209 = arith.addf %202, %208 : vector<8x32xf32>
    %210 = vector.extract_strided_slice %187 {offsets = [3, 0, 0], sizes = [1, 8, 8], strides = [1, 1, 1]} : vector<4x8x8xf32> to vector<1x8x8xf32>
    %211 = vector.shape_cast %210 : vector<1x8x8xf32> to vector<8x8xf32>
    %212 = arith.truncf %211 : vector<8x8xf32> to vector<8x8xbf16>
    %c3_160 = arith.constant 3 : index
    %c0_161 = arith.constant 0 : index
    %c0_162 = arith.constant 0 : index
    %213 = vector.load %arg11[%c3_160, %c0_161, %c0_162] : memref<4x8x32xbf16, #tpu.memory_space<vmem>>, vector<1x8x32xbf16>
    %214 = vector.shape_cast %213 : vector<1x8x32xbf16> to vector<8x32xbf16>
    %cst_163 = arith.constant dense<0.000000e+00> : vector<8x32xf32>
    %215 = tpu.matmul %212, %214, %cst_163 {dimension_numbers = #tpu.dot_dimension_numbers<[1], [0], [0], [1], [0, 0, 1, 1], [], []>} : vector<8x8xbf16>, vector<8x32xbf16>, vector<8x32xf32> -> vector<8x32xf32>
    %216 = arith.addf %209, %215 : vector<8x32xf32>
    %c0_164 = arith.constant 0 : index
    %c0_165 = arith.constant 0 : index
    %217 = vector.load %arg12[%c0_164, %c0_165] : memref<1x32xf32, #tpu.memory_space<vmem>>, vector<1x32xf32>
    %218 = vector.broadcast %217 : vector<1x32xf32> to vector<8x32xf32>
    %219 = arith.addf %216, %218 : vector<8x32xf32>
    %220 = arith.addf %1, %219 : vector<8x32xf32>
    %c0_166 = arith.constant 0 : index
    %c0_167 = arith.constant 0 : index
    %221 = vector.load %arg13[%c0_166, %c0_167] : memref<1x32xf32, #tpu.memory_space<vmem>>, vector<1x32xf32>
    %c0_168 = arith.constant 0 : index
    %c0_169 = arith.constant 0 : index
    %222 = vector.load %arg14[%c0_168, %c0_169] : memref<1x32xf32, #tpu.memory_space<vmem>>, vector<1x32xf32>
    %cst_170 = arith.constant dense<0.000000e+00> : vector<8xf32>
    %223 = vector.multi_reduction <add>, %220, %cst_170 [1] : vector<8x32xf32> to vector<8xf32>
    %224 = vector.shape_cast %223 : vector<8xf32> to vector<8x1xf32>
    %cst_171 = arith.constant 3.200000e+01 : f32
    %225 = vector.broadcast %cst_171 : f32 to vector<8x1xf32>
    %226 = arith.divf %224, %225 : vector<8x1xf32>
    %227 = vector.broadcast %226 : vector<8x1xf32> to vector<8x32xf32>
    %228 = arith.subf %220, %227 : vector<8x32xf32>
    %229 = arith.mulf %228, %228 : vector<8x32xf32>
    %cst_172 = arith.constant dense<0.000000e+00> : vector<8xf32>
    %230 = vector.multi_reduction <add>, %229, %cst_172 [1] : vector<8x32xf32> to vector<8xf32>
    %231 = vector.shape_cast %230 : vector<8xf32> to vector<8x1xf32>
    %cst_173 = arith.constant 3.200000e+01 : f32
    %232 = vector.broadcast %cst_173 : f32 to vector<8x1xf32>
    %233 = arith.divf %231, %232 : vector<8x1xf32>
    %234 = vector.broadcast %226 : vector<8x1xf32> to vector<8x32xf32>
    %235 = arith.subf %220, %234 : vector<8x32xf32>
    %cst_174 = arith.constant 9.99999996E-13 : f32
    %236 = vector.broadcast %cst_174 : f32 to vector<8x1xf32>
    %237 = arith.addf %233, %236 : vector<8x1xf32>
    %238 = math.rsqrt %237 : vector<8x1xf32>
    %239 = vector.broadcast %238 : vector<8x1xf32> to vector<8x32xf32>
    %240 = arith.mulf %235, %239 : vector<8x32xf32>
    %241 = vector.broadcast %221 : vector<1x32xf32> to vector<8x32xf32>
    %242 = arith.mulf %240, %241 : vector<8x32xf32>
    %243 = vector.broadcast %222 : vector<1x32xf32> to vector<8x32xf32>
    %244 = arith.addf %242, %243 : vector<8x32xf32>
    %245 = arith.truncf %244 : vector<8x32xf32> to vector<8x32xbf16>
    %c0_175 = arith.constant 0 : index
    %c0_176 = arith.constant 0 : index
    %246 = vector.load %arg15[%c0_175, %c0_176] : memref<32x64xbf16, #tpu.memory_space<vmem>>, vector<32x64xbf16>
    %cst_177 = arith.constant dense<0.000000e+00> : vector<8x64xf32>
    %247 = tpu.matmul %245, %246, %cst_177 {dimension_numbers = #tpu.dot_dimension_numbers<[1], [0], [0], [1], [0, 0, 1, 1], [], []>} : vector<8x32xbf16>, vector<32x64xbf16>, vector<8x64xf32> -> vector<8x64xf32>
    %c0_178 = arith.constant 0 : index
    %c0_179 = arith.constant 0 : index
    %248 = vector.load %arg16[%c0_178, %c0_179] : memref<1x64xf32, #tpu.memory_space<vmem>>, vector<1x64xf32>
    %249 = vector.broadcast %248 : vector<1x64xf32> to vector<8x64xf32>
    %250 = arith.addf %247, %249 : vector<8x64xf32>
    %251 = arith.mulf %250, %250 : vector<8x64xf32>
    %252 = arith.mulf %251, %250 : vector<8x64xf32>
    %cst_180 = arith.constant 4.471500e-02 : f32
    %253 = vector.broadcast %cst_180 : f32 to vector<8x64xf32>
    %254 = arith.mulf %253, %252 : vector<8x64xf32>
    %255 = arith.addf %250, %254 : vector<8x64xf32>
    %cst_181 = arith.constant 0.797884583 : f32
    %256 = vector.broadcast %cst_181 : f32 to vector<8x64xf32>
    %257 = arith.mulf %256, %255 : vector<8x64xf32>
    %cst_182 = arith.constant 5.000000e-01 : f32
    %258 = vector.broadcast %cst_182 : f32 to vector<8x64xf32>
    %259 = arith.mulf %258, %250 : vector<8x64xf32>
    %260 = math.tanh %257 : vector<8x64xf32>
    %cst_183 = arith.constant 1.000000e+00 : f32
    %261 = vector.broadcast %cst_183 : f32 to vector<8x64xf32>
    %262 = arith.addf %261, %260 : vector<8x64xf32>
    %263 = arith.mulf %259, %262 : vector<8x64xf32>
    %264 = arith.truncf %263 : vector<8x64xf32> to vector<8x64xbf16>
    %c0_184 = arith.constant 0 : index
    %c0_185 = arith.constant 0 : index
    %265 = vector.load %arg17[%c0_184, %c0_185] : memref<64x32xbf16, #tpu.memory_space<vmem>>, vector<64x32xbf16>
    %cst_186 = arith.constant dense<0.000000e+00> : vector<8x32xf32>
    %266 = tpu.matmul %264, %265, %cst_186 {dimension_numbers = #tpu.dot_dimension_numbers<[1], [0], [0], [1], [0, 0, 1, 1], [], []>} : vector<8x64xbf16>, vector<64x32xbf16>, vector<8x32xf32> -> vector<8x32xf32>
    %c0_187 = arith.constant 0 : index
    %c0_188 = arith.constant 0 : index
    %267 = vector.load %arg18[%c0_187, %c0_188] : memref<1x32xf32, #tpu.memory_space<vmem>>, vector<1x32xf32>
    %268 = vector.broadcast %267 : vector<1x32xf32> to vector<8x32xf32>
    %269 = arith.addf %266, %268 : vector<8x32xf32>
    %270 = arith.addf %220, %269 : vector<8x32xf32>
    %c0_189 = arith.constant 0 : index
    %c0_190 = arith.constant 0 : index
    %c0_191 = arith.constant 0 : index
    %271 = vector.load %arg19[%c0_189, %c0_190, %c0_191] : memref<1x8x32xf32, #tpu.memory_space<vmem>>, vector<1x8x32xf32>
    %272 = vector.shape_cast %271 : vector<1x8x32xf32> to vector<8x32xf32>
    %273 = vector.shape_cast %270 : vector<8x32xf32> to vector<1x8x32xf32>
    tpu.vector_store %arg19[%c0_189, %c0_190, %c0_191], %273 {strides = array<i32>} : memref<1x8x32xf32, #tpu.memory_space<vmem>>, vector<1x8x32xf32>,
    return
  }
  func.func @transform_0(%arg0: i32) -> (i32, i32, i32) {
    %c0_i32 = arith.constant 0 : i32
    %c0_i32_0 = arith.constant 0 : i32
    %c0_i32_1 = arith.constant 0 : i32
    return %arg0, %c0_i32, %c0_i32_0 : i32, i32, i32
  }
  func.func @transform_1(%arg0: i32) -> (i32, i32, i32) {
    %c0_i32 = arith.constant 0 : i32
    %c0_i32_0 = arith.constant 0 : i32
    %c0_i32_1 = arith.constant 0 : i32
    return %arg0, %c0_i32, %c0_i32_0 : i32, i32, i32
  }
  func.func @transform_2(%arg0: i32) -> (i32, i32) {
    %c0_i32 = arith.constant 0 : i32
    %c0_i32_0 = arith.constant 0 : i32
    %c0_i32_1 = arith.constant 0 : i32
    return %c0_i32, %c0_i32_0 : i32, i32
  }
  func.func @transform_3(%arg0: i32) -> (i32, i32) {
    %c0_i32 = arith.constant 0 : i32
    %c0_i32_0 = arith.constant 0 : i32
    %c0_i32_1 = arith.constant 0 : i32
    return %c0_i32, %c0_i32_0 : i32, i32
  }
  func.func @transform_4(%arg0: i32) -> (i32, i32, i32) {
    %c0_i32 = arith.constant 0 : i32
    %c0_i32_0 = arith.constant 0 : i32
    %c0_i32_1 = arith.constant 0 : i32
    %c0_i32_2 = arith.constant 0 : i32
    return %c0_i32, %c0_i32_0, %c0_i32_1 : i32, i32, i32
  }
  func.func @transform_5(%arg0: i32) -> (i32, i32, i32) {
    %c0_i32 = arith.constant 0 : i32
    %c0_i32_0 = arith.constant 0 : i32
    %c0_i32_1 = arith.constant 0 : i32
    %c0_i32_2 = arith.constant 0 : i32
    return %c0_i32, %c0_i32_0, %c0_i32_1 : i32, i32, i32
  }
  func.func @transform_6(%arg0: i32) -> (i32, i32, i32) {
    %c0_i32 = arith.constant 0 : i32
    %c0_i32_0 = arith.constant 0 : i32
    %c0_i32_1 = arith.constant 0 : i32
    %c0_i32_2 = arith.constant 0 : i32
    return %c0_i32, %c0_i32_0, %c0_i32_1 : i32, i32, i32
  }
  func.func @transform_7(%arg0: i32) -> (i32, i32, i32) {
    %c0_i32 = arith.constant 0 : i32
    %c0_i32_0 = arith.constant 0 : i32
    %c0_i32_1 = arith.constant 0 : i32
    %c0_i32_2 = arith.constant 0 : i32
    return %c0_i32, %c0_i32_0, %c0_i32_1 : i32, i32, i32
  }
  func.func @transform_8(%arg0: i32) -> (i32, i32, i32) {
    %c0_i32 = arith.constant 0 : i32
    %c0_i32_0 = arith.constant 0 : i32
    %c0_i32_1 = arith.constant 0 : i32
    %c0_i32_2 = arith.constant 0 : i32
    return %c0_i32, %c0_i32_0, %c0_i32_1 : i32, i32, i32
  }
  func.func @transform_9(%arg0: i32) -> (i32, i32, i32) {
    %c0_i32 = arith.constant 0 : i32
    %c0_i32_0 = arith.constant 0 : i32
    %c0_i32_1 = arith.constant 0 : i32
    %c0_i32_2 = arith.constant 0 : i32
    return %c0_i32, %c0_i32_0, %c0_i32_1 : i32, i32, i32
  }
  func.func @transform_10(%arg0: i32) -> (i32, i32, i32) {
    %c0_i32 = arith.constant 0 : i32
    %c0_i32_0 = arith.constant 0 : i32
    %c0_i32_1 = arith.constant 0 : i32
    %c0_i32_2 = arith.constant 0 : i32
    return %c0_i32, %c0_i32_0, %c0_i32_1 : i32, i32, i32
  }
  func.func @transform_11(%arg0: i32) -> (i32, i32) {
    %c0_i32 = arith.constant 0 : i32
    %c0_i32_0 = arith.constant 0 : i32
    %c0_i32_1 = arith.constant 0 : i32
    return %c0_i32, %c0_i32_0 : i32, i32
  }
  func.func @transform_12(%arg0: i32) -> (i32, i32) {
    %c0_i32 = arith.constant 0 : i32
    %c0_i32_0 = arith.constant 0 : i32
    %c0_i32_1 = arith.constant 0 : i32
    return %c0_i32, %c0_i32_0 : i32, i32
  }
  func.func @transform_13(%arg0: i32) -> (i32, i32) {
    %c0_i32 = arith.constant 0 : i32
    %c0_i32_0 = arith.constant 0 : i32
    %c0_i32_1 = arith.constant 0 : i32
    return %c0_i32, %c0_i32_0 : i32, i32
  }
  func.func @transform_14(%arg0: i32) -> (i32, i32) {
    %c0_i32 = arith.constant 0 : i32
    %c0_i32_0 = arith.constant 0 : i32
    %c0_i32_1 = arith.constant 0 : i32
    return %c0_i32, %c0_i32_0 : i32, i32
  }
  func.func @transform_15(%arg0: i32) -> (i32, i32) {
    %c0_i32 = arith.constant 0 : i32
    %c0_i32_0 = arith.constant 0 : i32
    %c0_i32_1 = arith.constant 0 : i32
    return %c0_i32, %c0_i32_0 : i32, i32
  }
  func.func @transform_16(%arg0: i32) -> (i32, i32) {
    %c0_i32 = arith.constant 0 : i32
    %c0_i32_0 = arith.constant 0 : i32
    %c0_i32_1 = arith.constant 0 : i32
    return %c0_i32, %c0_i32_0 : i32, i32
  }
  func.func @transform_17(%arg0: i32) -> (i32, i32) {
    %c0_i32 = arith.constant 0 : i32
    %c0_i32_0 = arith.constant 0 : i32
    %c0_i32_1 = arith.constant 0 : i32
    return %c0_i32, %c0_i32_0 : i32, i32
  }
  func.func @transform_18(%arg0: i32) -> (i32, i32, i32) {
    %c0_i32 = arith.constant 0 : i32
    %c0_i32_0 = arith.constant 0 : i32
    %c0_i32_1 = arith.constant 0 : i32
    return %arg0, %c0_i32, %c0_i32_0 : i32, i32, i32
  }
}

</mosaic_0001>

<llo_original>
// kernel: tpu_custom_call.1
$region0: #{tpu_custom_call.1}
  #allocation0 [shape = 'u32[]', space=smem, size = 0x4, offset = 0x4, fixed_abs, tag = 'smem constant byte address 0x4 - core index']
  #allocation1 [shape = 'u32[144,128]{1,0:T(1,128)}', space=vmem, size = 0x12000, scoped, tag = 'internal scratch']
  #allocation2 [shape = 'bf16[4,8,8]{2,1,0:T(8,128)(2,1)}', space=vmem, size = 0x2000, scoped, tag = 'scratch operand']
  #allocation3 [shape = 'bf16[4,8,8]{2,1,0:T(8,128)(2,1)}', space=vmem, size = 0x2000, scoped, tag = 'scratch operand']
  #allocation4 [shape = 'bf16[4,8,8]{2,1,0:T(8,128)(2,1)}', space=vmem, size = 0x2000, scoped, tag = 'scratch operand']
  %s0 = inlined_call_operand.vmem [shape: f32[2,8,32], index: 0, kind: input, shape index: {}]
  %s1 = inlined_call_operand.vmem [shape: f32[2,1,8], index: 1, kind: input, shape index: {}]
  %s2 = inlined_call_operand.vmem [shape: f32[1,32], index: 2, kind: input, shape index: {}]
  %s3 = inlined_call_operand.vmem [shape: f32[1,32], index: 3, kind: input, shape index: {}]
  %s4 = inlined_call_operand.vmem [shape: bf16[4,32,8], index: 4, kind: input, shape index: {}]
  %s5 = inlined_call_operand.vmem [shape: f32[4,1,8], index: 5, kind: input, shape index: {}]
  %s6 = inlined_call_operand.vmem [shape: bf16[4,32,8], index: 6, kind: input, shape index: {}]
  %s7 = inlined_call_operand.vmem [shape: f32[4,1,8], index: 7, kind: input, shape index: {}]
  %s8 = inlined_call_operand.vmem [shape: bf16[4,32,8], index: 8, kind: input, shape index: {}]
  %s9 = inlined_call_operand.vmem [shape: f32[4,1,8], index: 9, kind: input, shape index: {}]
  %s10 = inlined_call_operand.vmem [shape: bf16[4,8,32], index: 10, kind: input, shape index: {}]
  %s11 = inlined_call_operand.vmem [shape: f32[1,32], index: 11, kind: input, shape index: {}]
  %s12 = inlined_call_operand.vmem [shape: f32[1,32], index: 12, kind: input, shape index: {}]
  %s13 = inlined_call_operand.vmem [shape: f32[1,32], index: 13, kind: input, shape index: {}]
  %s14 = inlined_call_operand.vmem [shape: bf16[32,64], index: 14, kind: input, shape index: {}]
  %s15 = inlined_call_operand.vmem [shape: f32[1,64], index: 15, kind: input, shape index: {}]
  %s16 = inlined_call_operand.vmem [shape: bf16[64,32], index: 16, kind: input, shape index: {}]
  %s17 = inlined_call_operand.vmem [shape: f32[1,32], index: 17, kind: input, shape index: {}]
  %s18 = inlined_call_operand.hbm [shape: f32[2,8,32], index: 18, kind: output, shape index: {}]
  %s19 = sld [smem:[#allocation0]]
  $region105: #{tpu_custom_call.1} parent=0
    _
  %s21 = ssub.s32 1, %s19
  %s22 = scalar_select 0, %s21, %s19
  $region1: #{tpu_custom_call.1} parent=0
    #allocation5 [shape = 'u8[8192]{0}', space=vmem, size = 0x2000, scoped, tag = 'output window, operand 0']
    #allocation6 [shape = 's32[2]{0}', space=sflag, size = 0x8, scoped, tag = 'scoped memory for tpu_custom_call.1']
    %23 = vsyncpa [#allocation6], 0
    %s24 = scalar_lea.sflag [#allocation6], 1
    %25 = vsyncpa %s24, 0
    loop: start=0, step=1, limit=4
    $region2: #{tpu_custom_call.1} parent=1 // loop_pre_header
      _
    $region3: #{tpu_custom_call.1} parent=1 // loop_header
      %s27 = sphi 0, %s31
      %p28 = scmp.ge.s32.totalorder %s27, 4
      %s37 = sphi 0, %s39
      %s40 = sphi 0, %s37
      %s41 = sphi 0, %s40
      %s57 = sphi 0, %s41
      %s63 = sphi 0, %s65
      %s66 = sphi 0, %s63
      %s67 = sphi 0, %s66
      %s83 = sphi 0, %s67
      %s87 = sphi 0, %s87
      %s89 = sphi 0, %s87
      %s90 = sphi 0, %s89
      %s104 = sphi 0, %s90
      %s108 = sphi 0, %s108
      %s110 = sphi 0, %s108
      %s111 = sphi 0, %s110
      %s125 = sphi 0, %s111
      %s129 = sphi 0, %s129
      %s131 = sphi 0, %s129
      %s132 = sphi 0, %s131
      %s146 = sphi 0, %s132
      %s150 = sphi 0, %s150
      %s152 = sphi 0, %s150
      %s153 = sphi 0, %s152
      %s167 = sphi 0, %s153
      %s171 = sphi 0, %s171
      %s173 = sphi 0, %s171
      %s174 = sphi 0, %s173
      %s188 = sphi 0, %s174
      %s192 = sphi 0, %s192
      %s194 = sphi 0, %s192
      %s195 = sphi 0, %s194
      %s209 = sphi 0, %s195
      %s213 = sphi 0, %s213
      %s215 = sphi 0, %s213
      %s216 = sphi 0, %s215
      %s230 = sphi 0, %s216
      %s234 = sphi 0, %s234
      %s236 = sphi 0, %s234
      %s237 = sphi 0, %s236
      %s251 = sphi 0, %s237
      %s255 = sphi 0, %s255
      %s257 = sphi 0, %s255
      %s258 = sphi 0, %s257
      %s272 = sphi 0, %s258
      %s276 = sphi 0, %s276
      %s278 = sphi 0, %s276
      %s279 = sphi 0, %s278
      %s293 = sphi 0, %s279
      %s297 = sphi 0, %s297
      %s299 = sphi 0, %s297
      %s300 = sphi 0, %s299
      %s314 = sphi 0, %s300
      %s318 = sphi 0, %s318
      %s320 = sphi 0, %s318
      %s321 = sphi 0, %s320
      %s335 = sphi 0, %s321
      %s339 = sphi 0, %s339
      %s341 = sphi 0, %s339
      %s342 = sphi 0, %s341
      %s356 = sphi 0, %s342
      %s360 = sphi 0, %s360
      %s362 = sphi 0, %s360
      %s363 = sphi 0, %s362
      %s377 = sphi 0, %s363
      %s381 = sphi 0, %s381
      %s383 = sphi 0, %s381
      %s384 = sphi 0, %s383
      %s398 = sphi 0, %s384
      %s402 = sphi 0, %s402
      %s404 = sphi 0, %s402
      %s405 = sphi 0, %s404
      %s419 = sphi 0, %s405
      %s425 = sphi 0, %s427
      %s428 = sphi 0, %s425
      %s429 = sphi 0, %s428
      %s445 = sphi 0, %s429
    $region4: #{tpu_custom_call.1} parent=1 // loop_header_branch
      %30 = sbr.rel (%p28) target = $region8
    $region5: #{tpu_custom_call.1} parent=1 // loop_body
      %s32 = ssub.s32 %s27, 1
      %s33 = ssub.s32 %s27, 2
      %s34 = sadd.s32 %s27, 1
      %s35 = ssub.s32 %s27, %s34
      %p36 = scmp.eq.s32.totalorder %s35, 0
      %s38 = sadd.s32 %s37, 1
      %s39 = scalar_select %p36, %s37, %s38
      %p42 = pneg %p36
      %p43 = scmp.eq.s32.totalorder %s27, 1
      %p44 = por %p42, %p43
      %p45 = scmp.ne.s32.totalorder %s37, %s40
      %p46 = scmp.eq.s32.totalorder %s27, 0
      %p47 = por %p45, %p46
      %p48 = scmp.ne.s32.totalorder %s37, %s40
      %p49 = scmp.eq.s32.totalorder %s32, 1
      %p50 = por %p48, %p49
      %p51 = scmp.ne.s32.totalorder %s40, %s41
      %p52 = scmp.eq.s32.totalorder %s32, 0
      %p53 = por %p51, %p52
      %p54 = scmp.ne.s32.totalorder %s40, %s41
      %p55 = scmp.eq.s32.totalorder %s33, 1
      %p56 = por %p54, %p55
      %p58 = scmp.ne.s32.totalorder %s41, %s57
      %p59 = scmp.eq.s32.totalorder %s33, 0
      %p60 = por %p58, %p59
      %s61 = ssub.s32 %s27, %s34
      %p62 = scmp.eq.s32.totalorder %s61, 0
      %s64 = sadd.s32 %s63, 1
      %s65 = scalar_select %p62, %s63, %s64
      %p68 = pneg %p62
      %p69 = scmp.eq.s32.totalorder %s27, 1
      %p70 = por %p68, %p69
      %p71 = scmp.ne.s32.totalorder %s63, %s66
      %p72 = scmp.eq.s32.totalorder %s27, 0
      %p73 = por %p71, %p72
      %p74 = scmp.ne.s32.totalorder %s63, %s66
      %p75 = scmp.eq.s32.totalorder %s32, 1
      %p76 = por %p74, %p75
      %p77 = scmp.ne.s32.totalorder %s66, %s67
      %p78 = scmp.eq.s32.totalorder %s32, 0
      %p79 = por %p77, %p78
      %p80 = scmp.ne.s32.totalorder %s66, %s67
      %p81 = scmp.eq.s32.totalorder %s33, 1
      %p82 = por %p80, %p81
      %p84 = scmp.ne.s32.totalorder %s67, %s83
      %p85 = scmp.eq.s32.totalorder %s33, 0
      %p86 = por %p84, %p85
      %s88 = sadd.s32 %s87, 1
      %p91 = scmp.eq.s32.totalorder %s27, 1
      %p92 = scmp.ne.s32.totalorder %s87, %s89
      %p93 = scmp.eq.s32.totalorder %s27, 0
      %p94 = por %p92, %p93
      %p95 = scmp.ne.s32.totalorder %s87, %s89
      %p96 = scmp.eq.s32.totalorder %s32, 1
      %p97 = por %p95, %p96
      %p98 = scmp.ne.s32.totalorder %s89, %s90
      %p99 = scmp.eq.s32.totalorder %s32, 0
      %p100 = por %p98, %p99
      %p101 = scmp.ne.s32.totalorder %s89, %s90
      %p102 = scmp.eq.s32.totalorder %s33, 1
      %p103 = por %p101, %p102
      %p105 = scmp.ne.s32.totalorder %s90, %s104
      %p106 = scmp.eq.s32.totalorder %s33, 0
      %p107 = por %p105, %p106
      %s109 = sadd.s32 %s108, 1
      %p112 = scmp.eq.s32.totalorder %s27, 1
      %p113 = scmp.ne.s32.totalorder %s108, %s110
      %p114 = scmp.eq.s32.totalorder %s27, 0
      %p115 = por %p113, %p114
      %p116 = scmp.ne.s32.totalorder %s108, %s110
      %p117 = scmp.eq.s32.totalorder %s32, 1
      %p118 = por %p116, %p117
      %p119 = scmp.ne.s32.totalorder %s110, %s111
      %p120 = scmp.eq.s32.totalorder %s32, 0
      %p121 = por %p119, %p120
      %p122 = scmp.ne.s32.totalorder %s110, %s111
      %p123 = scmp.eq.s32.totalorder %s33, 1
      %p124 = por %p122, %p123
      %p126 = scmp.ne.s32.totalorder %s111, %s125
      %p127 = scmp.eq.s32.totalorder %s33, 0
      %p128 = por %p126, %p127
      %s130 = sadd.s32 %s129, 1
      %p133 = scmp.eq.s32.totalorder %s27, 1
      %p134 = scmp.ne.s32.totalorder %s129, %s131
      %p135 = scmp.eq.s32.totalorder %s27, 0
      %p136 = por %p134, %p135
      %p137 = scmp.ne.s32.totalorder %s129, %s131
      %p138 = scmp.eq.s32.totalorder %s32, 1
      %p139 = por %p137, %p138
      %p140 = scmp.ne.s32.totalorder %s131, %s132
      %p141 = scmp.eq.s32.totalorder %s32, 0
      %p142 = por %p140, %p141
      %p143 = scmp.ne.s32.totalorder %s131, %s132
      %p144 = scmp.eq.s32.totalorder %s33, 1
      %p145 = por %p143, %p144
      %p147 = scmp.ne.s32.totalorder %s132, %s146
      %p148 = scmp.eq.s32.totalorder %s33, 0
      %p149 = por %p147, %p148
      %s151 = sadd.s32 %s150, 1
      %p154 = scmp.eq.s32.totalorder %s27, 1
      %p155 = scmp.ne.s32.totalorder %s150, %s152
      %p156 = scmp.eq.s32.totalorder %s27, 0
      %p157 = por %p155, %p156
      %p158 = scmp.ne.s32.totalorder %s150, %s152
      %p159 = scmp.eq.s32.totalorder %s32, 1
      %p160 = por %p158, %p159
      %p161 = scmp.ne.s32.totalorder %s152, %s153
      %p162 = scmp.eq.s32.totalorder %s32, 0
      %p163 = por %p161, %p162
      %p164 = scmp.ne.s32.totalorder %s152, %s153
      %p165 = scmp.eq.s32.totalorder %s33, 1
      %p166 = por %p164, %p165
      %p168 = scmp.ne.s32.totalorder %s153, %s167
      %p169 = scmp.eq.s32.totalorder %s33, 0
      %p170 = por %p168, %p169
      %s172 = sadd.s32 %s171, 1
      %p175 = scmp.eq.s32.totalorder %s27, 1
      %p176 = scmp.ne.s32.totalorder %s171, %s173
      %p177 = scmp.eq.s32.totalorder %s27, 0
      %p178 = por %p176, %p177
      %p179 = scmp.ne.s32.totalorder %s171, %s173
      %p180 = scmp.eq.s32.totalorder %s32, 1
      %p181 = por %p179, %p180
      %p182 = scmp.ne.s32.totalorder %s173, %s174
      %p183 = scmp.eq.s32.totalorder %s32, 0
      %p184 = por %p182, %p183
      %p185 = scmp.ne.s32.totalorder %s173, %s174
      %p186 = scmp.eq.s32.totalorder %s33, 1
      %p187 = por %p185, %p186
      %p189 = scmp.ne.s32.totalorder %s174, %s188
      %p190 = scmp.eq.s32.totalorder %s33, 0
      %p191 = por %p189, %p190
      %s193 = sadd.s32 %s192, 1
      %p196 = scmp.eq.s32.totalorder %s27, 1
      %p197 = scmp.ne.s32.totalorder %s192, %s194
      %p198 = scmp.eq.s32.totalorder %s27, 0
      %p199 = por %p197, %p198
      %p200 = scmp.ne.s32.totalorder %s192, %s194
      %p201 = scmp.eq.s32.totalorder %s32, 1
      %p202 = por %p200, %p201
      %p203 = scmp.ne.s32.totalorder %s194, %s195
      %p204 = scmp.eq.s32.totalorder %s32, 0
      %p205 = por %p203, %p204
      %p206 = scmp.ne.s32.totalorder %s194, %s195
      %p207 = scmp.eq.s32.totalorder %s33, 1
      %p208 = por %p206, %p207
      %p210 = scmp.ne.s32.totalorder %s195, %s209
      %p211 = scmp.eq.s32.totalorder %s33, 0
      %p212 = por %p210, %p211
      %s214 = sadd.s32 %s213, 1
      %p217 = scmp.eq.s32.totalorder %s27, 1
      %p218 = scmp.ne.s32.totalorder %s213, %s215
      %p219 = scmp.eq.s32.totalorder %s27, 0
      %p220 = por %p218, %p219
      %p221 = scmp.ne.s32.totalorder %s213, %s215
      %p222 = scmp.eq.s32.totalorder %s32, 1
      %p223 = por %p221, %p222
      %p224 = scmp.ne.s32.totalorder %s215, %s216
      %p225 = scmp.eq.s32.totalorder %s32, 0
      %p226 = por %p224, %p225
      %p227 = scmp.ne.s32.totalorder %s215, %s216
      %p228 = scmp.eq.s32.totalorder %s33, 1
      %p229 = por %p227, %p228
      %p231 = scmp.ne.s32.totalorder %s216, %s230
      %p232 = scmp.eq.s32.totalorder %s33, 0
      %p233 = por %p231, %p232
      %s235 = sadd.s32 %s234, 1
      %p238 = scmp.eq.s32.totalorder %s27, 1
      %p239 = scmp.ne.s32.totalorder %s234, %s236
      %p240 = scmp.eq.s32.totalorder %s27, 0
      %p241 = por %p239, %p240
      %p242 = scmp.ne.s32.totalorder %s234, %s236
      %p243 = scmp.eq.s32.totalorder %s32, 1
      %p244 = por %p242, %p243
      %p245 = scmp.ne.s32.totalorder %s236, %s237
      %p246 = scmp.eq.s32.totalorder %s32, 0
      %p247 = por %p245, %p246
      %p248 = scmp.ne.s32.totalorder %s236, %s237
      %p249 = scmp.eq.s32.totalorder %s33, 1
      %p250 = por %p248, %p249
      %p252 = scmp.ne.s32.totalorder %s237, %s251
      %p253 = scmp.eq.s32.totalorder %s33, 0
      %p254 = por %p252, %p253
      %s256 = sadd.s32 %s255, 1
      %p259 = scmp.eq.s32.totalorder %s27, 1
      %p260 = scmp.ne.s32.totalorder %s255, %s257
      %p261 = scmp.eq.s32.totalorder %s27, 0
      %p262 = por %p260, %p261
      %p263 = scmp.ne.s32.totalorder %s255, %s257
      %p264 = scmp.eq.s32.totalorder %s32, 1
      %p265 = por %p263, %p264
      %p266 = scmp.ne.s32.totalorder %s257, %s258
      %p267 = scmp.eq.s32.totalorder %s32, 0
      %p268 = por %p266, %p267
      %p269 = scmp.ne.s32.totalorder %s257, %s258
      %p270 = scmp.eq.s32.totalorder %s33, 1
      %p271 = por %p269, %p270
      %p273 = scmp.ne.s32.totalorder %s258, %s272
      %p274 = scmp.eq.s32.totalorder %s33, 0
      %p275 = por %p273, %p274
      %s277 = sadd.s32 %s276, 1
      %p280 = scmp.eq.s32.totalorder %s27, 1
      %p281 = scmp.ne.s32.totalorder %s276, %s278
      %p282 = scmp.eq.s32.totalorder %s27, 0
      %p283 = por %p281, %p282
      %p284 = scmp.ne.s32.totalorder %s276, %s278
      %p285 = scmp.eq.s32.totalorder %s32, 1
      %p286 = por %p284, %p285
      %p287 = scmp.ne.s32.totalorder %s278, %s279
      %p288 = scmp.eq.s32.totalorder %s32, 0
      %p289 = por %p287, %p288
      %p290 = scmp.ne.s32.totalorder %s278, %s279
      %p291 = scmp.eq.s32.totalorder %s33, 1
      %p292 = por %p290, %p291
      %p294 = scmp.ne.s32.totalorder %s279, %s293
      %p295 = scmp.eq.s32.totalorder %s33, 0
      %p296 = por %p294, %p295
      %s298 = sadd.s32 %s297, 1
      %p301 = scmp.eq.s32.totalorder %s27, 1
      %p302 = scmp.ne.s32.totalorder %s297, %s299
      %p303 = scmp.eq.s32.totalorder %s27, 0
      %p304 = por %p302, %p303
      %p305 = scmp.ne.s32.totalorder %s297, %s299
      %p306 = scmp.eq.s32.totalorder %s32, 1
      %p307 = por %p305, %p306
      %p308 = scmp.ne.s32.totalorder %s299, %s300
      %p309 = scmp.eq.s32.totalorder %s32, 0
      %p310 = por %p308, %p309
      %p311 = scmp.ne.s32.totalorder %s299, %s300
      %p312 = scmp.eq.s32.totalorder %s33, 1
      %p313 = por %p311, %p312
      %p315 = scmp.ne.s32.totalorder %s300, %s314
      %p316 = scmp.eq.s32.totalorder %s33, 0
      %p317 = por %p315, %p316
      %s319 = sadd.s32 %s318, 1
      %p322 = scmp.eq.s32.totalorder %s27, 1
      %p323 = scmp.ne.s32.totalorder %s318, %s320
      %p324 = scmp.eq.s32.totalorder %s27, 0
      %p325 = por %p323, %p324
      %p326 = scmp.ne.s32.totalorder %s318, %s320
      %p327 = scmp.eq.s32.totalorder %s32, 1
      %p328 = por %p326, %p327
      %p329 = scmp.ne.s32.totalorder %s320, %s321
      %p330 = scmp.eq.s32.totalorder %s32, 0
      %p331 = por %p329, %p330
      %p332 = scmp.ne.s32.totalorder %s320, %s321
      %p333 = scmp.eq.s32.totalorder %s33, 1
      %p334 = por %p332, %p333
      %p336 = scmp.ne.s32.totalorder %s321, %s335
      %p337 = scmp.eq.s32.totalorder %s33, 0
      %p338 = por %p336, %p337
      %s340 = sadd.s32 %s339, 1
      %p343 = scmp.eq.s32.totalorder %s27, 1
      %p344 = scmp.ne.s32.totalorder %s339, %s341
      %p345 = scmp.eq.s32.totalorder %s27, 0
      %p346 = por %p344, %p345
      %p347 = scmp.ne.s32.totalorder %s339, %s341
      %p348 = scmp.eq.s32.totalorder %s32, 1
      %p349 = por %p347, %p348
      %p350 = scmp.ne.s32.totalorder %s341, %s342
      %p351 = scmp.eq.s32.totalorder %s32, 0
      %p352 = por %p350, %p351
      %p353 = scmp.ne.s32.totalorder %s341, %s342
      %p354 = scmp.eq.s32.totalorder %s33, 1
      %p355 = por %p353, %p354
      %p357 = scmp.ne.s32.totalorder %s342, %s356
      %p358 = scmp.eq.s32.totalorder %s33, 0
      %p359 = por %p357, %p358
      %s361 = sadd.s32 %s360, 1
      %p364 = scmp.eq.s32.totalorder %s27, 1
      %p365 = scmp.ne.s32.totalorder %s360, %s362
      %p366 = scmp.eq.s32.totalorder %s27, 0
      %p367 = por %p365, %p366
      %p368 = scmp.ne.s32.totalorder %s360, %s362
      %p369 = scmp.eq.s32.totalorder %s32, 1
      %p370 = por %p368, %p369
      %p371 = scmp.ne.s32.totalorder %s362, %s363
      %p372 = scmp.eq.s32.totalorder %s32, 0
      %p373 = por %p371, %p372
      %p374 = scmp.ne.s32.totalorder %s362, %s363
      %p375 = scmp.eq.s32.totalorder %s33, 1
      %p376 = por %p374, %p375
      %p378 = scmp.ne.s32.totalorder %s363, %s377
      %p379 = scmp.eq.s32.totalorder %s33, 0
      %p380 = por %p378, %p379
      %s382 = sadd.s32 %s381, 1
      %p385 = scmp.eq.s32.totalorder %s27, 1
      %p386 = scmp.ne.s32.totalorder %s381, %s383
      %p387 = scmp.eq.s32.totalorder %s27, 0
      %p388 = por %p386, %p387
      %p389 = scmp.ne.s32.totalorder %s381, %s383
      %p390 = scmp.eq.s32.totalorder %s32, 1
      %p391 = por %p389, %p390
      %p392 = scmp.ne.s32.totalorder %s383, %s384
      %p393 = scmp.eq.s32.totalorder %s32, 0
      %p394 = por %p392, %p393
      %p395 = scmp.ne.s32.totalorder %s383, %s384
      %p396 = scmp.eq.s32.totalorder %s33, 1
      %p397 = por %p395, %p396
      %p399 = scmp.ne.s32.totalorder %s384, %s398
      %p400 = scmp.eq.s32.totalorder %s33, 0
      %p401 = por %p399, %p400
      %s403 = sadd.s32 %s402, 1
      %p406 = scmp.eq.s32.totalorder %s27, 1
      %p407 = scmp.ne.s32.totalorder %s402, %s404
      %p408 = scmp.eq.s32.totalorder %s27, 0
      %p409 = por %p407, %p408
      %p410 = scmp.ne.s32.totalorder %s402, %s404
      %p411 = scmp.eq.s32.totalorder %s32, 1
      %p412 = por %p410, %p411
      %p413 = scmp.ne.s32.totalorder %s404, %s405
      %p414 = scmp.eq.s32.totalorder %s32, 0
      %p415 = por %p413, %p414
      %p416 = scmp.ne.s32.totalorder %s404, %s405
      %p417 = scmp.eq.s32.totalorder %s33, 1
      %p418 = por %p416, %p417
      %p420 = scmp.ne.s32.totalorder %s405, %s419
      %p421 = scmp.eq.s32.totalorder %s33, 0
      %p422 = por %p420, %p421
      %s423 = ssub.s32 %s27, %s34
      %p424 = scmp.eq.s32.totalorder %s423, 0
      %s426 = sadd.s32 %s425, 1
      %s427 = scalar_select %p424, %s425, %s426
      %p430 = pneg %p424
      %p431 = scmp.eq.s32.totalorder %s27, 1
      %p432 = por %p430, %p431
      %p433 = scmp.ne.s32.totalorder %s425, %s428
      %p434 = scmp.eq.s32.totalorder %s27, 0
      %p435 = por %p433, %p434
      %p436 = scmp.ne.s32.totalorder %s425, %s428
      %p437 = scmp.eq.s32.totalorder %s32, 1
      %p438 = por %p436, %p437
      %p439 = scmp.ne.s32.totalorder %s428, %s429
      %p440 = scmp.eq.s32.totalorder %s32, 0
      %p441 = por %p439, %p440
      %p442 = scmp.ne.s32.totalorder %s428, %s429
      %p443 = scmp.eq.s32.totalorder %s33, 1
      %p444 = por %p442, %p443
      %p446 = scmp.ne.s32.totalorder %s429, %s445
      %p447 = scmp.eq.s32.totalorder %s33, 0
      %p448 = por %p446, %p447
      %p449 = scmp.le.s32.totalorder 1, %s27
      %p450 = scmp.lt.s32.totalorder %s27, 3
      %p451 = pnand %p449, %p450
      %p452 = pneg %p451
      // Predicated region
      $region9: #{tpu_custom_call.1} parent=5 // pred_check
        _
      $region10: #{tpu_custom_call.1} parent=5 // pred_check_branch
        %454 = sbr.rel (%p451) target = $region12
      $region11: #{tpu_custom_call.1} parent=5 // pred_region
        %s455 = ssub.s32 %s27, 1
        // Predicated region
        $region13: #{tpu_custom_call.1} parent=11 // pred_check
          %p456 = pneg %p100
        $region14: #{tpu_custom_call.1} parent=11 // pred_check_branch
          %458 = sbr.rel (%p456) target = $region16
        $region15: #{tpu_custom_call.1} parent=11 // pred_region
          _
        $region16: #{tpu_custom_call.1} parent=11 // pred_fallthru
          _
        // Predicated region
        $region17: #{tpu_custom_call.1} parent=11 // pred_check
          %p459 = pneg %p121
        $region18: #{tpu_custom_call.1} parent=11 // pred_check_branch
          %461 = sbr.rel (%p459) target = $region20
        $region19: #{tpu_custom_call.1} parent=11 // pred_region
          _
        $region20: #{tpu_custom_call.1} parent=11 // pred_fallthru
          _
        // Predicated region
        $region21: #{tpu_custom_call.1} parent=11 // pred_check
          %p462 = pneg %p142
        $region22: #{tpu_custom_call.1} parent=11 // pred_check_branch
          %464 = sbr.rel (%p462) target = $region24
        $region23: #{tpu_custom_call.1} parent=11 // pred_region
          _
        $region24: #{tpu_custom_call.1} parent=11 // pred_fallthru
          _
        // Predicated region
        $region25: #{tpu_custom_call.1} parent=11 // pred_check
          %p465 = pneg %p163
        $region26: #{tpu_custom_call.1} parent=11 // pred_check_branch
          %467 = sbr.rel (%p465) target = $region28
        $region27: #{tpu_custom_call.1} parent=11 // pred_region
          _
        $region28: #{tpu_custom_call.1} parent=11 // pred_fallthru
          _
        // Predicated region
        $region29: #{tpu_custom_call.1} parent=11 // pred_check
          %p468 = pneg %p184
        $region30: #{tpu_custom_call.1} parent=11 // pred_check_branch
          %470 = sbr.rel (%p468) target = $region32
        $region31: #{tpu_custom_call.1} parent=11 // pred_region
          _
        $region32: #{tpu_custom_call.1} parent=11 // pred_fallthru
          _
        // Predicated region
        $region33: #{tpu_custom_call.1} parent=11 // pred_check
          %p471 = pneg %p205
        $region34: #{tpu_custom_call.1} parent=11 // pred_check_branch
          %473 = sbr.rel (%p471) target = $region36
        $region35: #{tpu_custom_call.1} parent=11 // pred_region
          _
        $region36: #{tpu_custom_call.1} parent=11 // pred_fallthru
          _
        // Predicated region
        $region37: #{tpu_custom_call.1} parent=11 // pred_check
          %p474 = pneg %p226
        $region38: #{tpu_custom_call.1} parent=11 // pred_check_branch
          %476 = sbr.rel (%p474) target = $region40
        $region39: #{tpu_custom_call.1} parent=11 // pred_region
          _
        $region40: #{tpu_custom_call.1} parent=11 // pred_fallthru
          _
        // Predicated region
        $region41: #{tpu_custom_call.1} parent=11 // pred_check
          %p477 = pneg %p247
        $region42: #{tpu_custom_call.1} parent=11 // pred_check_branch
          %479 = sbr.rel (%p477) target = $region44
        $region43: #{tpu_custom_call.1} parent=11 // pred_region
          _
        $region44: #{tpu_custom_call.1} parent=11 // pred_fallthru
          _
        // Predicated region
        $region45: #{tpu_custom_call.1} parent=11 // pred_check
          %p480 = pneg %p268
        $region46: #{tpu_custom_call.1} parent=11 // pred_check_branch
          %482 = sbr.rel (%p480) target = $region48
        $region47: #{tpu_custom_call.1} parent=11 // pred_region
          _
        $region48: #{tpu_custom_call.1} parent=11 // pred_fallthru
          _
        // Predicated region
        $region49: #{tpu_custom_call.1} parent=11 // pred_check
          %p483 = pneg %p289
        $region50: #{tpu_custom_call.1} parent=11 // pred_check_branch
          %485 = sbr.rel (%p483) target = $region52
        $region51: #{tpu_custom_call.1} parent=11 // pred_region
          _
        $region52: #{tpu_custom_call.1} parent=11 // pred_fallthru
          _
        // Predicated region
        $region53: #{tpu_custom_call.1} parent=11 // pred_check
          %p486 = pneg %p310
        $region54: #{tpu_custom_call.1} parent=11 // pred_check_branch
          %488 = sbr.rel (%p486) target = $region56
        $region55: #{tpu_custom_call.1} parent=11 // pred_region
          _
        $region56: #{tpu_custom_call.1} parent=11 // pred_fallthru
          _
        // Predicated region
        $region57: #{tpu_custom_call.1} parent=11 // pred_check
          %p489 = pneg %p331
        $region58: #{tpu_custom_call.1} parent=11 // pred_check_branch
          %491 = sbr.rel (%p489) target = $region60
        $region59: #{tpu_custom_call.1} parent=11 // pred_region
          _
        $region60: #{tpu_custom_call.1} parent=11 // pred_fallthru
          _
        // Predicated region
        $region61: #{tpu_custom_call.1} parent=11 // pred_check
          %p492 = pneg %p352
        $region62: #{tpu_custom_call.1} parent=11 // pred_check_branch
          %494 = sbr.rel (%p492) target = $region64
        $region63: #{tpu_custom_call.1} parent=11 // pred_region
          _
        $region64: #{tpu_custom_call.1} parent=11 // pred_fallthru
          _
        // Predicated region
        $region65: #{tpu_custom_call.1} parent=11 // pred_check
          %p495 = pneg %p373
        $region66: #{tpu_custom_call.1} parent=11 // pred_check_branch
          %497 = sbr.rel (%p495) target = $region68
        $region67: #{tpu_custom_call.1} parent=11 // pred_region
          _
        $region68: #{tpu_custom_call.1} parent=11 // pred_fallthru
          _
        // Predicated region
        $region69: #{tpu_custom_call.1} parent=11 // pred_check
          %p498 = pneg %p394
        $region70: #{tpu_custom_call.1} parent=11 // pred_check_branch
          %500 = sbr.rel (%p498) target = $region72
        $region71: #{tpu_custom_call.1} parent=11 // pred_region
          _
        $region72: #{tpu_custom_call.1} parent=11 // pred_fallthru
          _
        // Predicated region
        $region73: #{tpu_custom_call.1} parent=11 // pred_check
          %p501 = pneg %p415
        $region74: #{tpu_custom_call.1} parent=11 // pred_check_branch
          %503 = sbr.rel (%p501) target = $region76
        $region75: #{tpu_custom_call.1} parent=11 // pred_region
          _
        $region76: #{tpu_custom_call.1} parent=11 // pred_fallthru
          _
      $region12: #{tpu_custom_call.1} parent=5 // pred_fallthru
        _
      %p504 = scmp.lt.s32.totalorder %s27, 2
      // Predicated region
      $region77: #{tpu_custom_call.1} parent=5 // pred_check
        %p505 = pneg %p504
      $region78: #{tpu_custom_call.1} parent=5 // pred_check_branch
        %507 = sbr.rel (%p505) target = $region80
      $region79: #{tpu_custom_call.1} parent=5 // pred_region
        // Predicated region
        $region81: #{tpu_custom_call.1} parent=79 // pred_check
          %p508 = pneg %p47
        $region82: #{tpu_custom_call.1} parent=79 // pred_check_branch
          %510 = sbr.rel (%p508) target = $region84
        $region83: #{tpu_custom_call.1} parent=79 // pred_region
          %p511 = scmp.lt.s32.totalorder %s27, 1
          %s512 = scalar_select %p511, %s27, 1
          %s513 = smul.addr %s512, 8
          %s514 = scalar_lea.vmem %s0, %s513
        $region84: #{tpu_custom_call.1} parent=79 // pred_fallthru
          _
        // Predicated region
        $region85: #{tpu_custom_call.1} parent=79 // pred_check
          %p515 = pneg %p73
        $region86: #{tpu_custom_call.1} parent=79 // pred_check_branch
          %517 = sbr.rel (%p515) target = $region88
        $region87: #{tpu_custom_call.1} parent=79 // pred_region
          %p518 = scmp.lt.s32.totalorder %s27, 1
          %s519 = scalar_select %p518, %s27, 1
          %s520 = scalar_lea.vmem %s1, %s519
        $region88: #{tpu_custom_call.1} parent=79 // pred_fallthru
          _
      $region80: #{tpu_custom_call.1} parent=5 // pred_fallthru
        _
      %p521 = scmp.le.s32.totalorder 1, %s27
      %p522 = scmp.lt.s32.totalorder %s27, 3
      %p523 = pnand %p521, %p522
      %p524 = pneg %p523
      // Predicated region
      $region89: #{tpu_custom_call.1} parent=5 // pred_check
        _
      $region90: #{tpu_custom_call.1} parent=5 // pred_check_branch
        %526 = sbr.rel (%p523) target = $region92
      $region91: #{tpu_custom_call.1} parent=5 // pred_region
        %s527 = ssub.s32 %s27, 1
        %p528 = scmp.lt.s32.totalorder %s32, 1
        %s529 = scalar_select %p528, %s32, 1
        %s530 = smul.addr %s529, 8
        %s531 = scalar_lea.vmem %s0, %s530
        %p532 = pneg %p53
        %p533 = pneg %p50
        %p534 = scmp.lt.s32.totalorder %s32, 1
        %s535 = scalar_select %p534, %s32, 1
        %s536 = scalar_lea.vmem %s1, %s535
        %p537 = pneg %p79
        %p538 = pneg %p76
        %p539 = pneg %p100
        %p540 = pneg %p97
        %p541 = pneg %p121
        %p542 = pneg %p118
        %p543 = pneg %p142
        %p544 = pneg %p139
        %p545 = pneg %p163
        %p546 = pneg %p160
        %p547 = pneg %p184
        %p548 = pneg %p181
        %p549 = pneg %p205
        %p550 = pneg %p202
        %p551 = pneg %p226
        %p552 = pneg %p223
        %p553 = pneg %p247
        %p554 = pneg %p244
        %p555 = pneg %p268
        %p556 = pneg %p265
        %p557 = pneg %p289
        %p558 = pneg %p286
        %p559 = pneg %p310
        %p560 = pneg %p307
        %p561 = pneg %p331
        %p562 = pneg %p328
        %p563 = pneg %p352
        %p564 = pneg %p349
        %p565 = pneg %p373
        %p566 = pneg %p370
        %p567 = pneg %p394
        %p568 = pneg %p391
        %p569 = pneg %p415
        %p570 = pneg %p412
        %p571 = pneg %p441
        %p572 = pneg %p438
        %s573 = sand.u32 %s428, 1
        %s574 = scalar_lea.sflag [#allocation6], %s573
        %s575 = sand.u32 %s428, 1
        %s576 = smul.addr %s575, 8
        %s577 = scalar_lea.vmem [#allocation5], %s576
        %p578 = scmp.lt.s32.totalorder %s32, 1
        %s579 = scalar_select %p578, %s32, 1
        %s580 = smul.addr %s579, 8
        %s581 = scalar_lea.vmem %s0, %s580
        %p582 = scmp.lt.s32.totalorder %s32, 1
        %s583 = scalar_select %p582, %s32, 1
        %s584 = scalar_lea.vmem %s1, %s583
        %v586 = vld [vmem:[%s581] sm:$0xff]
        %v587 = vld [vmem:[%s584] sm:$0x1]
        %v588 = vld [vmem:[%s2] sm:$0x1]
        %v589 = vld [vmem:[%s3] sm:$0x1]
        %vm590 = vcmask 261120
        %v591 = vsel %vm590, %v586, 0.0
        %592 = vadd.xlane.f32.xlu0 %v591
        %v593 = vpop.xlane.xlu0 %592
        %v594 = vrcp.pop 32.0
        %v595 = vmul.f32 %v593, %v594
        %v596 = vsub.f32 %v586, %v595
        %v597 = vmul.f32 %v596, %v596
        %v598 = vsel %vm590, %v597, 0.0
        %599 = vadd.xlane.f32.xlu0 %v598
        %v600 = vpop.xlane.xlu0 %599
        %v601 = vmul.f32 %v600, %v594
        %v602 = vadd.f32 %v601, 1e-12
        %v603 = vrsqrt.pop %v602
        %v604 = vmul.f32 %v596, %v603
        %v606 = vlaneseq
        %v607 = vshrl.u32 %v606, 7
        %v608 = vsub.s32 0, %v607
        %v609 = vrot.slane %v588, %v608
        %v611 = vmul.f32 %v604, %v609
        %v613 = vlaneseq
        %v614 = vshrl.u32 %v613, 7
        %v615 = vsub.s32 0, %v614
        %v616 = vrot.slane %v589, %v615
        %v618 = vadd.f32 %v611, %v616
        %v619 = vpack.c.bf16 %v618, %v618
        %v620 = vld [vmem:[%s4] sm:$0xf]
        %v621 = vld [vmem:[%s4 + $0x4] sm:$0xf]
        %v622 = vld [vmem:[%s4 + $0x8] sm:$0xf]
        %v623 = vld [vmem:[%s4 + $0xc] sm:$0xf]
        %v624 = vld [vmem:[%s5] sm:$0x1]
        %v626 = vlaneseq
        %v627 = vshrl.u32 %v626, 7
        %v628 = vsub.s32 0, %v627
        %v629 = vrot.slane %v624, %v628
        %v635 = vunpack.c.l.b16 %v620
        %v636 = vunpack.c.l.b16 %v621
        %v637 = vunpack.c.l.b16 %v622
        %v638 = vunpack.c.l.b16 %v623
        %v639 = vpack.c.b16 %v636, %v635
        %v640 = vpack.c.b16 %v638, %v637
        %v644 = vsel %vm590, %v619, 0
        %646 = vmatprep.subr.bf16.mxu0 0
        %647 = vmatpush1.bf16.msra.mxu0 %v639
        %648 = vmatprep.subr.bf16.mxu0 0
        %649 = vmatpush1.bf16.msra.mxu0 %v640
        %650 = vmatprep.subr.bf16.mxu0 0
        %651 = vmatpush1.bf16.msra.mxu0 0
        %652 = vmatprep.subr.bf16.mxu0 0
        %653 = vmatpush1.bf16.msra.mxu0 0
        %654 = vmatprep.subr.bf16.mxu0 0
        %655 = vmatpush1.bf16.msra.mxu0 0
        %656 = vmatprep.subr.bf16.mxu0 0
        %657 = vmatpush1.bf16.msra.mxu0 0
        %658 = vmatprep.subr.bf16.mxu0 0
        %659 = vmatpush1.bf16.msra.mxu0 0
        %660 = vmatprep.subr.bf16.mxu0 0
        %661 = vmatpush1.bf16.msra.mxu0 0
        %662 = vmatprep.subr.bf16.mxu0 0
        %663 = vmatpush1.bf16.msra.mxu0 0
        %664 = vmatprep.subr.bf16.mxu0 0
        %665 = vmatpush1.bf16.msra.mxu0 0
        %666 = vmatprep.subr.bf16.mxu0 0
        %667 = vmatpush1.bf16.msra.mxu0 0
        %668 = vmatprep.subr.bf16.mxu0 0
        %669 = vmatpush1.bf16.msra.mxu0 0
        %670 = vmatprep.subr.bf16.mxu0 0
        %671 = vmatpush1.bf16.msra.mxu0 0
        %672 = vmatprep.subr.bf16.mxu0 0
        %673 = vmatpush1.bf16.msra.mxu0 0
        %674 = vmatprep.subr.bf16.mxu0 0
        %675 = vmatpush1.bf16.msra.mxu0 0
        %676 = vmatprep.subr.bf16.mxu0 0
        %677 = vmatpush1.bf16.msra.mxu0 0
        %678 = vmatprep.mubr.bf16.mxu0 0
        %679 = vmatmul.mubr.bf16.gmra.mrb[0].mxu0 %v644
        %v680 = vpop.f32.mrb[0].mxu0
        %v681 = vadd.f32 %v629, %v680
        %v682 = vpop.f32.mrb[0].mxu0
        %v683 = vpop.f32.mrb[0].mxu0
        %v684 = vpop.f32.mrb[0].mxu0
        %685 = vdwg.mxu0
        %v686 = vld [vmem:[%s6] sm:$0xf]
        %v687 = vld [vmem:[%s6 + $0x4] sm:$0xf]
        %v688 = vld [vmem:[%s6 + $0x8] sm:$0xf]
        %v689 = vld [vmem:[%s6 + $0xc] sm:$0xf]
        %v690 = vld [vmem:[%s7] sm:$0x1]
        %v692 = vlaneseq
        %v693 = vshrl.u32 %v692, 7
        %v694 = vsub.s32 0, %v693
        %v695 = vrot.slane %v690, %v694
        %v701 = vunpack.c.l.b16 %v686
        %v702 = vunpack.c.l.b16 %v687
        %v703 = vunpack.c.l.b16 %v688
        %v704 = vunpack.c.l.b16 %v689
        %v705 = vpack.c.b16 %v702, %v701
        %v706 = vpack.c.b16 %v704, %v703
        %709 = vmatprep.subr.bf16.mxu0 0
        %710 = vmatpush1.bf16.msra.mxu0 %v705
        %711 = vmatprep.subr.bf16.mxu0 0
        %712 = vmatpush1.bf16.msra.mxu0 %v706
        %713 = vmatprep.subr.bf16.mxu0 0
        %714 = vmatpush1.bf16.msra.mxu0 0
        %715 = vmatprep.subr.bf16.mxu0 0
        %716 = vmatpush1.bf16.msra.mxu0 0
        %717 = vmatprep.subr.bf16.mxu0 0
        %718 = vmatpush1.bf16.msra.mxu0 0
        %719 = vmatprep.subr.bf16.mxu0 0
        %720 = vmatpush1.bf16.msra.mxu0 0
        %721 = vmatprep.subr.bf16.mxu0 0
        %722 = vmatpush1.bf16.msra.mxu0 0
        %723 = vmatprep.subr.bf16.mxu0 0
        %724 = vmatpush1.bf16.msra.mxu0 0
        %725 = vmatprep.subr.bf16.mxu0 0
        %726 = vmatpush1.bf16.msra.mxu0 0
        %727 = vmatprep.subr.bf16.mxu0 0
        %728 = vmatpush1.bf16.msra.mxu0 0
        %729 = vmatprep.subr.bf16.mxu0 0
        %730 = vmatpush1.bf16.msra.mxu0 0
        %731 = vmatprep.subr.bf16.mxu0 0
        %732 = vmatpush1.bf16.msra.mxu0 0
        %733 = vmatprep.subr.bf16.mxu0 0
        %734 = vmatpush1.bf16.msra.mxu0 0
        %735 = vmatprep.subr.bf16.mxu0 0
        %736 = vmatpush1.bf16.msra.mxu0 0
        %737 = vmatprep.subr.bf16.mxu0 0
        %738 = vmatpush1.bf16.msra.mxu0 0
        %739 = vmatprep.subr.bf16.mxu0 0
        %740 = vmatpush1.bf16.msra.mxu0 0
        %741 = vmatprep.mubr.bf16.mxu0 0
        %742 = vmatmul.mubr.bf16.gmra.mrb[0].mxu0 %v644
        %v743 = vpop.f32.mrb[0].mxu0
        %v744 = vadd.f32 %v695, %v743
        %v745 = vpop.f32.mrb[0].mxu0
        %v746 = vpop.f32.mrb[0].mxu0
        %v747 = vpop.f32.mrb[0].mxu0
        %748 = vdwg.mxu0
        %v749 = vld [vmem:[%s8] sm:$0xf]
        %v750 = vld [vmem:[%s8 + $0x4] sm:$0xf]
        %v751 = vld [vmem:[%s8 + $0x8] sm:$0xf]
        %v752 = vld [vmem:[%s8 + $0xc] sm:$0xf]
        %v753 = vld [vmem:[%s9] sm:$0x1]
        %v755 = vlaneseq
        %v756 = vshrl.u32 %v755, 7
        %v757 = vsub.s32 0, %v756
        %v758 = vrot.slane %v753, %v757
        %v764 = vunpack.c.l.b16 %v749
        %v765 = vunpack.c.l.b16 %v750
        %v766 = vunpack.c.l.b16 %v751
        %v767 = vunpack.c.l.b16 %v752
        %v768 = vpack.c.b16 %v765, %v764
        %v769 = vpack.c.b16 %v767, %v766
        %772 = vmatprep.subr.bf16.mxu0 0
        %773 = vmatpush1.bf16.msra.mxu0 %v768
        %774 = vmatprep.subr.bf16.mxu0 0
        %775 = vmatpush1.bf16.msra.mxu0 %v769
        %776 = vmatprep.subr.bf16.mxu0 0
        %777 = vmatpush1.bf16.msra.mxu0 0
        %778 = vmatprep.subr.bf16.mxu0 0
        %779 = vmatpush1.bf16.msra.mxu0 0
        %780 = vmatprep.subr.bf16.mxu0 0
        %781 = vmatpush1.bf16.msra.mxu0 0
        %782 = vmatprep.subr.bf16.mxu0 0
        %783 = vmatpush1.bf16.msra.mxu0 0
        %784 = vmatprep.subr.bf16.mxu0 0
        %785 = vmatpush1.bf16.msra.mxu0 0
        %786 = vmatprep.subr.bf16.mxu0 0
        %787 = vmatpush1.bf16.msra.mxu0 0
        %788 = vmatprep.subr.bf16.mxu0 0
        %789 = vmatpush1.bf16.msra.mxu0 0
        %790 = vmatprep.subr.bf16.mxu0 0
        %791 = vmatpush1.bf16.msra.mxu0 0
        %792 = vmatprep.subr.bf16.mxu0 0
        %793 = vmatpush1.bf16.msra.mxu0 0
        %794 = vmatprep.subr.bf16.mxu0 0
        %795 = vmatpush1.bf16.msra.mxu0 0
        %796 = vmatprep.subr.bf16.mxu0 0
        %797 = vmatpush1.bf16.msra.mxu0 0
        %798 = vmatprep.subr.bf16.mxu0 0
        %799 = vmatpush1.bf16.msra.mxu0 0
        %800 = vmatprep.subr.bf16.mxu0 0
        %801 = vmatpush1.bf16.msra.mxu0 0
        %802 = vmatprep.subr.bf16.mxu0 0
        %803 = vmatpush1.bf16.msra.mxu0 0
        %804 = vmatprep.mubr.bf16.mxu0 0
        %805 = vmatmul.mubr.bf16.gmra.mrb[0].mxu0 %v644
        %v806 = vpop.f32.mrb[0].mxu0
        %v807 = vadd.f32 %v758, %v806
        %v808 = vpop.f32.mrb[0].mxu0
        %v809 = vpop.f32.mrb[0].mxu0
        %v810 = vpop.f32.mrb[0].mxu0
        %811 = vdwg.mxu0
        %v812 = vmul.f32 %v681, 0.35355338
        %v813 = vpack.c.bf16 %v812, %v812
        %vm814 = vcmask 60416
        %815 = vst.msk [vmem:[#allocation2] sm:$0xf] %vm814, %v813
        %v816 = vpack.c.bf16 %v744, %v744
        %817 = vst.msk [vmem:[#allocation3] sm:$0xf] %vm814, %v816
        %v818 = vpack.c.bf16 %v807, %v807
        %819 = vst.msk [vmem:[#allocation4] sm:$0xf] %vm814, %v818
        %s820 = scalar_lea.vmem %s4, 16
        %v821 = vld [vmem:[%s820] sm:$0xf]
        %v822 = vld [vmem:[%s820 + $0x4] sm:$0xf]
        %v823 = vld [vmem:[%s820 + $0x8] sm:$0xf]
        %v824 = vld [vmem:[%s820 + $0xc] sm:$0xf]
        %s825 = scalar_lea.vmem %s5, 1
        %v826 = vld [vmem:[%s825] sm:$0x1]
        %v828 = vlaneseq
        %v829 = vshrl.u32 %v828, 7
        %v830 = vsub.s32 0, %v829
        %v831 = vrot.slane %v826, %v830
        %v837 = vunpack.c.l.b16 %v821
        %v838 = vunpack.c.l.b16 %v822
        %v839 = vunpack.c.l.b16 %v823
        %v840 = vunpack.c.l.b16 %v824
        %v841 = vpack.c.b16 %v838, %v837
        %v842 = vpack.c.b16 %v840, %v839
        %845 = vmatprep.subr.bf16.mxu0 0
        %846 = vmatpush1.bf16.msra.mxu0 %v841
        %847 = vmatprep.subr.bf16.mxu0 0
        %848 = vmatpush1.bf16.msra.mxu0 %v842
        %849 = vmatprep.subr.bf16.mxu0 0
        %850 = vmatpush1.bf16.msra.mxu0 0
        %851 = vmatprep.subr.bf16.mxu0 0
        %852 = vmatpush1.bf16.msra.mxu0 0
        %853 = vmatprep.subr.bf16.mxu0 0
        %854 = vmatpush1.bf16.msra.mxu0 0
        %855 = vmatprep.subr.bf16.mxu0 0
        %856 = vmatpush1.bf16.msra.mxu0 0
        %857 = vmatprep.subr.bf16.mxu0 0
        %858 = vmatpush1.bf16.msra.mxu0 0
        %859 = vmatprep.subr.bf16.mxu0 0
        %860 = vmatpush1.bf16.msra.mxu0 0
        %861 = vmatprep.subr.bf16.mxu0 0
        %862 = vmatpush1.bf16.msra.mxu0 0
        %863 = vmatprep.subr.bf16.mxu0 0
        %864 = vmatpush1.bf16.msra.mxu0 0
        %865 = vmatprep.subr.bf16.mxu0 0
        %866 = vmatpush1.bf16.msra.mxu0 0
        %867 = vmatprep.subr.bf16.mxu0 0
        %868 = vmatpush1.bf16.msra.mxu0 0
        %869 = vmatprep.subr.bf16.mxu0 0
        %870 = vmatpush1.bf16.msra.mxu0 0
        %871 = vmatprep.subr.bf16.mxu0 0
        %872 = vmatpush1.bf16.msra.mxu0 0
        %873 = vmatprep.subr.bf16.mxu0 0
        %874 = vmatpush1.bf16.msra.mxu0 0
        %875 = vmatprep.subr.bf16.mxu0 0
        %876 = vmatpush1.bf16.msra.mxu0 0
        %877 = vmatprep.mubr.bf16.mxu0 0
        %878 = vmatmul.mubr.bf16.gmra.mrb[0].mxu0 %v644
        %v879 = vpop.f32.mrb[0].mxu0
        %v880 = vadd.f32 %v831, %v879
        %v881 = vpop.f32.mrb[0].mxu0
        %v882 = vpop.f32.mrb[0].mxu0
        %v883 = vpop.f32.mrb[0].mxu0
        %884 = vdwg.mxu0
        %s885 = scalar_lea.vmem %s6, 16
        %v886 = vld [vmem:[%s885] sm:$0xf]
        %v887 = vld [vmem:[%s885 + $0x4] sm:$0xf]
        %v888 = vld [vmem:[%s885 + $0x8] sm:$0xf]
        %v889 = vld [vmem:[%s885 + $0xc] sm:$0xf]
        %s890 = scalar_lea.vmem %s7, 1
        %v891 = vld [vmem:[%s890] sm:$0x1]
        %v893 = vlaneseq
        %v894 = vshrl.u32 %v893, 7
        %v895 = vsub.s32 0, %v894
        %v896 = vrot.slane %v891, %v895
        %v902 = vunpack.c.l.b16 %v886
        %v903 = vunpack.c.l.b16 %v887
        %v904 = vunpack.c.l.b16 %v888
        %v905 = vunpack.c.l.b16 %v889
        %v906 = vpack.c.b16 %v903, %v902
        %v907 = vpack.c.b16 %v905, %v904
        %910 = vmatprep.subr.bf16.mxu0 0
        %911 = vmatpush1.bf16.msra.mxu0 %v906
        %912 = vmatprep.subr.bf16.mxu0 0
        %913 = vmatpush1.bf16.msra.mxu0 %v907
        %914 = vmatprep.subr.bf16.mxu0 0
        %915 = vmatpush1.bf16.msra.mxu0 0
        %916 = vmatprep.subr.bf16.mxu0 0
        %917 = vmatpush1.bf16.msra.mxu0 0
        %918 = vmatprep.subr.bf16.mxu0 0
        %919 = vmatpush1.bf16.msra.mxu0 0
        %920 = vmatprep.subr.bf16.mxu0 0
        %921 = vmatpush1.bf16.msra.mxu0 0
        %922 = vmatprep.subr.bf16.mxu0 0
        %923 = vmatpush1.bf16.msra.mxu0 0
        %924 = vmatprep.subr.bf16.mxu0 0
        %925 = vmatpush1.bf16.msra.mxu0 0
        %926 = vmatprep.subr.bf16.mxu0 0
        %927 = vmatpush1.bf16.msra.mxu0 0
        %928 = vmatprep.subr.bf16.mxu0 0
        %929 = vmatpush1.bf16.msra.mxu0 0
        %930 = vmatprep.subr.bf16.mxu0 0
        %931 = vmatpush1.bf16.msra.mxu0 0
        %932 = vmatprep.subr.bf16.mxu0 0
        %933 = vmatpush1.bf16.msra.mxu0 0
        %934 = vmatprep.subr.bf16.mxu0 0
        %935 = vmatpush1.bf16.msra.mxu0 0
        %936 = vmatprep.subr.bf16.mxu0 0
        %937 = vmatpush1.bf16.msra.mxu0 0
        %938 = vmatprep.subr.bf16.mxu0 0
        %939 = vmatpush1.bf16.msra.mxu0 0
        %940 = vmatprep.subr.bf16.mxu0 0
        %941 = vmatpush1.bf16.msra.mxu0 0
        %942 = vmatprep.mubr.bf16.mxu0 0
        %943 = vmatmul.mubr.bf16.gmra.mrb[0].mxu0 %v644
        %v944 = vpop.f32.mrb[0].mxu0
        %v945 = vadd.f32 %v896, %v944
        %v946 = vpop.f32.mrb[0].mxu0
        %v947 = vpop.f32.mrb[0].mxu0
        %v948 = vpop.f32.mrb[0].mxu0
        %949 = vdwg.mxu0
        %s950 = scalar_lea.vmem %s8, 16
        %v951 = vld [vmem:[%s950] sm:$0xf]
        %v952 = vld [vmem:[%s950 + $0x4] sm:$0xf]
        %v953 = vld [vmem:[%s950 + $0x8] sm:$0xf]
        %v954 = vld [vmem:[%s950 + $0xc] sm:$0xf]
        %s955 = scalar_lea.vmem %s9, 1
        %v956 = vld [vmem:[%s955] sm:$0x1]
        %v958 = vlaneseq
        %v959 = vshrl.u32 %v958, 7
        %v960 = vsub.s32 0, %v959
        %v961 = vrot.slane %v956, %v960
        %v967 = vunpack.c.l.b16 %v951
        %v968 = vunpack.c.l.b16 %v952
        %v969 = vunpack.c.l.b16 %v953
        %v970 = vunpack.c.l.b16 %v954
        %v971 = vpack.c.b16 %v968, %v967
        %v972 = vpack.c.b16 %v970, %v969
        %975 = vmatprep.subr.bf16.mxu0 0
        %976 = vmatpush1.bf16.msra.mxu0 %v971
        %977 = vmatprep.subr.bf16.mxu0 0
        %978 = vmatpush1.bf16.msra.mxu0 %v972
        %979 = vmatprep.subr.bf16.mxu0 0
        %980 = vmatpush1.bf16.msra.mxu0 0
        %981 = vmatprep.subr.bf16.mxu0 0
        %982 = vmatpush1.bf16.msra.mxu0 0
        %983 = vmatprep.subr.bf16.mxu0 0
        %984 = vmatpush1.bf16.msra.mxu0 0
        %985 = vmatprep.subr.bf16.mxu0 0
        %986 = vmatpush1.bf16.msra.mxu0 0
        %987 = vmatprep.subr.bf16.mxu0 0
        %988 = vmatpush1.bf16.msra.mxu0 0
        %989 = vmatprep.subr.bf16.mxu0 0
        %990 = vmatpush1.bf16.msra.mxu0 0
        %991 = vmatprep.subr.bf16.mxu0 0
        %992 = vmatpush1.bf16.msra.mxu0 0
        %993 = vmatprep.subr.bf16.mxu0 0
        %994 = vmatpush1.bf16.msra.mxu0 0
        %995 = vmatprep.subr.bf16.mxu0 0
        %996 = vmatpush1.bf16.msra.mxu0 0
        %997 = vmatprep.subr.bf16.mxu0 0
        %998 = vmatpush1.bf16.msra.mxu0 0
        %999 = vmatprep.subr.bf16.mxu0 0
        %1000 = vmatpush1.bf16.msra.mxu0 0
        %1001 = vmatprep.subr.bf16.mxu0 0
        %1002 = vmatpush1.bf16.msra.mxu0 0
        %1003 = vmatprep.subr.bf16.mxu0 0
        %1004 = vmatpush1.bf16.msra.mxu0 0
        %1005 = vmatprep.subr.bf16.mxu0 0
        %1006 = vmatpush1.bf16.msra.mxu0 0
        %1007 = vmatprep.mubr.bf16.mxu0 0
        %1008 = vmatmul.mubr.bf16.gmra.mrb[0].mxu0 %v644
        %v1009 = vpop.f32.mrb[0].mxu0
        %v1010 = vadd.f32 %v961, %v1009
        %v1011 = vpop.f32.mrb[0].mxu0
        %v1012 = vpop.f32.mrb[0].mxu0
        %v1013 = vpop.f32.mrb[0].mxu0
        %1014 = vdwg.mxu0
        %v1015 = vmul.f32 %v880, 0.35355338
        %v1016 = vpack.c.bf16 %v1015, %v1015
        %s1017 = scalar_lea.vmem [#allocation2], 4
        %1018 = vst.msk [vmem:[%s1017] sm:$0xf] %vm814, %v1016
        %v1019 = vpack.c.bf16 %v945, %v945
        %s1020 = scalar_lea.vmem [#allocation3], 4
        %1021 = vst.msk [vmem:[%s1020] sm:$0xf] %vm814, %v1019
        %v1022 = vpack.c.bf16 %v1010, %v1010
        %s1023 = scalar_lea.vmem [#allocation4], 4
        %1024 = vst.msk [vmem:[%s1023] sm:$0xf] %vm814, %v1022
        %s1025 = scalar_lea.vmem %s4, 32
        %v1026 = vld [vmem:[%s1025] sm:$0xf]
        %v1027 = vld [vmem:[%s1025 + $0x4] sm:$0xf]
        %v1028 = vld [vmem:[%s1025 + $0x8] sm:$0xf]
        %v1029 = vld [vmem:[%s1025 + $0xc] sm:$0xf]
        %s1030 = scalar_lea.vmem %s5, 2
        %v1031 = vld [vmem:[%s1030] sm:$0x1]
        %v1033 = vlaneseq
        %v1034 = vshrl.u32 %v1033, 7
        %v1035 = vsub.s32 0, %v1034
        %v1036 = vrot.slane %v1031, %v1035
        %v1042 = vunpack.c.l.b16 %v1026
        %v1043 = vunpack.c.l.b16 %v1027
        %v1044 = vunpack.c.l.b16 %v1028
        %v1045 = vunpack.c.l.b16 %v1029
        %v1046 = vpack.c.b16 %v1043, %v1042
        %v1047 = vpack.c.b16 %v1045, %v1044
        %1050 = vmatprep.subr.bf16.mxu0 0
        %1051 = vmatpush1.bf16.msra.mxu0 %v1046
        %1052 = vmatprep.subr.bf16.mxu0 0
        %1053 = vmatpush1.bf16.msra.mxu0 %v1047
        %1054 = vmatprep.subr.bf16.mxu0 0
        %1055 = vmatpush1.bf16.msra.mxu0 0
        %1056 = vmatprep.subr.bf16.mxu0 0
        %1057 = vmatpush1.bf16.msra.mxu0 0
        %1058 = vmatprep.subr.bf16.mxu0 0
        %1059 = vmatpush1.bf16.msra.mxu0 0
        %1060 = vmatprep.subr.bf16.mxu0 0
        %1061 = vmatpush1.bf16.msra.mxu0 0
        %1062 = vmatprep.subr.bf16.mxu0 0
        %1063 = vmatpush1.bf16.msra.mxu0 0
        %1064 = vmatprep.subr.bf16.mxu0 0
        %1065 = vmatpush1.bf16.msra.mxu0 0
        %1066 = vmatprep.subr.bf16.mxu0 0
        %1067 = vmatpush1.bf16.msra.mxu0 0
        %1068 = vmatprep.subr.bf16.mxu0 0
        %1069 = vmatpush1.bf16.msra.mxu0 0
        %1070 = vmatprep.subr.bf16.mxu0 0
        %1071 = vmatpush1.bf16.msra.mxu0 0
        %1072 = vmatprep.subr.bf16.mxu0 0
        %1073 = vmatpush1.bf16.msra.mxu0 0
        %1074 = vmatprep.subr.bf16.mxu0 0
        %1075 = vmatpush1.bf16.msra.mxu0 0
        %1076 = vmatprep.subr.bf16.mxu0 0
        %1077 = vmatpush1.bf16.msra.mxu0 0
        %1078 = vmatprep.subr.bf16.mxu0 0
        %1079 = vmatpush1.bf16.msra.mxu0 0
        %1080 = vmatprep.subr.bf16.mxu0 0
        %1081 = vmatpush1.bf16.msra.mxu0 0
        %1082 = vmatprep.mubr.bf16.mxu0 0
        %1083 = vmatmul.mubr.bf16.gmra.mrb[0].mxu0 %v644
        %v1084 = vpop.f32.mrb[0].mxu0
        %v1085 = vadd.f32 %v1036, %v1084
        %v1086 = vpop.f32.mrb[0].mxu0
        %v1087 = vpop.f32.mrb[0].mxu0
        %v1088 = vpop.f32.mrb[0].mxu0
        %1089 = vdwg.mxu0
        %s1090 = scalar_lea.vmem %s6, 32
        %v1091 = vld [vmem:[%s1090] sm:$0xf]
        %v1092 = vld [vmem:[%s1090 + $0x4] sm:$0xf]
        %v1093 = vld [vmem:[%s1090 + $0x8] sm:$0xf]
        %v1094 = vld [vmem:[%s1090 + $0xc] sm:$0xf]
        %s1095 = scalar_lea.vmem %s7, 2
        %v1096 = vld [vmem:[%s1095] sm:$0x1]
        %v1098 = vlaneseq
        %v1099 = vshrl.u32 %v1098, 7
        %v1100 = vsub.s32 0, %v1099
        %v1101 = vrot.slane %v1096, %v1100
        %v1107 = vunpack.c.l.b16 %v1091
        %v1108 = vunpack.c.l.b16 %v1092
        %v1109 = vunpack.c.l.b16 %v1093
        %v1110 = vunpack.c.l.b16 %v1094
        %v1111 = vpack.c.b16 %v1108, %v1107
        %v1112 = vpack.c.b16 %v1110, %v1109
        %1115 = vmatprep.subr.bf16.mxu0 0
        %1116 = vmatpush1.bf16.msra.mxu0 %v1111
        %1117 = vmatprep.subr.bf16.mxu0 0
        %1118 = vmatpush1.bf16.msra.mxu0 %v1112
        %1119 = vmatprep.subr.bf16.mxu0 0
        %1120 = vmatpush1.bf16.msra.mxu0 0
        %1121 = vmatprep.subr.bf16.mxu0 0
        %1122 = vmatpush1.bf16.msra.mxu0 0
        %1123 = vmatprep.subr.bf16.mxu0 0
        %1124 = vmatpush1.bf16.msra.mxu0 0
        %1125 = vmatprep.subr.bf16.mxu0 0
        %1126 = vmatpush1.bf16.msra.mxu0 0
        %1127 = vmatprep.subr.bf16.mxu0 0
        %1128 = vmatpush1.bf16.msra.mxu0 0
        %1129 = vmatprep.subr.bf16.mxu0 0
        %1130 = vmatpush1.bf16.msra.mxu0 0
        %1131 = vmatprep.subr.bf16.mxu0 0
        %1132 = vmatpush1.bf16.msra.mxu0 0
        %1133 = vmatprep.subr.bf16.mxu0 0
        %1134 = vmatpush1.bf16.msra.mxu0 0
        %1135 = vmatprep.subr.bf16.mxu0 0
        %1136 = vmatpush1.bf16.msra.mxu0 0
        %1137 = vmatprep.subr.bf16.mxu0 0
        %1138 = vmatpush1.bf16.msra.mxu0 0
        %1139 = vmatprep.subr.bf16.mxu0 0
        %1140 = vmatpush1.bf16.msra.mxu0 0
        %1141 = vmatprep.subr.bf16.mxu0 0
        %1142 = vmatpush1.bf16.msra.mxu0 0
        %1143 = vmatprep.subr.bf16.mxu0 0
        %1144 = vmatpush1.bf16.msra.mxu0 0
        %1145 = vmatprep.subr.bf16.mxu0 0
        %1146 = vmatpush1.bf16.msra.mxu0 0
        %1147 = vmatprep.mubr.bf16.mxu0 0
        %1148 = vmatmul.mubr.bf16.gmra.mrb[0].mxu0 %v644
        %v1149 = vpop.f32.mrb[0].mxu0
        %v1150 = vadd.f32 %v1101, %v1149
        %v1151 = vpop.f32.mrb[0].mxu0
        %v1152 = vpop.f32.mrb[0].mxu0
        %v1153 = vpop.f32.mrb[0].mxu0
        %1154 = vdwg.mxu0
        %s1155 = scalar_lea.vmem %s8, 32
        %v1156 = vld [vmem:[%s1155] sm:$0xf]
        %v1157 = vld [vmem:[%s1155 + $0x4] sm:$0xf]
        %v1158 = vld [vmem:[%s1155 + $0x8] sm:$0xf]
        %v1159 = vld [vmem:[%s1155 + $0xc] sm:$0xf]
        %s1160 = scalar_lea.vmem %s9, 2
        %v1161 = vld [vmem:[%s1160] sm:$0x1]
        %v1163 = vlaneseq
        %v1164 = vshrl.u32 %v1163, 7
        %v1165 = vsub.s32 0, %v1164
        %v1166 = vrot.slane %v1161, %v1165
        %v1172 = vunpack.c.l.b16 %v1156
        %v1173 = vunpack.c.l.b16 %v1157
        %v1174 = vunpack.c.l.b16 %v1158
        %v1175 = vunpack.c.l.b16 %v1159
        %v1176 = vpack.c.b16 %v1173, %v1172
        %v1177 = vpack.c.b16 %v1175, %v1174
        %1180 = vmatprep.subr.bf16.mxu0 0
        %1181 = vmatpush1.bf16.msra.mxu0 %v1176
        %1182 = vmatprep.subr.bf16.mxu0 0
        %1183 = vmatpush1.bf16.msra.mxu0 %v1177
        %1184 = vmatprep.subr.bf16.mxu0 0
        %1185 = vmatpush1.bf16.msra.mxu0 0
        %1186 = vmatprep.subr.bf16.mxu0 0
        %1187 = vmatpush1.bf16.msra.mxu0 0
        %1188 = vmatprep.subr.bf16.mxu0 0
        %1189 = vmatpush1.bf16.msra.mxu0 0
        %1190 = vmatprep.subr.bf16.mxu0 0
        %1191 = vmatpush1.bf16.msra.mxu0 0
        %1192 = vmatprep.subr.bf16.mxu0 0
        %1193 = vmatpush1.bf16.msra.mxu0 0
        %1194 = vmatprep.subr.bf16.mxu0 0
        %1195 = vmatpush1.bf16.msra.mxu0 0
        %1196 = vmatprep.subr.bf16.mxu0 0
        %1197 = vmatpush1.bf16.msra.mxu0 0
        %1198 = vmatprep.subr.bf16.mxu0 0
        %1199 = vmatpush1.bf16.msra.mxu0 0
        %1200 = vmatprep.subr.bf16.mxu0 0
        %1201 = vmatpush1.bf16.msra.mxu0 0
        %1202 = vmatprep.subr.bf16.mxu0 0
        %1203 = vmatpush1.bf16.msra.mxu0 0
        %1204 = vmatprep.subr.bf16.mxu0 0
        %1205 = vmatpush1.bf16.msra.mxu0 0
        %1206 = vmatprep.subr.bf16.mxu0 0
        %1207 = vmatpush1.bf16.msra.mxu0 0
        %1208 = vmatprep.subr.bf16.mxu0 0
        %1209 = vmatpush1.bf16.msra.mxu0 0
        %1210 = vmatprep.subr.bf16.mxu0 0
        %1211 = vmatpush1.bf16.msra.mxu0 0
        %1212 = vmatprep.mubr.bf16.mxu0 0
        %1213 = vmatmul.mubr.bf16.gmra.mrb[0].mxu0 %v644
        %v1214 = vpop.f32.mrb[0].mxu0
        %v1215 = vadd.f32 %v1166, %v1214
        %v1216 = vpop.f32.mrb[0].mxu0
        %v1217 = vpop.f32.mrb[0].mxu0
        %v1218 = vpop.f32.mrb[0].mxu0
        %1219 = vdwg.mxu0
        %v1220 = vmul.f32 %v1085, 0.35355338
        %v1221 = vpack.c.bf16 %v1220, %v1220
        %s1222 = scalar_lea.vmem [#allocation2], 8
        %1223 = vst.msk [vmem:[%s1222] sm:$0xf] %vm814, %v1221
        %v1224 = vpack.c.bf16 %v1150, %v1150
        %s1225 = scalar_lea.vmem [#allocation3], 8
        %1226 = vst.msk [vmem:[%s1225] sm:$0xf] %vm814, %v1224
        %v1227 = vpack.c.bf16 %v1215, %v1215
        %s1228 = scalar_lea.vmem [#allocation4], 8
        %1229 = vst.msk [vmem:[%s1228] sm:$0xf] %vm814, %v1227
        %s1230 = scalar_lea.vmem %s4, 48
        %v1231 = vld [vmem:[%s1230] sm:$0xf]
        %v1232 = vld [vmem:[%s1230 + $0x4] sm:$0xf]
        %v1233 = vld [vmem:[%s1230 + $0x8] sm:$0xf]
        %v1234 = vld [vmem:[%s1230 + $0xc] sm:$0xf]
        %s1235 = scalar_lea.vmem %s5, 3
        %v1236 = vld [vmem:[%s1235] sm:$0x1]
        %v1238 = vlaneseq
        %v1239 = vshrl.u32 %v1238, 7
        %v1240 = vsub.s32 0, %v1239
        %v1241 = vrot.slane %v1236, %v1240
        %v1247 = vunpack.c.l.b16 %v1231
        %v1248 = vunpack.c.l.b16 %v1232
        %v1249 = vunpack.c.l.b16 %v1233
        %v1250 = vunpack.c.l.b16 %v1234
        %v1251 = vpack.c.b16 %v1248, %v1247
        %v1252 = vpack.c.b16 %v1250, %v1249
        %1255 = vmatprep.subr.bf16.mxu0 0
        %1256 = vmatpush1.bf16.msra.mxu0 %v1251
        %1257 = vmatprep.subr.bf16.mxu0 0
        %1258 = vmatpush1.bf16.msra.mxu0 %v1252
        %1259 = vmatprep.subr.bf16.mxu0 0
        %1260 = vmatpush1.bf16.msra.mxu0 0
        %1261 = vmatprep.subr.bf16.mxu0 0
        %1262 = vmatpush1.bf16.msra.mxu0 0
        %1263 = vmatprep.subr.bf16.mxu0 0
        %1264 = vmatpush1.bf16.msra.mxu0 0
        %1265 = vmatprep.subr.bf16.mxu0 0
        %1266 = vmatpush1.bf16.msra.mxu0 0
        %1267 = vmatprep.subr.bf16.mxu0 0
        %1268 = vmatpush1.bf16.msra.mxu0 0
        %1269 = vmatprep.subr.bf16.mxu0 0
        %1270 = vmatpush1.bf16.msra.mxu0 0
        %1271 = vmatprep.subr.bf16.mxu0 0
        %1272 = vmatpush1.bf16.msra.mxu0 0
        %1273 = vmatprep.subr.bf16.mxu0 0
        %1274 = vmatpush1.bf16.msra.mxu0 0
        %1275 = vmatprep.subr.bf16.mxu0 0
        %1276 = vmatpush1.bf16.msra.mxu0 0
        %1277 = vmatprep.subr.bf16.mxu0 0
        %1278 = vmatpush1.bf16.msra.mxu0 0
        %1279 = vmatprep.subr.bf16.mxu0 0
        %1280 = vmatpush1.bf16.msra.mxu0 0
        %1281 = vmatprep.subr.bf16.mxu0 0
        %1282 = vmatpush1.bf16.msra.mxu0 0
        %1283 = vmatprep.subr.bf16.mxu0 0
        %1284 = vmatpush1.bf16.msra.mxu0 0
        %1285 = vmatprep.subr.bf16.mxu0 0
        %1286 = vmatpush1.bf16.msra.mxu0 0
        %1287 = vmatprep.mubr.bf16.mxu0 0
        %1288 = vmatmul.mubr.bf16.gmra.mrb[0].mxu0 %v644
        %v1289 = vpop.f32.mrb[0].mxu0
        %v1290 = vadd.f32 %v1241, %v1289
        %v1291 = vpop.f32.mrb[0].mxu0
        %v1292 = vpop.f32.mrb[0].mxu0
        %v1293 = vpop.f32.mrb[0].mxu0
        %1294 = vdwg.mxu0
        %s1295 = scalar_lea.vmem %s6, 48
        %v1296 = vld [vmem:[%s1295] sm:$0xf]
        %v1297 = vld [vmem:[%s1295 + $0x4] sm:$0xf]
        %v1298 = vld [vmem:[%s1295 + $0x8] sm:$0xf]
        %v1299 = vld [vmem:[%s1295 + $0xc] sm:$0xf]
        %s1300 = scalar_lea.vmem %s7, 3
        %v1301 = vld [vmem:[%s1300] sm:$0x1]
        %v1303 = vlaneseq
        %v1304 = vshrl.u32 %v1303, 7
        %v1305 = vsub.s32 0, %v1304
        %v1306 = vrot.slane %v1301, %v1305
        %v1312 = vunpack.c.l.b16 %v1296
        %v1313 = vunpack.c.l.b16 %v1297
        %v1314 = vunpack.c.l.b16 %v1298
        %v1315 = vunpack.c.l.b16 %v1299
        %v1316 = vpack.c.b16 %v1313, %v1312
        %v1317 = vpack.c.b16 %v1315, %v1314
        %1320 = vmatprep.subr.bf16.mxu0 0
        %1321 = vmatpush1.bf16.msra.mxu0 %v1316
        %1322 = vmatprep.subr.bf16.mxu0 0
        %1323 = vmatpush1.bf16.msra.mxu0 %v1317
        %1324 = vmatprep.subr.bf16.mxu0 0
        %1325 = vmatpush1.bf16.msra.mxu0 0
        %1326 = vmatprep.subr.bf16.mxu0 0
        %1327 = vmatpush1.bf16.msra.mxu0 0
        %1328 = vmatprep.subr.bf16.mxu0 0
        %1329 = vmatpush1.bf16.msra.mxu0 0
        %1330 = vmatprep.subr.bf16.mxu0 0
        %1331 = vmatpush1.bf16.msra.mxu0 0
        %1332 = vmatprep.subr.bf16.mxu0 0
        %1333 = vmatpush1.bf16.msra.mxu0 0
        %1334 = vmatprep.subr.bf16.mxu0 0
        %1335 = vmatpush1.bf16.msra.mxu0 0
        %1336 = vmatprep.subr.bf16.mxu0 0
        %1337 = vmatpush1.bf16.msra.mxu0 0
        %1338 = vmatprep.subr.bf16.mxu0 0
        %1339 = vmatpush1.bf16.msra.mxu0 0
        %1340 = vmatprep.subr.bf16.mxu0 0
        %1341 = vmatpush1.bf16.msra.mxu0 0
        %1342 = vmatprep.subr.bf16.mxu0 0
        %1343 = vmatpush1.bf16.msra.mxu0 0
        %1344 = vmatprep.subr.bf16.mxu0 0
        %1345 = vmatpush1.bf16.msra.mxu0 0
        %1346 = vmatprep.subr.bf16.mxu0 0
        %1347 = vmatpush1.bf16.msra.mxu0 0
        %1348 = vmatprep.subr.bf16.mxu0 0
        %1349 = vmatpush1.bf16.msra.mxu0 0
        %1350 = vmatprep.subr.bf16.mxu0 0
        %1351 = vmatpush1.bf16.msra.mxu0 0
        %1352 = vmatprep.mubr.bf16.mxu0 0
        %1353 = vmatmul.mubr.bf16.gmra.mrb[0].mxu0 %v644
        %v1354 = vpop.f32.mrb[0].mxu0
        %v1355 = vadd.f32 %v1306, %v1354
        %v1356 = vpop.f32.mrb[0].mxu0
        %v1357 = vpop.f32.mrb[0].mxu0
        %v1358 = vpop.f32.mrb[0].mxu0
        %1359 = vdwg.mxu0
        %s1360 = scalar_lea.vmem %s8, 48
        %v1361 = vld [vmem:[%s1360] sm:$0xf]
        %v1362 = vld [vmem:[%s1360 + $0x4] sm:$0xf]
        %v1363 = vld [vmem:[%s1360 + $0x8] sm:$0xf]
        %v1364 = vld [vmem:[%s1360 + $0xc] sm:$0xf]
        %s1365 = scalar_lea.vmem %s9, 3
        %v1366 = vld [vmem:[%s1365] sm:$0x1]
        %v1368 = vlaneseq
        %v1369 = vshrl.u32 %v1368, 7
        %v1370 = vsub.s32 0, %v1369
        %v1371 = vrot.slane %v1366, %v1370
        %v1377 = vunpack.c.l.b16 %v1361
        %v1378 = vunpack.c.l.b16 %v1362
        %v1379 = vunpack.c.l.b16 %v1363
        %v1380 = vunpack.c.l.b16 %v1364
        %v1381 = vpack.c.b16 %v1378, %v1377
        %v1382 = vpack.c.b16 %v1380, %v1379
        %1385 = vmatprep.subr.bf16.mxu0 0
        %1386 = vmatpush1.bf16.msra.mxu0 %v1381
        %1387 = vmatprep.subr.bf16.mxu0 0
        %1388 = vmatpush1.bf16.msra.mxu0 %v1382
        %1389 = vmatprep.subr.bf16.mxu0 0
        %1390 = vmatpush1.bf16.msra.mxu0 0
        %1391 = vmatprep.subr.bf16.mxu0 0
        %1392 = vmatpush1.bf16.msra.mxu0 0
        %1393 = vmatprep.subr.bf16.mxu0 0
        %1394 = vmatpush1.bf16.msra.mxu0 0
        %1395 = vmatprep.subr.bf16.mxu0 0
        %1396 = vmatpush1.bf16.msra.mxu0 0
        %1397 = vmatprep.subr.bf16.mxu0 0
        %1398 = vmatpush1.bf16.msra.mxu0 0
        %1399 = vmatprep.subr.bf16.mxu0 0
        %1400 = vmatpush1.bf16.msra.mxu0 0
        %1401 = vmatprep.subr.bf16.mxu0 0
        %1402 = vmatpush1.bf16.msra.mxu0 0
        %1403 = vmatprep.subr.bf16.mxu0 0
        %1404 = vmatpush1.bf16.msra.mxu0 0
        %1405 = vmatprep.subr.bf16.mxu0 0
        %1406 = vmatpush1.bf16.msra.mxu0 0
        %1407 = vmatprep.subr.bf16.mxu0 0
        %1408 = vmatpush1.bf16.msra.mxu0 0
        %1409 = vmatprep.subr.bf16.mxu0 0
        %1410 = vmatpush1.bf16.msra.mxu0 0
        %1411 = vmatprep.subr.bf16.mxu0 0
        %1412 = vmatpush1.bf16.msra.mxu0 0
        %1413 = vmatprep.subr.bf16.mxu0 0
        %1414 = vmatpush1.bf16.msra.mxu0 0
        %1415 = vmatprep.subr.bf16.mxu0 0
        %1416 = vmatpush1.bf16.msra.mxu0 0
        %1417 = vmatprep.mubr.bf16.mxu0 0
        %1418 = vmatmul.mubr.bf16.gmra.mrb[0].mxu0 %v644
        %v1419 = vpop.f32.mrb[0].mxu0
        %v1420 = vadd.f32 %v1371, %v1419
        %v1421 = vpop.f32.mrb[0].mxu0
        %v1422 = vpop.f32.mrb[0].mxu0
        %v1423 = vpop.f32.mrb[0].mxu0
        %1424 = vdwg.mxu0
        %v1425 = vmul.f32 %v1290, 0.35355338
        %v1426 = vpack.c.bf16 %v1425, %v1425
        %s1427 = scalar_lea.vmem [#allocation2], 12
        %1428 = vst.msk [vmem:[%s1427] sm:$0xf] %vm814, %v1426
        %v1429 = vpack.c.bf16 %v1355, %v1355
        %s1430 = scalar_lea.vmem [#allocation3], 12
        %1431 = vst.msk [vmem:[%s1430] sm:$0xf] %vm814, %v1429
        %v1432 = vpack.c.bf16 %v1420, %v1420
        %s1433 = scalar_lea.vmem [#allocation4], 12
        %1434 = vst.msk [vmem:[%s1433] sm:$0xf] %vm814, %v1432
        %v1435 = vld [vmem:[#allocation2] sm:$0xf]
        %v1436 = vld [vmem:[#allocation2 + $0x4] sm:$0xf]
        %v1437 = vld [vmem:[#allocation2 + $0x8] sm:$0xf]
        %v1438 = vld [vmem:[#allocation2 + $0xc] sm:$0xf]
        %v1439 = vld [vmem:[#allocation3] sm:$0xf]
        %v1440 = vld [vmem:[#allocation3 + $0x4] sm:$0xf]
        %v1441 = vld [vmem:[#allocation3 + $0x8] sm:$0xf]
        %v1442 = vld [vmem:[#allocation3 + $0xc] sm:$0xf]
        %v1443 = vld [vmem:[#allocation4] sm:$0xf]
        %v1444 = vld [vmem:[#allocation4 + $0x4] sm:$0xf]
        %v1445 = vld [vmem:[#allocation4 + $0x8] sm:$0xf]
        %v1446 = vld [vmem:[#allocation4 + $0xc] sm:$0xf]
        %v1448 = vlaneseq
        %v1449 = vshrl.u32 %v1448, 7
        %v1450 = vsub.s32 0, %v1449
        %v1451 = vrot.slane %v587, %v1450
        %vm1453 = vcmask 64512
        %v1455 = vsel %vm1453, %v1435, 0
        %v1458 = vsel %vm1453, %v1439, 0
        %1460 = vmatprep.subr.bf16.mxu0 0
        %1461 = vmatpush1.bf16.xpose.msra.mxu0 %v1458
        %1462 = vmatprep.subr.bf16.mxu0 0
        %1463 = vmatpush1.bf16.xpose.msra.mxu0 0
        %1464 = vmatprep.subr.bf16.mxu0 0
        %1465 = vmatpush1.bf16.xpose.msra.mxu0 0
        %1466 = vmatprep.subr.bf16.mxu0 0
        %1467 = vmatpush1.bf16.xpose.msra.mxu0 0
        %1468 = vmatprep.subr.bf16.mxu0 0
        %1469 = vmatpush1.bf16.xpose.msra.mxu0 0
        %1470 = vmatprep.subr.bf16.mxu0 0
        %1471 = vmatpush1.bf16.xpose.msra.mxu0 0
        %1472 = vmatprep.subr.bf16.mxu0 0
        %1473 = vmatpush1.bf16.xpose.msra.mxu0 0
        %1474 = vmatprep.subr.bf16.mxu0 0
        %1475 = vmatpush1.bf16.xpose.msra.mxu0 0
        %1476 = vmatprep.subr.bf16.mxu0 0
        %1477 = vmatpush1.bf16.xpose.msra.mxu0 0
        %1478 = vmatprep.subr.bf16.mxu0 0
        %1479 = vmatpush1.bf16.xpose.msra.mxu0 0
        %1480 = vmatprep.subr.bf16.mxu0 0
        %1481 = vmatpush1.bf16.xpose.msra.mxu0 0
        %1482 = vmatprep.subr.bf16.mxu0 0
        %1483 = vmatpush1.bf16.xpose.msra.mxu0 0
        %1484 = vmatprep.subr.bf16.mxu0 0
        %1485 = vmatpush1.bf16.xpose.msra.mxu0 0
        %1486 = vmatprep.subr.bf16.mxu0 0
        %1487 = vmatpush1.bf16.xpose.msra.mxu0 0
        %1488 = vmatprep.subr.bf16.mxu0 0
        %1489 = vmatpush1.bf16.xpose.msra.mxu0 0
        %1490 = vmatprep.subr.bf16.mxu0 0
        %1491 = vmatpush1.bf16.xpose.msra.mxu0 0
        %1492 = vmatprep.mubr.bf16.mxu0 0
        %1493 = vmatmul.mubr.bf16.gmra.mrb[0].mxu0 %v1455
        %v1494 = vpop.f32.mrb[0].mxu0
        %v1495 = vadd.f32 %v1451, %v1494
        %v1496 = vpop.f32.mrb[0].mxu0
        %v1497 = vpop.f32.mrb[0].mxu0
        %v1498 = vpop.f32.mrb[0].mxu0
        %1499 = vdwg.mxu0
        %v1501 = vsel %vm1453, %v1436, 0
        %v1504 = vsel %vm1453, %v1440, 0
        %1506 = vmatprep.subr.bf16.mxu0 0
        %1507 = vmatpush1.bf16.xpose.msra.mxu0 %v1504
        %1508 = vmatprep.subr.bf16.mxu0 0
        %1509 = vmatpush1.bf16.xpose.msra.mxu0 0
        %1510 = vmatprep.subr.bf16.mxu0 0
        %1511 = vmatpush1.bf16.xpose.msra.mxu0 0
        %1512 = vmatprep.subr.bf16.mxu0 0
        %1513 = vmatpush1.bf16.xpose.msra.mxu0 0
        %1514 = vmatprep.subr.bf16.mxu0 0
        %1515 = vmatpush1.bf16.xpose.msra.mxu0 0
        %1516 = vmatprep.subr.bf16.mxu0 0
        %1517 = vmatpush1.bf16.xpose.msra.mxu0 0
        %1518 = vmatprep.subr.bf16.mxu0 0
        %1519 = vmatpush1.bf16.xpose.msra.mxu0 0
        %1520 = vmatprep.subr.bf16.mxu0 0
        %1521 = vmatpush1.bf16.xpose.msra.mxu0 0
        %1522 = vmatprep.subr.bf16.mxu0 0
        %1523 = vmatpush1.bf16.xpose.msra.mxu0 0
        %1524 = vmatprep.subr.bf16.mxu0 0
        %1525 = vmatpush1.bf16.xpose.msra.mxu0 0
        %1526 = vmatprep.subr.bf16.mxu0 0
        %1527 = vmatpush1.bf16.xpose.msra.mxu0 0
        %1528 = vmatprep.subr.bf16.mxu0 0
        %1529 = vmatpush1.bf16.xpose.msra.mxu0 0
        %1530 = vmatprep.subr.bf16.mxu0 0
        %1531 = vmatpush1.bf16.xpose.msra.mxu0 0
        %1532 = vmatprep.subr.bf16.mxu0 0
        %1533 = vmatpush1.bf16.xpose.msra.mxu0 0
        %1534 = vmatprep.subr.bf16.mxu0 0
        %1535 = vmatpush1.bf16.xpose.msra.mxu0 0
        %1536 = vmatprep.subr.bf16.mxu0 0
        %1537 = vmatpush1.bf16.xpose.msra.mxu0 0
        %1538 = vmatprep.mubr.bf16.mxu0 0
        %1539 = vmatmul.mubr.bf16.gmra.mrb[0].mxu0 %v1501
        %v1540 = vpop.f32.mrb[0].mxu0
        %v1541 = vadd.f32 %v1451, %v1540
        %v1542 = vpop.f32.mrb[0].mxu0
        %v1543 = vpop.f32.mrb[0].mxu0
        %v1544 = vpop.f32.mrb[0].mxu0
        %1545 = vdwg.mxu0
        %v1547 = vsel %vm1453, %v1437, 0
        %v1550 = vsel %vm1453, %v1441, 0
        %1552 = vmatprep.subr.bf16.mxu0 0
        %1553 = vmatpush1.bf16.xpose.msra.mxu0 %v1550
        %1554 = vmatprep.subr.bf16.mxu0 0
        %1555 = vmatpush1.bf16.xpose.msra.mxu0 0
        %1556 = vmatprep.subr.bf16.mxu0 0
        %1557 = vmatpush1.bf16.xpose.msra.mxu0 0
        %1558 = vmatprep.subr.bf16.mxu0 0
        %1559 = vmatpush1.bf16.xpose.msra.mxu0 0
        %1560 = vmatprep.subr.bf16.mxu0 0
        %1561 = vmatpush1.bf16.xpose.msra.mxu0 0
        %1562 = vmatprep.subr.bf16.mxu0 0
        %1563 = vmatpush1.bf16.xpose.msra.mxu0 0
        %1564 = vmatprep.subr.bf16.mxu0 0
        %1565 = vmatpush1.bf16.xpose.msra.mxu0 0
        %1566 = vmatprep.subr.bf16.mxu0 0
        %1567 = vmatpush1.bf16.xpose.msra.mxu0 0
        %1568 = vmatprep.subr.bf16.mxu0 0
        %1569 = vmatpush1.bf16.xpose.msra.mxu0 0
        %1570 = vmatprep.subr.bf16.mxu0 0
        %1571 = vmatpush1.bf16.xpose.msra.mxu0 0
        %1572 = vmatprep.subr.bf16.mxu0 0
        %1573 = vmatpush1.bf16.xpose.msra.mxu0 0
        %1574 = vmatprep.subr.bf16.mxu0 0
        %1575 = vmatpush1.bf16.xpose.msra.mxu0 0
        %1576 = vmatprep.subr.bf16.mxu0 0
        %1577 = vmatpush1.bf16.xpose.msra.mxu0 0
        %1578 = vmatprep.subr.bf16.mxu0 0
        %1579 = vmatpush1.bf16.xpose.msra.mxu0 0
        %1580 = vmatprep.subr.bf16.mxu0 0
        %1581 = vmatpush1.bf16.xpose.msra.mxu0 0
        %1582 = vmatprep.subr.bf16.mxu0 0
        %1583 = vmatpush1.bf16.xpose.msra.mxu0 0
        %1584 = vmatprep.mubr.bf16.mxu0 0
        %1585 = vmatmul.mubr.bf16.gmra.mrb[0].mxu0 %v1547
        %v1586 = vpop.f32.mrb[0].mxu0
        %v1587 = vadd.f32 %v1451, %v1586
        %v1588 = vpop.f32.mrb[0].mxu0
        %v1589 = vpop.f32.mrb[0].mxu0
        %v1590 = vpop.f32.mrb[0].mxu0
        %1591 = vdwg.mxu0
        %v1593 = vsel %vm1453, %v1438, 0
        %v1596 = vsel %vm1453, %v1442, 0
        %1598 = vmatprep.subr.bf16.mxu0 0
        %1599 = vmatpush1.bf16.xpose.msra.mxu0 %v1596
        %1600 = vmatprep.subr.bf16.mxu0 0
        %1601 = vmatpush1.bf16.xpose.msra.mxu0 0
        %1602 = vmatprep.subr.bf16.mxu0 0
        %1603 = vmatpush1.bf16.xpose.msra.mxu0 0
        %1604 = vmatprep.subr.bf16.mxu0 0
        %1605 = vmatpush1.bf16.xpose.msra.mxu0 0
        %1606 = vmatprep.subr.bf16.mxu0 0
        %1607 = vmatpush1.bf16.xpose.msra.mxu0 0
        %1608 = vmatprep.subr.bf16.mxu0 0
        %1609 = vmatpush1.bf16.xpose.msra.mxu0 0
        %1610 = vmatprep.subr.bf16.mxu0 0
        %1611 = vmatpush1.bf16.xpose.msra.mxu0 0
        %1612 = vmatprep.subr.bf16.mxu0 0
        %1613 = vmatpush1.bf16.xpose.msra.mxu0 0
        %1614 = vmatprep.subr.bf16.mxu0 0
        %1615 = vmatpush1.bf16.xpose.msra.mxu0 0
        %1616 = vmatprep.subr.bf16.mxu0 0
        %1617 = vmatpush1.bf16.xpose.msra.mxu0 0
        %1618 = vmatprep.subr.bf16.mxu0 0
        %1619 = vmatpush1.bf16.xpose.msra.mxu0 0
        %1620 = vmatprep.subr.bf16.mxu0 0
        %1621 = vmatpush1.bf16.xpose.msra.mxu0 0
        %1622 = vmatprep.subr.bf16.mxu0 0
        %1623 = vmatpush1.bf16.xpose.msra.mxu0 0
        %1624 = vmatprep.subr.bf16.mxu0 0
        %1625 = vmatpush1.bf16.xpose.msra.mxu0 0
        %1626 = vmatprep.subr.bf16.mxu0 0
        %1627 = vmatpush1.bf16.xpose.msra.mxu0 0
        %1628 = vmatprep.subr.bf16.mxu0 0
        %1629 = vmatpush1.bf16.xpose.msra.mxu0 0
        %1630 = vmatprep.mubr.bf16.mxu0 0
        %1631 = vmatmul.mubr.bf16.gmra.mrb[0].mxu0 %v1593
        %v1632 = vpop.f32.mrb[0].mxu0
        %v1633 = vadd.f32 %v1451, %v1632
        %v1634 = vpop.f32.mrb[0].mxu0
        %v1635 = vpop.f32.mrb[0].mxu0
        %v1636 = vpop.f32.mrb[0].mxu0
        %1637 = vdwg.mxu0
        %v1638 = vsel %vm1453, %v1495, -inf
        %1639 = vmax.xlane.f32.xlu0 %v1638
        %v1640 = vpop.xlane.xlu0 %1639
        %v1641 = vsel %vm1453, %v1541, -inf
        %1642 = vmax.xlane.f32.xlu0 %v1641
        %v1643 = vpop.xlane.xlu0 %1642
        %v1644 = vsel %vm1453, %v1587, -inf
        %1645 = vmax.xlane.f32.xlu0 %v1644
        %v1646 = vpop.xlane.xlu0 %1645
        %v1647 = vsel %vm1453, %v1633, -inf
        %1648 = vmax.xlane.f32.xlu0 %v1647
        %v1649 = vpop.xlane.xlu0 %1648
        %v1650 = vsub.f32 %v1495, %v1640
        %v1651 = vsub.f32 %v1541, %v1643
        %v1652 = vsub.f32 %v1587, %v1646
        %v1653 = vsub.f32 %v1633, %v1649
        %v1654 = vmul.f32 %v1650, 1.442695
        %v1655 = vpow.pop %v1654
        %v1656 = vmul.f32 %v1651, 1.442695
        %v1657 = vpow.pop %v1656
        %v1658 = vmul.f32 %v1652, 1.442695
        %v1659 = vpow.pop %v1658
        %v1660 = vmul.f32 %v1653, 1.442695
        %v1661 = vpow.pop %v1660
        %v1662 = vsel %vm1453, %v1655, 0.0
        %1663 = vadd.xlane.f32.xlu0 %v1662
        %v1664 = vpop.xlane.xlu0 %1663
        %v1665 = vsel %vm1453, %v1657, 0.0
        %1666 = vadd.xlane.f32.xlu0 %v1665
        %v1667 = vpop.xlane.xlu0 %1666
        %v1668 = vsel %vm1453, %v1659, 0.0
        %1669 = vadd.xlane.f32.xlu0 %v1668
        %v1670 = vpop.xlane.xlu0 %1669
        %v1671 = vsel %vm1453, %v1661, 0.0
        %1672 = vadd.xlane.f32.xlu0 %v1671
        %v1673 = vpop.xlane.xlu0 %1672
        %v1674 = vrcp.pop %v1664
        %v1675 = vrcp.pop %v1667
        %v1676 = vrcp.pop %v1670
        %v1677 = vrcp.pop %v1673
        %v1678 = vmul.f32 %v1655, %v1674
        %v1679 = vmul.f32 %v1657, %v1675
        %v1680 = vmul.f32 %v1659, %v1676
        %v1681 = vmul.f32 %v1661, %v1677
        %v1682 = vpack.c.bf16 %v1678, %v1678
        %v1683 = vpack.c.bf16 %v1679, %v1679
        %v1684 = vpack.c.bf16 %v1680, %v1680
        %v1685 = vpack.c.bf16 %v1681, %v1681
        %v1687 = vsel %vm1453, %v1682, 0
        %vm1689 = vcmask 1043456
        %v1691 = vsel %vm1689, %v1443, 0
        %1693 = vmatprep.subr.bf16.mxu0 0
        %1694 = vmatpush1.bf16.msra.mxu0 %v1691
        %1695 = vmatprep.subr.bf16.mxu0 0
        %1696 = vmatpush1.bf16.msra.mxu0 0
        %1697 = vmatprep.subr.bf16.mxu0 0
        %1698 = vmatpush1.bf16.msra.mxu0 0
        %1699 = vmatprep.subr.bf16.mxu0 0
        %1700 = vmatpush1.bf16.msra.mxu0 0
        %1701 = vmatprep.subr.bf16.mxu0 0
        %1702 = vmatpush1.bf16.msra.mxu0 0
        %1703 = vmatprep.subr.bf16.mxu0 0
        %1704 = vmatpush1.bf16.msra.mxu0 0
        %1705 = vmatprep.subr.bf16.mxu0 0
        %1706 = vmatpush1.bf16.msra.mxu0 0
        %1707 = vmatprep.subr.bf16.mxu0 0
        %1708 = vmatpush1.bf16.msra.mxu0 0
        %1709 = vmatprep.subr.bf16.mxu0 0
        %1710 = vmatpush1.bf16.msra.mxu0 0
        %1711 = vmatprep.subr.bf16.mxu0 0
        %1712 = vmatpush1.bf16.msra.mxu0 0
        %1713 = vmatprep.subr.bf16.mxu0 0
        %1714 = vmatpush1.bf16.msra.mxu0 0
        %1715 = vmatprep.subr.bf16.mxu0 0
        %1716 = vmatpush1.bf16.msra.mxu0 0
        %1717 = vmatprep.subr.bf16.mxu0 0
        %1718 = vmatpush1.bf16.msra.mxu0 0
        %1719 = vmatprep.subr.bf16.mxu0 0
        %1720 = vmatpush1.bf16.msra.mxu0 0
        %1721 = vmatprep.subr.bf16.mxu0 0
        %1722 = vmatpush1.bf16.msra.mxu0 0
        %1723 = vmatprep.subr.bf16.mxu0 0
        %1724 = vmatpush1.bf16.msra.mxu0 0
        %1725 = vmatprep.mubr.bf16.mxu0 0
        %1726 = vmatmul.mubr.bf16.gmra.mrb[0].mxu0 %v1687
        %v1727 = vpop.f32.mrb[0].mxu0
        %v1728 = vadd.f32 0.0, %v1727
        %v1729 = vpop.f32.mrb[0].mxu0
        %v1730 = vpop.f32.mrb[0].mxu0
        %v1731 = vpop.f32.mrb[0].mxu0
        %1732 = vdwg.mxu0
        %v1734 = vsel %vm1453, %v1683, 0
        %v1737 = vsel %vm1689, %v1444, 0
        %1739 = vmatprep.subr.bf16.mxu0 0
        %1740 = vmatpush1.bf16.msra.mxu0 %v1737
        %1741 = vmatprep.subr.bf16.mxu0 0
        %1742 = vmatpush1.bf16.msra.mxu0 0
        %1743 = vmatprep.subr.bf16.mxu0 0
        %1744 = vmatpush1.bf16.msra.mxu0 0
        %1745 = vmatprep.subr.bf16.mxu0 0
        %1746 = vmatpush1.bf16.msra.mxu0 0
        %1747 = vmatprep.subr.bf16.mxu0 0
        %1748 = vmatpush1.bf16.msra.mxu0 0
        %1749 = vmatprep.subr.bf16.mxu0 0
        %1750 = vmatpush1.bf16.msra.mxu0 0
        %1751 = vmatprep.subr.bf16.mxu0 0
        %1752 = vmatpush1.bf16.msra.mxu0 0
        %1753 = vmatprep.subr.bf16.mxu0 0
        %1754 = vmatpush1.bf16.msra.mxu0 0
        %1755 = vmatprep.subr.bf16.mxu0 0
        %1756 = vmatpush1.bf16.msra.mxu0 0
        %1757 = vmatprep.subr.bf16.mxu0 0
        %1758 = vmatpush1.bf16.msra.mxu0 0
        %1759 = vmatprep.subr.bf16.mxu0 0
        %1760 = vmatpush1.bf16.msra.mxu0 0
        %1761 = vmatprep.subr.bf16.mxu0 0
        %1762 = vmatpush1.bf16.msra.mxu0 0
        %1763 = vmatprep.subr.bf16.mxu0 0
        %1764 = vmatpush1.bf16.msra.mxu0 0
        %1765 = vmatprep.subr.bf16.mxu0 0
        %1766 = vmatpush1.bf16.msra.mxu0 0
        %1767 = vmatprep.subr.bf16.mxu0 0
        %1768 = vmatpush1.bf16.msra.mxu0 0
        %1769 = vmatprep.subr.bf16.mxu0 0
        %1770 = vmatpush1.bf16.msra.mxu0 0
        %1771 = vmatprep.mubr.bf16.mxu0 0
        %1772 = vmatmul.mubr.bf16.gmra.mrb[0].mxu0 %v1734
        %v1773 = vpop.f32.mrb[0].mxu0
        %v1774 = vadd.f32 0.0, %v1773
        %v1775 = vpop.f32.mrb[0].mxu0
        %v1776 = vpop.f32.mrb[0].mxu0
        %v1777 = vpop.f32.mrb[0].mxu0
        %1778 = vdwg.mxu0
        %v1780 = vsel %vm1453, %v1684, 0
        %v1783 = vsel %vm1689, %v1445, 0
        %1785 = vmatprep.subr.bf16.mxu0 0
        %1786 = vmatpush1.bf16.msra.mxu0 %v1783
        %1787 = vmatprep.subr.bf16.mxu0 0
        %1788 = vmatpush1.bf16.msra.mxu0 0
        %1789 = vmatprep.subr.bf16.mxu0 0
        %1790 = vmatpush1.bf16.msra.mxu0 0
        %1791 = vmatprep.subr.bf16.mxu0 0
        %1792 = vmatpush1.bf16.msra.mxu0 0
        %1793 = vmatprep.subr.bf16.mxu0 0
        %1794 = vmatpush1.bf16.msra.mxu0 0
        %1795 = vmatprep.subr.bf16.mxu0 0
        %1796 = vmatpush1.bf16.msra.mxu0 0
        %1797 = vmatprep.subr.bf16.mxu0 0
        %1798 = vmatpush1.bf16.msra.mxu0 0
        %1799 = vmatprep.subr.bf16.mxu0 0
        %1800 = vmatpush1.bf16.msra.mxu0 0
        %1801 = vmatprep.subr.bf16.mxu0 0
        %1802 = vmatpush1.bf16.msra.mxu0 0
        %1803 = vmatprep.subr.bf16.mxu0 0
        %1804 = vmatpush1.bf16.msra.mxu0 0
        %1805 = vmatprep.subr.bf16.mxu0 0
        %1806 = vmatpush1.bf16.msra.mxu0 0
        %1807 = vmatprep.subr.bf16.mxu0 0
        %1808 = vmatpush1.bf16.msra.mxu0 0
        %1809 = vmatprep.subr.bf16.mxu0 0
        %1810 = vmatpush1.bf16.msra.mxu0 0
        %1811 = vmatprep.subr.bf16.mxu0 0
        %1812 = vmatpush1.bf16.msra.mxu0 0
        %1813 = vmatprep.subr.bf16.mxu0 0
        %1814 = vmatpush1.bf16.msra.mxu0 0
        %1815 = vmatprep.subr.bf16.mxu0 0
        %1816 = vmatpush1.bf16.msra.mxu0 0
        %1817 = vmatprep.mubr.bf16.mxu0 0
        %1818 = vmatmul.mubr.bf16.gmra.mrb[0].mxu0 %v1780
        %v1819 = vpop.f32.mrb[0].mxu0
        %v1820 = vadd.f32 0.0, %v1819
        %v1821 = vpop.f32.mrb[0].mxu0
        %v1822 = vpop.f32.mrb[0].mxu0
        %v1823 = vpop.f32.mrb[0].mxu0
        %1824 = vdwg.mxu0
        %v1826 = vsel %vm1453, %v1685, 0
        %v1829 = vsel %vm1689, %v1446, 0
        %1831 = vmatprep.subr.bf16.mxu0 0
        %1832 = vmatpush1.bf16.msra.mxu0 %v1829
        %1833 = vmatprep.subr.bf16.mxu0 0
        %1834 = vmatpush1.bf16.msra.mxu0 0
        %1835 = vmatprep.subr.bf16.mxu0 0
        %1836 = vmatpush1.bf16.msra.mxu0 0
        %1837 = vmatprep.subr.bf16.mxu0 0
        %1838 = vmatpush1.bf16.msra.mxu0 0
        %1839 = vmatprep.subr.bf16.mxu0 0
        %1840 = vmatpush1.bf16.msra.mxu0 0
        %1841 = vmatprep.subr.bf16.mxu0 0
        %1842 = vmatpush1.bf16.msra.mxu0 0
        %1843 = vmatprep.subr.bf16.mxu0 0
        %1844 = vmatpush1.bf16.msra.mxu0 0
        %1845 = vmatprep.subr.bf16.mxu0 0
        %1846 = vmatpush1.bf16.msra.mxu0 0
        %1847 = vmatprep.subr.bf16.mxu0 0
        %1848 = vmatpush1.bf16.msra.mxu0 0
        %1849 = vmatprep.subr.bf16.mxu0 0
        %1850 = vmatpush1.bf16.msra.mxu0 0
        %1851 = vmatprep.subr.bf16.mxu0 0
        %1852 = vmatpush1.bf16.msra.mxu0 0
        %1853 = vmatprep.subr.bf16.mxu0 0
        %1854 = vmatpush1.bf16.msra.mxu0 0
        %1855 = vmatprep.subr.bf16.mxu0 0
        %1856 = vmatpush1.bf16.msra.mxu0 0
        %1857 = vmatprep.subr.bf16.mxu0 0
        %1858 = vmatpush1.bf16.msra.mxu0 0
        %1859 = vmatprep.subr.bf16.mxu0 0
        %1860 = vmatpush1.bf16.msra.mxu0 0
        %1861 = vmatprep.subr.bf16.mxu0 0
        %1862 = vmatpush1.bf16.msra.mxu0 0
        %1863 = vmatprep.mubr.bf16.mxu0 0
        %1864 = vmatmul.mubr.bf16.gmra.mrb[0].mxu0 %v1826
        %v1865 = vpop.f32.mrb[0].mxu0
        %v1866 = vadd.f32 0.0, %v1865
        %v1867 = vpop.f32.mrb[0].mxu0
        %v1868 = vpop.f32.mrb[0].mxu0
        %v1869 = vpop.f32.mrb[0].mxu0
        %1870 = vdwg.mxu0
        %v1871 = vpack.c.bf16 %v1728, %v1728
        %v1872 = vld [vmem:[%s10] sm:$0xf]
        %v1873 = vpack.c.bf16 %v1774, %v1774
        %s1874 = scalar_lea.vmem %s10, 4
        %v1875 = vld [vmem:[%s1874] sm:$0xf]
        %v1877 = vsel %vm1453, %v1873, 0
        %v1880 = vsel %vm1689, %v1875, 0
        %1882 = vmatprep.subr.bf16.mxu0 0
        %1883 = vmatpush1.bf16.msra.mxu0 %v1880
        %1884 = vmatprep.subr.bf16.mxu0 0
        %1885 = vmatpush1.bf16.msra.mxu0 0
        %1886 = vmatprep.subr.bf16.mxu0 0
        %1887 = vmatpush1.bf16.msra.mxu0 0
        %1888 = vmatprep.subr.bf16.mxu0 0
        %1889 = vmatpush1.bf16.msra.mxu0 0
        %1890 = vmatprep.subr.bf16.mxu0 0
        %1891 = vmatpush1.bf16.msra.mxu0 0
        %1892 = vmatprep.subr.bf16.mxu0 0
        %1893 = vmatpush1.bf16.msra.mxu0 0
        %1894 = vmatprep.subr.bf16.mxu0 0
        %1895 = vmatpush1.bf16.msra.mxu0 0
        %1896 = vmatprep.subr.bf16.mxu0 0
        %1897 = vmatpush1.bf16.msra.mxu0 0
        %1898 = vmatprep.subr.bf16.mxu0 0
        %1899 = vmatpush1.bf16.msra.mxu0 0
        %1900 = vmatprep.subr.bf16.mxu0 0
        %1901 = vmatpush1.bf16.msra.mxu0 0
        %1902 = vmatprep.subr.bf16.mxu0 0
        %1903 = vmatpush1.bf16.msra.mxu0 0
        %1904 = vmatprep.subr.bf16.mxu0 0
        %1905 = vmatpush1.bf16.msra.mxu0 0
        %1906 = vmatprep.subr.bf16.mxu0 0
        %1907 = vmatpush1.bf16.msra.mxu0 0
        %1908 = vmatprep.subr.bf16.mxu0 0
        %1909 = vmatpush1.bf16.msra.mxu0 0
        %1910 = vmatprep.subr.bf16.mxu0 0
        %1911 = vmatpush1.bf16.msra.mxu0 0
        %1912 = vmatprep.subr.bf16.mxu0 0
        %1913 = vmatpush1.bf16.msra.mxu0 0
        %1914 = vmatprep.mubr.bf16.mxu0 0
        %1915 = vmatmul.mubr.bf16.gmra.mrb[0].mxu0 %v1877
        %v1916 = vpop.f32.mrb[0].mxu0
        %v1917 = vadd.f32 0.0, %v1916
        %v1918 = vpop.f32.mrb[0].mxu0
        %v1919 = vpop.f32.mrb[0].mxu0
        %v1920 = vpop.f32.mrb[0].mxu0
        %1921 = vdwg.mxu0
        %v1923 = vsel %vm1453, %v1871, 0
        %v1926 = vsel %vm1689, %v1872, 0
        %1928 = vmatprep.subr.bf16.mxu0 0
        %1929 = vmatpush1.bf16.msra.mxu0 %v1926
        %1930 = vmatprep.subr.bf16.mxu0 0
        %1931 = vmatpush1.bf16.msra.mxu0 0
        %1932 = vmatprep.subr.bf16.mxu0 0
        %1933 = vmatpush1.bf16.msra.mxu0 0
        %1934 = vmatprep.subr.bf16.mxu0 0
        %1935 = vmatpush1.bf16.msra.mxu0 0
        %1936 = vmatprep.subr.bf16.mxu0 0
        %1937 = vmatpush1.bf16.msra.mxu0 0
        %1938 = vmatprep.subr.bf16.mxu0 0
        %1939 = vmatpush1.bf16.msra.mxu0 0
        %1940 = vmatprep.subr.bf16.mxu0 0
        %1941 = vmatpush1.bf16.msra.mxu0 0
        %1942 = vmatprep.subr.bf16.mxu0 0
        %1943 = vmatpush1.bf16.msra.mxu0 0
        %1944 = vmatprep.subr.bf16.mxu0 0
        %1945 = vmatpush1.bf16.msra.mxu0 0
        %1946 = vmatprep.subr.bf16.mxu0 0
        %1947 = vmatpush1.bf16.msra.mxu0 0
        %1948 = vmatprep.subr.bf16.mxu0 0
        %1949 = vmatpush1.bf16.msra.mxu0 0
        %1950 = vmatprep.subr.bf16.mxu0 0
        %1951 = vmatpush1.bf16.msra.mxu0 0
        %1952 = vmatprep.subr.bf16.mxu0 0
        %1953 = vmatpush1.bf16.msra.mxu0 0
        %1954 = vmatprep.subr.bf16.mxu0 0
        %1955 = vmatpush1.bf16.msra.mxu0 0
        %1956 = vmatprep.subr.bf16.mxu0 0
        %1957 = vmatpush1.bf16.msra.mxu0 0
        %1958 = vmatprep.subr.bf16.mxu0 0
        %1959 = vmatpush1.bf16.msra.mxu0 0
        %1960 = vmatprep.mubr.bf16.mxu0 0
        %1961 = vmatmul.mubr.bf16.gmra.mrb[0].mxu0 %v1923
        %v1962 = vpop.f32.mrb[0].mxu0
        %v1963 = vadd.f32 %v1917, %v1962
        %v1964 = vpop.f32.mrb[0].mxu0
        %v1965 = vpop.f32.mrb[0].mxu0
        %v1966 = vpop.f32.mrb[0].mxu0
        %1967 = vdwg.mxu0
        %v1968 = vpack.c.bf16 %v1820, %v1820
        %s1969 = scalar_lea.vmem %s10, 8
        %v1970 = vld [vmem:[%s1969] sm:$0xf]
        %v1972 = vsel %vm1453, %v1968, 0
        %v1975 = vsel %vm1689, %v1970, 0
        %1977 = vmatprep.subr.bf16.mxu0 0
        %1978 = vmatpush1.bf16.msra.mxu0 %v1975
        %1979 = vmatprep.subr.bf16.mxu0 0
        %1980 = vmatpush1.bf16.msra.mxu0 0
        %1981 = vmatprep.subr.bf16.mxu0 0
        %1982 = vmatpush1.bf16.msra.mxu0 0
        %1983 = vmatprep.subr.bf16.mxu0 0
        %1984 = vmatpush1.bf16.msra.mxu0 0
        %1985 = vmatprep.subr.bf16.mxu0 0
        %1986 = vmatpush1.bf16.msra.mxu0 0
        %1987 = vmatprep.subr.bf16.mxu0 0
        %1988 = vmatpush1.bf16.msra.mxu0 0
        %1989 = vmatprep.subr.bf16.mxu0 0
        %1990 = vmatpush1.bf16.msra.mxu0 0
        %1991 = vmatprep.subr.bf16.mxu0 0
        %1992 = vmatpush1.bf16.msra.mxu0 0
        %1993 = vmatprep.subr.bf16.mxu0 0
        %1994 = vmatpush1.bf16.msra.mxu0 0
        %1995 = vmatprep.subr.bf16.mxu0 0
        %1996 = vmatpush1.bf16.msra.mxu0 0
        %1997 = vmatprep.subr.bf16.mxu0 0
        %1998 = vmatpush1.bf16.msra.mxu0 0
        %1999 = vmatprep.subr.bf16.mxu0 0
        %2000 = vmatpush1.bf16.msra.mxu0 0
        %2001 = vmatprep.subr.bf16.mxu0 0
        %2002 = vmatpush1.bf16.msra.mxu0 0
        %2003 = vmatprep.subr.bf16.mxu0 0
        %2004 = vmatpush1.bf16.msra.mxu0 0
        %2005 = vmatprep.subr.bf16.mxu0 0
        %2006 = vmatpush1.bf16.msra.mxu0 0
        %2007 = vmatprep.subr.bf16.mxu0 0
        %2008 = vmatpush1.bf16.msra.mxu0 0
        %2009 = vmatprep.mubr.bf16.mxu0 0
        %2010 = vmatmul.mubr.bf16.gmra.mrb[0].mxu0 %v1972
        %v2011 = vpop.f32.mrb[0].mxu0
        %v2012 = vadd.f32 0.0, %v2011
        %v2013 = vpop.f32.mrb[0].mxu0
        %v2014 = vpop.f32.mrb[0].mxu0
        %v2015 = vpop.f32.mrb[0].mxu0
        %2016 = vdwg.mxu0
        %v2017 = vadd.f32 %v1963, %v2012
        %v2018 = vpack.c.bf16 %v1866, %v1866
        %s2019 = scalar_lea.vmem %s10, 12
        %v2020 = vld [vmem:[%s2019] sm:$0xf]
        %v2022 = vsel %vm1453, %v2018, 0
        %v2025 = vsel %vm1689, %v2020, 0
        %2027 = vmatprep.subr.bf16.mxu0 0
        %2028 = vmatpush1.bf16.msra.mxu0 %v2025
        %2029 = vmatprep.subr.bf16.mxu0 0
        %2030 = vmatpush1.bf16.msra.mxu0 0
        %2031 = vmatprep.subr.bf16.mxu0 0
        %2032 = vmatpush1.bf16.msra.mxu0 0
        %2033 = vmatprep.subr.bf16.mxu0 0
        %2034 = vmatpush1.bf16.msra.mxu0 0
        %2035 = vmatprep.subr.bf16.mxu0 0
        %2036 = vmatpush1.bf16.msra.mxu0 0
        %2037 = vmatprep.subr.bf16.mxu0 0
        %2038 = vmatpush1.bf16.msra.mxu0 0
        %2039 = vmatprep.subr.bf16.mxu0 0
        %2040 = vmatpush1.bf16.msra.mxu0 0
        %2041 = vmatprep.subr.bf16.mxu0 0
        %2042 = vmatpush1.bf16.msra.mxu0 0
        %2043 = vmatprep.subr.bf16.mxu0 0
        %2044 = vmatpush1.bf16.msra.mxu0 0
        %2045 = vmatprep.subr.bf16.mxu0 0
        %2046 = vmatpush1.bf16.msra.mxu0 0
        %2047 = vmatprep.subr.bf16.mxu0 0
        %2048 = vmatpush1.bf16.msra.mxu0 0
        %2049 = vmatprep.subr.bf16.mxu0 0
        %2050 = vmatpush1.bf16.msra.mxu0 0
        %2051 = vmatprep.subr.bf16.mxu0 0
        %2052 = vmatpush1.bf16.msra.mxu0 0
        %2053 = vmatprep.subr.bf16.mxu0 0
        %2054 = vmatpush1.bf16.msra.mxu0 0
        %2055 = vmatprep.subr.bf16.mxu0 0
        %2056 = vmatpush1.bf16.msra.mxu0 0
        %2057 = vmatprep.subr.bf16.mxu0 0
        %2058 = vmatpush1.bf16.msra.mxu0 0
        %2059 = vmatprep.mubr.bf16.mxu0 0
        %2060 = vmatmul.mubr.bf16.gmra.mrb[0].mxu0 %v2022
        %v2061 = vpop.f32.mrb[0].mxu0
        %v2062 = vadd.f32 0.0, %v2061
        %v2063 = vpop.f32.mrb[0].mxu0
        %v2064 = vpop.f32.mrb[0].mxu0
        %v2065 = vpop.f32.mrb[0].mxu0
        %2066 = vdwg.mxu0
        %v2067 = vadd.f32 %v2017, %v2062
        %v2068 = vld [vmem:[%s11] sm:$0x1]
        %v2070 = vlaneseq
        %v2071 = vshrl.u32 %v2070, 7
        %v2072 = vsub.s32 0, %v2071
        %v2073 = vrot.slane %v2068, %v2072
        %v2075 = vadd.f32 %v2067, %v2073
        %v2076 = vadd.f32 %v586, %v2075
        %v2077 = vld [vmem:[%s12] sm:$0x1]
        %v2078 = vld [vmem:[%s13] sm:$0x1]
        %v2079 = vsel %vm590, %v2076, 0.0
        %2080 = vadd.xlane.f32.xlu0 %v2079
        %v2081 = vpop.xlane.xlu0 %2080
        %v2082 = vmul.f32 %v2081, %v594
        %v2083 = vsub.f32 %v2076, %v2082
        %v2084 = vmul.f32 %v2083, %v2083
        %v2085 = vsel %vm590, %v2084, 0.0
        %2086 = vadd.xlane.f32.xlu0 %v2085
        %v2087 = vpop.xlane.xlu0 %2086
        %v2088 = vmul.f32 %v2087, %v594
        %v2089 = vadd.f32 %v2088, 1e-12
        %v2090 = vrsqrt.pop %v2089
        %v2091 = vmul.f32 %v2083, %v2090
        %v2093 = vlaneseq
        %v2094 = vshrl.u32 %v2093, 7
        %v2095 = vsub.s32 0, %v2094
        %v2096 = vrot.slane %v2077, %v2095
        %v2098 = vmul.f32 %v2091, %v2096
        %v2100 = vlaneseq
        %v2101 = vshrl.u32 %v2100, 7
        %v2102 = vsub.s32 0, %v2101
        %v2103 = vrot.slane %v2078, %v2102
        %v2105 = vadd.f32 %v2098, %v2103
        %v2106 = vpack.c.bf16 %v2105, %v2105
        %v2107 = vld [vmem:[%s14] sm:$0xf]
        %v2108 = vld [vmem:[%s14 + $0x4] sm:$0xf]
        %v2109 = vld [vmem:[%s14 + $0x8] sm:$0xf]
        %v2110 = vld [vmem:[%s14 + $0xc] sm:$0xf]
        %v2111 = vld [vmem:[%s15] sm:$0x1]
        %v2113 = vlaneseq
        %v2114 = vshrl.u32 %v2113, 7
        %v2115 = vsub.s32 0, %v2114
        %v2116 = vrot.slane %v2111, %v2115
        %v2122 = vunpack.c.l.b16 %v2107
        %v2123 = vunpack.c.l.b16 %v2108
        %v2124 = vunpack.c.l.b16 %v2109
        %v2125 = vunpack.c.l.b16 %v2110
        %v2126 = vpack.c.b16 %v2123, %v2122
        %v2127 = vpack.c.b16 %v2125, %v2124
        %v2131 = vsel %vm590, %v2106, 0
        %2133 = vmatprep.subr.bf16.mxu0 0
        %2134 = vmatpush1.bf16.msra.mxu0 %v2126
        %2135 = vmatprep.subr.bf16.mxu0 0
        %2136 = vmatpush1.bf16.msra.mxu0 %v2127
        %2137 = vmatprep.subr.bf16.mxu0 0
        %2138 = vmatpush1.bf16.msra.mxu0 0
        %2139 = vmatprep.subr.bf16.mxu0 0
        %2140 = vmatpush1.bf16.msra.mxu0 0
        %2141 = vmatprep.subr.bf16.mxu0 0
        %2142 = vmatpush1.bf16.msra.mxu0 0
        %2143 = vmatprep.subr.bf16.mxu0 0
        %2144 = vmatpush1.bf16.msra.mxu0 0
        %2145 = vmatprep.subr.bf16.mxu0 0
        %2146 = vmatpush1.bf16.msra.mxu0 0
        %2147 = vmatprep.subr.bf16.mxu0 0
        %2148 = vmatpush1.bf16.msra.mxu0 0
        %2149 = vmatprep.subr.bf16.mxu0 0
        %2150 = vmatpush1.bf16.msra.mxu0 0
        %2151 = vmatprep.subr.bf16.mxu0 0
        %2152 = vmatpush1.bf16.msra.mxu0 0
        %2153 = vmatprep.subr.bf16.mxu0 0
        %2154 = vmatpush1.bf16.msra.mxu0 0
        %2155 = vmatprep.subr.bf16.mxu0 0
        %2156 = vmatpush1.bf16.msra.mxu0 0
        %2157 = vmatprep.subr.bf16.mxu0 0
        %2158 = vmatpush1.bf16.msra.mxu0 0
        %2159 = vmatprep.subr.bf16.mxu0 0
        %2160 = vmatpush1.bf16.msra.mxu0 0
        %2161 = vmatprep.subr.bf16.mxu0 0
        %2162 = vmatpush1.bf16.msra.mxu0 0
        %2163 = vmatprep.subr.bf16.mxu0 0
        %2164 = vmatpush1.bf16.msra.mxu0 0
        %2165 = vmatprep.mubr.bf16.mxu0 0
        %2166 = vmatmul.mubr.bf16.gmra.mrb[0].mxu0 %v2131
        %v2167 = vpop.f32.mrb[0].mxu0
        %v2168 = vadd.f32 %v2116, %v2167
        %v2169 = vpop.f32.mrb[0].mxu0
        %v2170 = vpop.f32.mrb[0].mxu0
        %v2171 = vpop.f32.mrb[0].mxu0
        %2172 = vdwg.mxu0
        %v2173 = vmul.f32 %v2168, %v2168
        %v2174 = vmul.f32 %v2173, %v2168
        %v2175 = vmul.f32 %v2174, 0.044715
        %v2176 = vadd.f32 %v2168, %v2175
        %v2177 = vmul.f32 %v2176, 0.7978846
        %v2178 = vmul.f32 %v2168, 0.5
        %v2179 = vtanh.pop %v2177
        %v2180 = vadd.f32 %v2179, 1.0
        %v2181 = vmul.f32 %v2178, %v2180
        %v2182 = vpack.c.bf16 %v2181, %v2181
        %v2183 = vld [vmem:[%s16] sm:$0xf]
        %v2184 = vld [vmem:[%s16 + $0x4] sm:$0xf]
        %v2185 = vld [vmem:[%s16 + $0x8] sm:$0xf]
        %v2186 = vld [vmem:[%s16 + $0xc] sm:$0xf]
        %v2187 = vld [vmem:[%s16 + $0x10] sm:$0xf]
        %v2188 = vld [vmem:[%s16 + $0x14] sm:$0xf]
        %v2189 = vld [vmem:[%s16 + $0x18] sm:$0xf]
        %v2190 = vld [vmem:[%s16 + $0x1c] sm:$0xf]
        %v2191 = vld [vmem:[%s17] sm:$0x1]
        %v2193 = vlaneseq
        %v2194 = vshrl.u32 %v2193, 7
        %v2195 = vsub.s32 0, %v2194
        %v2196 = vrot.slane %v2191, %v2195
        %v2206 = vunpack.c.l.b16 %v2183
        %v2207 = vunpack.c.l.b16 %v2184
        %v2208 = vunpack.c.l.b16 %v2185
        %v2209 = vunpack.c.l.b16 %v2186
        %v2210 = vunpack.c.l.b16 %v2187
        %v2211 = vunpack.c.l.b16 %v2188
        %v2212 = vunpack.c.l.b16 %v2189
        %v2213 = vunpack.c.l.b16 %v2190
        %v2214 = vpack.c.b16 %v2207, %v2206
        %v2215 = vpack.c.b16 %v2209, %v2208
        %v2216 = vpack.c.b16 %v2211, %v2210
        %v2217 = vpack.c.b16 %v2213, %v2212
        %vm2222 = vcmask 523264
        %v2224 = vsel %vm2222, %v2182, 0
        %2226 = vmatprep.subr.bf16.mxu0 0
        %2227 = vmatpush1.bf16.msra.mxu0 %v2214
        %2228 = vmatprep.subr.bf16.mxu0 0
        %2229 = vmatpush1.bf16.msra.mxu0 %v2215
        %2230 = vmatprep.subr.bf16.mxu0 0
        %2231 = vmatpush1.bf16.msra.mxu0 %v2216
        %2232 = vmatprep.subr.bf16.mxu0 0
        %2233 = vmatpush1.bf16.msra.mxu0 %v2217
        %2234 = vmatprep.subr.bf16.mxu0 0
        %2235 = vmatpush1.bf16.msra.mxu0 0
        %2236 = vmatprep.subr.bf16.mxu0 0
        %2237 = vmatpush1.bf16.msra.mxu0 0
        %2238 = vmatprep.subr.bf16.mxu0 0
        %2239 = vmatpush1.bf16.msra.mxu0 0
        %2240 = vmatprep.subr.bf16.mxu0 0
        %2241 = vmatpush1.bf16.msra.mxu0 0
        %2242 = vmatprep.subr.bf16.mxu0 0
        %2243 = vmatpush1.bf16.msra.mxu0 0
        %2244 = vmatprep.subr.bf16.mxu0 0
        %2245 = vmatpush1.bf16.msra.mxu0 0
        %2246 = vmatprep.subr.bf16.mxu0 0
        %2247 = vmatpush1.bf16.msra.mxu0 0
        %2248 = vmatprep.subr.bf16.mxu0 0
        %2249 = vmatpush1.bf16.msra.mxu0 0
        %2250 = vmatprep.subr.bf16.mxu0 0
        %2251 = vmatpush1.bf16.msra.mxu0 0
        %2252 = vmatprep.subr.bf16.mxu0 0
        %2253 = vmatpush1.bf16.msra.mxu0 0
        %2254 = vmatprep.subr.bf16.mxu0 0
        %2255 = vmatpush1.bf16.msra.mxu0 0
        %2256 = vmatprep.subr.bf16.mxu0 0
        %2257 = vmatpush1.bf16.msra.mxu0 0
        %2258 = vmatprep.mubr.bf16.mxu0 0
        %2259 = vmatmul.mubr.bf16.gmra.mrb[0].mxu0 %v2224
        %v2260 = vpop.f32.mrb[0].mxu0
        %v2261 = vadd.f32 %v2196, %v2260
        %v2262 = vpop.f32.mrb[0].mxu0
        %v2263 = vpop.f32.mrb[0].mxu0
        %v2264 = vpop.f32.mrb[0].mxu0
        %2265 = vdwg.mxu0
        %v2266 = vadd.f32 %v2076, %v2261
        %2267 = vst.msk [vmem:[%s577] sm:$0xff] %vm590, %v2266
        %s2268 = sand.u32 %s428, 1
        %s2269 = scalar_lea.sflag [#allocation6], %s2268
        %s2270 = sand.u32 %s428, 1
        %s2271 = smul.addr %s2270, 8
        %s2272 = scalar_lea.vmem [#allocation5], %s2271
        // Predicated region
        $region93: #{tpu_custom_call.1} parent=91 // pred_check
          %p2273 = pneg %p438
        $region94: #{tpu_custom_call.1} parent=91 // pred_check_branch
          %2275 = sbr.rel (%p2273) target = $region96
        $region95: #{tpu_custom_call.1} parent=91 // pred_region
          %s2277 = ssub.s32 128, 128
          %2278 = vsyncadd %s2269, %s2277
          %s2279 = smul.addr %s32, 128
          %s2280 = scalar_lea.hbm %s18, %s2279
          %s2282 = sshll.u32 %s2272, 4
          %s2283 = int_to_ptr.vmem [resolvable:$true] %s2282
          %2285 = dma.vmem_to_hbm [thread:$0]  %s2283, 128, %s2280, %s2269
        $region96: #{tpu_custom_call.1} parent=91 // pred_fallthru
          _
      $region92: #{tpu_custom_call.1} parent=5 // pred_fallthru
        _
      %p2286 = scmp.le.s32.totalorder 2, %s27
      // Predicated region
      $region97: #{tpu_custom_call.1} parent=5 // pred_check
        %p2287 = pneg %p2286
      $region98: #{tpu_custom_call.1} parent=5 // pred_check_branch
        %2289 = sbr.rel (%p2287) target = $region100
      $region99: #{tpu_custom_call.1} parent=5 // pred_region
        %s2290 = ssub.s32 %s27, 2
        // Predicated region
        $region101: #{tpu_custom_call.1} parent=99 // pred_check
          %p2291 = pneg %p444
        $region102: #{tpu_custom_call.1} parent=99 // pred_check_branch
          %2293 = sbr.rel (%p2291) target = $region104
        $region103: #{tpu_custom_call.1} parent=99 // pred_region
          %s2294 = sand.u32 %s429, 1
          %s2295 = scalar_lea.sflag [#allocation6], %s2294
          %s2296 = sand.u32 %s429, 1
          %s2297 = smul.addr %s2296, 8
          %s2298 = scalar_lea.vmem [#allocation5], %s2297
          %2299 = dma.done %s2295, 128
        $region104: #{tpu_custom_call.1} parent=99 // pred_fallthru
          _
      $region100: #{tpu_custom_call.1} parent=5 // pred_fallthru
        _
    $region6: #{tpu_custom_call.1} parent=1 // loop_footer
      %s31 = sadd.s32 1, %s27
    $region7: #{tpu_custom_call.1} parent=1 // loop_footer_branch
      %26 = sbr.rel target = $region3
    $region8: #{tpu_custom_call.1} parent=1 // loop_exit
      _
    %2300 = vsyncpa [#allocation6], 1
    %s2301 = scalar_lea.sflag [#allocation6], 1
    %2302 = vsyncpa %s2301, 1

</llo_original>
